<compile_context>
chip_gen: v5e
topology: v5e:2x2
jax: 0.10.0
libtpu: 0.0.40
codegen_flags: <defaults>
</compile_context>

<pallas_src>
import functools

import numpy as np
import jax
import jax.numpy as jnp
from jax import lax
from jax.experimental import pallas as pl
from jax.experimental.pallas import tpu as pltpu

EMB_DIM = 100                # AutoEncoderModel.embedding_size
LSTM_UNITS = 50              # AutoEncoderModel(50)
ENT_HIDDEN = 2 * LSTM_UNITS  # bidirectional -> 100 == ent_hidden_dim
VOCAB = 300                  # synthetic small vocab (real module uses 194785)
KERNEL_SIZE = 3

LANE = 128                   # TPU lane width
EP = LANE                    # embedding dim padded to 128 lanes
HP = LANE                    # hidden dim padded to 128 lanes
GP = 4 * LANE                # 4 gates x 128 lanes (per direction)
CIN_P = LANE                 # packed LSTM output: [hf(0:50)|pad|hb(64:114)|pad]
COUT_P = LANE                # conv out-channels padded to 128


def _round_up(x, m):
    return ((x + m - 1) // m) * m


def _vmem_limit(*byte_counts):
    need = int(sum(byte_counts)) + (8 << 20)
    return int(min(48 << 20, max(16 << 20, need)))


def _pick_batch_tile(b_attr, T):
    """LSTM batch tile: >=2 grid steps when possible (v7x megacore), VMEM-capped."""
    # per-row bytes: bf16 emb tile (double buffered) + f32 xw scratch (both dirs)
    per_row = T * EP * 2 * 2 + T * 2 * GP * 4
    cap = max(8, ((28 * 1024 * 1024) // max(1, per_row)) // 8 * 8)
    max_tb = min(128, cap)
    if b_attr <= 8:
        return 8
    two_way = _round_up((b_attr + 1) // 2, 8)     # ensure >= 2 grid steps
    return int(min(max_tb, two_way))


def _pick_tile(n, max_tile=128):
    if n <= 8:
        return 8
    return int(min(max_tile, _round_up((n + 1) // 2, 8)))


# ---------------------------------------------------------------------------
# Kernel 1: bidirectional LSTM over a TB-sized batch tile, final hiddens only.
#   emb_ref : [T, TB, 128]  bf16 time-major embedded tokens (cols 100..127 zero)
#   lens_ref: [TB, 1]       int32 valid lengths (packed-sequence semantics)
#   w_in    : [128, 1024]   bf16 input weights, fwd gates cols 0..511, bwd 512..1023
#   b_in    : [1, 1024]     f32 bias_ih + bias_hh (padded slots zero)
#   whh_f/b : [128, 512]    bf16 hidden weights per direction
#   out_ref : [TB, 128]     bf16 packed [hf lanes 0..49 | hb lanes 64..113]
# Gate order matches PyTorch: i, f, g, o.  Padded gate slots have zero weights
# and bias -> pre-activation 0 -> i=f=o=0.5, g=0 -> c,h stay exactly 0 there.
# ---------------------------------------------------------------------------
def _bilstm_kernel(emb_ref, lens_ref, w_in_ref, b_in_ref, whh_f_ref, whh_b_ref,
                   out_ref, xwf_ref, xwb_ref):
    T = emb_ref.shape[0]
    TB = emb_ref.shape[1]

    lens = lens_ref[...]                                   # [TB, 1] int32
    whh_f = whh_f_ref[...]                                 # [HP, GP] bf16
    whh_b = whh_b_ref[...]

    # ---- input projection hoisted out of the recurrence --------------------
    # One [T*TB,128]@[128,1024] bf16 matmul (both directions), bias folded in.
    x_all = emb_ref[...].reshape(T * TB, EP)
    xw = jnp.dot(x_all, w_in_ref[...], preferred_element_type=jnp.float32)
    xw = xw + b_in_ref[...]
    xwf_ref[...] = xw[:, 0:GP].reshape(T, TB, GP)
    xwb_ref[...] = xw[:, GP:2 * GP].reshape(T, TB, GP)

    def gates_to_hc(g, c):
        # sigmoid(x) == 0.5*(tanh(0.5*x)+1): one EUP op per gate (vs exp+recip).
        i = 0.5 * (jnp.tanh(0.5 * g[:, 0 * LANE:1 * LANE]) + 1.0)
        f = 0.5 * (jnp.tanh(0.5 * g[:, 1 * LANE:2 * LANE]) + 1.0)
        gg = jnp.tanh(g[:, 2 * LANE:3 * LANE])
        o = 0.5 * (jnp.tanh(0.5 * g[:, 3 * LANE:4 * LANE]) + 1.0)
        c_new = f * c + i * gg
        h_new = o * jnp.tanh(c_new)
        return h_new, c_new

    def step(s, carry):
        hf, cf, hb, cb = carry
        # forward direction processes t = s (state frozen once t >= len)
        g_f = jnp.dot(hf.astype(jnp.bfloat16), whh_f,
                      preferred_element_type=jnp.float32) + xwf_ref[s]
        hf_new, cf_new = gates_to_hc(g_f, cf)
        m_f = s < lens
        hf = jnp.where(m_f, hf_new, hf)
        cf = jnp.where(m_f, cf_new, cf)
        # backward direction processes t = T-1-s (starts updating at t = len-1)
        t_b = T - 1 - s
        g_b = jnp.dot(hb.astype(jnp.bfloat16), whh_b,
                      preferred_element_type=jnp.float32) + xwb_ref[t_b]
        hb_new, cb_new = gates_to_hc(g_b, cb)
        m_b = t_b < lens
        hb = jnp.where(m_b, hb_new, hb)
        cb = jnp.where(m_b, cb_new, cb)
        return hf, cf, hb, cb

    zeros = jnp.zeros((TB, HP), jnp.float32)
    hf, _, hb, _ = lax.fori_loop(0, T, step, (zeros, zeros, zeros, zeros),
                                 unroll=True if T <= 16 else 4)
    # Pack both directions into one 128-lane row: hf valid lanes 0..49,
    # hb valid lanes rolled to 64..113 (XLU lane roll; padded lanes stay 0).
    packed = hf + pltpu.roll(hb, LANE // 2, 1)
    out_ref[...] = packed.astype(out_ref.dtype)


def bilstm_encode(emb_tbe, lens_b1, w_in, b_in, whh_f, whh_b, tb):
    T, b_pad, _ = emb_tbe.shape
    grid_spec = pltpu.PrefetchScalarGridSpec(
        num_scalar_prefetch=0,
        grid=(b_pad // tb,),
        in_specs=[
            pl.BlockSpec((T, tb, EP), lambda b: (0, b, 0)),
            pl.BlockSpec((tb, 1), lambda b: (b, 0)),
            pl.BlockSpec((EP, 2 * GP), lambda b: (0, 0)),
            pl.BlockSpec((1, 2 * GP), lambda b: (0, 0)),
            pl.BlockSpec((HP, GP), lambda b: (0, 0)),
            pl.BlockSpec((HP, GP), lambda b: (0, 0)),
        ],
        out_specs=pl.BlockSpec((tb, CIN_P), lambda b: (b, 0)),
        scratch_shapes=[pltpu.VMEM((T, tb, GP), jnp.float32),
                        pltpu.VMEM((T, tb, GP), jnp.float32)],
    )
    return pl.pallas_call(
        _bilstm_kernel,
        grid_spec=grid_spec,
        out_shape=jax.ShapeDtypeStruct((b_pad, CIN_P), jnp.bfloat16),
        compiler_params=pltpu.CompilerParams(
            dimension_semantics=("parallel",),
            vmem_limit_bytes=_vmem_limit(2 * T * tb * EP * 2,      # emb, dbl-buffered bf16
                                         2 * T * tb * GP * 4)),    # xw f32 scratch
    )(emb_tbe, lens_b1, w_in, b_in, whh_f, whh_b)


# ---------------------------------------------------------------------------
# Kernel 2: batched Conv1d(k=3, stride=1) + ReLU + max over positions.
#   x_ref  : [TN, M, 128]  bf16 packed attrs of TN entities (zero padded)
#   w_ref  : [128, 3*128]  bf16 conv weight, taps stacked along lanes,
#                          rows remapped to the packed [hf|pad|hb|pad] layout
#   b_ref  : [1, 128]      f32
#   out_ref: [TN, 128]     f32
# Only window positions m < mout (mout = max(max_attrs,K) - K + 1) survive the
# max (VPU mask), so alignment padding rows never affect the result.
# ---------------------------------------------------------------------------
def _conv_relu_max_kernel(x_ref, w_ref, b_ref, out_ref, *, mout):
    TN, M, cin = x_ref.shape
    cout = b_ref.shape[1]
    K = w_ref.shape[1] // cout
    total = TN * M

    xf = x_ref[...].reshape(total, cin)                    # bf16
    # One [TN*M, 128] @ [128, 384] bf16 matmul: all K taps at once.
    y = jnp.dot(xf, w_ref[...], preferred_element_type=jnp.float32)

    acc = y[:, 0:cout]
    for k in range(1, K):                                  # static unroll, K=3
        yk = y[:, k * cout:(k + 1) * cout]
        # acc[i] += yk[i + k]  (jnp.roll semantics).  Wrapped rows only ever
        # land at positions m >= mout, which are masked out below.
        acc = acc + pltpu.roll(yk, (total - k) % total, 0)
    acc = acc.reshape(TN, M, cout)

    pos = lax.broadcasted_iota(jnp.int32, (TN, M, cout), 1)
    acc = jnp.where(pos < mout, acc, jnp.float32(-1e30))
    # Bias is constant over positions and ReLU is monotone:
    #   max_m relu(acc_m + b) == relu(max_m acc_m + b)
    mx = jnp.max(acc, axis=1)                              # [TN, cout]
    out_ref[...] = jnp.maximum(mx + b_ref[...], 0.0)


def conv_relu_max(x_nmc, w_ck, b_1c, tn, mout):
    n_pad, m_pad, cin = x_nmc.shape
    kc = w_ck.shape[1]
    cout = b_1c.shape[1]
    kernel = functools.partial(_conv_relu_max_kernel, mout=mout)
    grid_spec = pltpu.PrefetchScalarGridSpec(
        num_scalar_prefetch=0,
        grid=(n_pad // tn,),
        in_specs=[
            pl.BlockSpec((tn, m_pad, cin), lambda n: (n, 0, 0)),
            pl.BlockSpec((cin, kc), lambda n: (0, 0)),
            pl.BlockSpec((1, cout), lambda n: (0, 0)),
        ],
        out_specs=pl.BlockSpec((tn, cout), lambda n: (n, 0)),
    )
    return pl.pallas_call(
        kernel,
        grid_spec=grid_spec,
        out_shape=jax.ShapeDtypeStruct((n_pad, cout), jnp.float32),
        compiler_params=pltpu.CompilerParams(
            dimension_semantics=("parallel",),
            vmem_limit_bytes=_vmem_limit(2 * tn * m_pad * cin * 2,   # x, dbl-buffered bf16
                                         tn * m_pad * kc * 4)),      # y f32 intermediate
    )(x_nmc, w_ck, b_1c)


# ---------------------------------------------------------------------------
# Parameter init (random stand-in for the pretrained AE + conv weights) and
# conversion into the lane-padded / packed bf16 layouts the kernels consume.
# ---------------------------------------------------------------------------
def init_params(key):
    H, E, C, K = LSTM_UNITS, EMB_DIM, ENT_HIDDEN, KERNEL_SIZE
    keys = jax.random.split(key, 11)
    bound = 1.0 / np.sqrt(H)

    def uni(k, shape):
        return np.asarray(jax.random.uniform(k, shape, jnp.float32, -bound, bound))

    raw = {
        "embedding": np.asarray(jax.random.normal(keys[0], (VOCAB, E), jnp.float32)),
        # PyTorch layout: weight_ih [4H, E], weight_hh [4H, H], biases [4H].
        "wih_f": uni(keys[1], (4 * H, E)), "whh_f": uni(keys[2], (4 * H, H)),
        "bih_f": uni(keys[3], (4 * H,)), "bhh_f": uni(keys[4], (4 * H,)),
        "wih_b": uni(keys[5], (4 * H, E)), "whh_b": uni(keys[6], (4 * H, H)),
        "bih_b": uni(keys[7], (4 * H,)), "bhh_b": uni(keys[8], (4 * H,)),
    }
    # Conv1d weight [C_out, C_in, K], xavier_normal gain=1.414.
    fan = C * K
    std = 1.414 * np.sqrt(2.0 / (fan + fan))
    raw["conv_w"] = np.asarray(jax.random.normal(keys[9], (C, C, K), jnp.float32)) * std
    cb = 1.0 / np.sqrt(fan)
    raw["conv_b"] = np.asarray(jax.random.uniform(keys[10], (C,), jnp.float32, -cb, cb))

    # ---- lane-padded / fused layouts (padding entries must be exactly 0) ----
    w_in = np.zeros((EP, 2 * GP), np.float32)   # fwd gates cols 0..511, bwd 512..1023
    b_in = np.zeros((1, 2 * GP), np.float32)
    whh_f = np.zeros((HP, GP), np.float32)
    whh_b = np.zeros((HP, GP), np.float32)
    for g in range(4):
        sl = slice(g * H, (g + 1) * H)
        w_in[0:E, g * LANE:g * LANE + H] = raw["wih_f"][sl, :].T
        b_in[0, g * LANE:g * LANE + H] = raw["bih_f"][sl] + raw["bhh_f"][sl]
        whh_f[0:H, g * LANE:g * LANE + H] = raw["whh_f"][sl, :].T
        w_in[0:E, GP + g * LANE:GP + g * LANE + H] = raw["wih_b"][sl, :].T
        b_in[0, GP + g * LANE:GP + g * LANE + H] = raw["bih_b"][sl] + raw["bhh_b"][sl]
        whh_b[0:H, g * LANE:g * LANE + H] = raw["whh_b"][sl, :].T

    emb_pad = np.zeros((VOCAB, EP), np.float32)
    emb_pad[:, :E] = raw["embedding"]

    # Conv weight: input rows remapped to the packed [hf(0:50)|pad|hb(64:114)|pad]
    # channel layout, K=3 taps stacked along the lane (output) axis.
    conv_w = np.zeros((CIN_P, K * COUT_P), np.float32)
    for c_in in range(C):
        row = c_in if c_in < H else (LANE // 2) + (c_in - H)
        for k in range(K):
            conv_w[row, k * COUT_P:k * COUT_P + C] = raw["conv_w"][:, c_in, k]
    conv_b = np.zeros((1, COUT_P), np.float32)
    conv_b[0, :C] = raw["conv_b"]

    params = {
        "embedding": jnp.asarray(emb_pad, jnp.bfloat16),
        "w_in": jnp.asarray(w_in, jnp.bfloat16),
        "b_in": jnp.asarray(b_in, jnp.float32),
        "whh_f": jnp.asarray(whh_f, jnp.bfloat16),
        "whh_b": jnp.asarray(whh_b, jnp.bfloat16),
        "conv_w": jnp.asarray(conv_w, jnp.bfloat16),
        "conv_b": jnp.asarray(conv_b, jnp.float32),
    }
    return params, raw


def _pad_sequence_gather(num_rows_per_group):
    """Indices + mask reproducing torch.split + pad_sequence(batch_first)."""
    n_groups = len(num_rows_per_group)
    max_rows = max(num_rows_per_group)
    offs = np.concatenate([[0], np.cumsum(num_rows_per_group)[:-1]]).astype(np.int32)
    idx = np.zeros((n_groups, max_rows), np.int32)
    mask = np.zeros((n_groups, max_rows, 1), np.float32)
    for g, cnt in enumerate(num_rows_per_group):
        idx[g, :cnt] = offs[g] + np.arange(cnt)
        mask[g, :cnt, 0] = 1.0
    return jnp.asarray(idx), jnp.asarray(mask)


def attr_triple_enc_forward(params, entity_attrs, attrs_nums, entity_attr_lens):
    """entity_attrs: [B_attr, T] int32; attrs_nums: nested python list;
       entity_attr_lens: [B_attr] int32.  Returns [batch, max_entities, 100]."""
    entity_nums = [len(g) for g in attrs_nums]
    attrs_flat = [a for g in attrs_nums for a in g]
    b_attr, T = entity_attrs.shape

    # Embedding gather fused directly into time-major order (bf16 MXU operand).
    emb_tbe = jnp.take(params["embedding"], entity_attrs.T, axis=0)  # [T,B,128]

    tb = _pick_batch_tile(b_attr, T)
    b_pad = _round_up(b_attr, tb)
    lens = entity_attr_lens.astype(jnp.int32).reshape(-1, 1)
    if b_pad > b_attr:
        emb_tbe = jnp.pad(emb_tbe, ((0, 0), (0, b_pad - b_attr), (0, 0)))
        lens = jnp.pad(lens, ((0, b_pad - b_attr), (0, 0)))

    encoded = bilstm_encode(emb_tbe, lens, params["w_in"], params["b_in"],
                            params["whh_f"], params["whh_b"], tb)  # [b_pad,128] bf16

    # torch.split(encoded, attrs_nums) + pad_sequence -> [N_ent, max_attrs, 128]
    # TODO(synk): this gather could be fused into the conv pallas_call via
    # scalar-prefetched indices to avoid materializing `grouped` in HBM.
    gidx, gmask = _pad_sequence_gather(attrs_flat)
    grouped = jnp.take(encoded, gidx, axis=0) * gmask.astype(encoded.dtype)

    n_ent, max_attrs = gidx.shape
    # TODO(synk): PyTorch errors when max_attrs < kernel_size; here we pad with
    # zero rows instead (extra windows are bias-only, like other pad windows).
    m_valid = max(max_attrs, KERNEL_SIZE)
    m_pad = _round_up(m_valid, 8)
    tn = _pick_tile(n_ent, 128)
    n_pad = _round_up(n_ent, tn)
    grouped = jnp.pad(grouped,
                      ((0, n_pad - n_ent), (0, m_pad - max_attrs), (0, 0)))
    mout = m_valid - KERNEL_SIZE + 1

    ent_vec = conv_relu_max(grouped, params["conv_w"], params["conv_b"],
                            tn, mout)                      # [n_pad, 128] f32
    ent_vec = ent_vec[:n_ent, :ENT_HIDDEN]                 # [N_ent, 100]

    # torch.split(ent_vec, entity_nums) + pad_sequence -> [batch, max_ent, 100]
    eidx, emask = _pad_sequence_gather(entity_nums)
    return jnp.take(ent_vec, eidx, axis=0) * emask


# ---------------------------------------------------------------------------
# Pure-JAX reference (unpadded, PyTorch-layout f32 weights) for numerics check.
# ---------------------------------------------------------------------------
def reference_forward(raw, entity_attrs, attrs_nums, entity_attr_lens):
    H, E, C, K = LSTM_UNITS, EMB_DIM, ENT_HIDDEN, KERNEL_SIZE
    hi = lax.Precision.HIGHEST
    entity_nums = [len(g) for g in attrs_nums]
    attrs_flat = [a for g in attrs_nums for a in g]

    emb = jnp.asarray(raw["embedding"])[entity_attrs]      # [B, T, 100]
    B, T, _ = emb.shape
    lens = entity_attr_lens.astype(jnp.int32)

    def run_dir(wih, whh, bih, bhh, reverse):
        wih = jnp.asarray(wih); whh = jnp.asarray(whh)
        bias = jnp.asarray(bih) + jnp.asarray(bhh)
        h = jnp.zeros((B, H), jnp.float32)
        c = jnp.zeros((B, H), jnp.float32)
        order = range(T - 1, -1, -1) if reverse else range(T)
        for t in order:
            x = emb[:, t, :]
            g = (jnp.dot(x, wih.T, precision=hi)
                 + jnp.dot(h, whh.T, precision=hi) + bias)
            i = jax.nn.sigmoid(g[:, 0 * H:1 * H])
            f = jax.nn.sigmoid(g[:, 1 * H:2 * H])
            gg = jnp.tanh(g[:, 2 * H:3 * H])
            o = jax.nn.sigmoid(g[:, 3 * H:4 * H])
            c_new = f * c + i * gg
            h_new = o * jnp.tanh(c_new)
            m = (t < lens)[:, None]
            h = jnp.where(m, h_new, h)
            c = jnp.where(m, c_new, c)
        return h

    hf = run_dir(raw["wih_f"], raw["whh_f"], raw["bih_f"], raw["bhh_f"], False)
    hb = run_dir(raw["wih_b"], raw["whh_b"], raw["bih_b"], raw["bhh_b"], True)
    enc = jnp.concatenate([hf, hb], axis=-1)               # [B, 100]

    gidx, gmask = _pad_sequence_gather(attrs_flat)
    grouped = jnp.take(enc, gidx, axis=0) * gmask          # [N, max_attrs, 100]
    n_ent, max_attrs = gidx.shape
    mout = max_attrs - K + 1
    conv_w = jnp.asarray(raw["conv_w"])                    # [C_out, C_in, K]
    conv_b = jnp.asarray(raw["conv_b"])
    windows = jnp.stack([grouped[:, m:m + K, :] for m in range(mout)], axis=1)
    y = jnp.einsum("nmkc,dck->nmd", windows, conv_w, precision=hi) + conv_b
    y = jnp.maximum(y, 0.0)
    ent_vec = jnp.max(y, axis=1)                           # [N, 100]

    eidx, emask = _pad_sequence_gather(entity_nums)
    return jnp.take(ent_vec, eidx, axis=0) * emask


if __name__ == "__main__":
    key = jax.random.PRNGKey(0)
    pkey, dkey1, dkey2 = jax.random.split(key, 3)
    params, raw = init_params(pkey)

    # Small example consistent with the module's docstring: attrs_nums nested.
    attrs_nums = [[2, 5], [3, 3], [4]]                     # 3 examples, 5 entities
    b_attr = sum(a for g in attrs_nums for a in g)         # 17 attribute sequences
    T = 6                                                  # max attr token length
    entity_attrs = jax.random.randint(dkey1, (b_attr, T), 0, VOCAB, jnp.int32)
    entity_attr_lens = jax.random.randint(dkey2, (b_attr,), 1, T + 1, jnp.int32)

    out = attr_triple_enc_forward(params, entity_attrs, attrs_nums,
                                  entity_attr_lens)
    out = jax.block_until_ready(out)
    assert out.shape == (len(attrs_nums),
                         max(len(g) for g in attrs_nums),
                         ENT_HIDDEN), out.shape
    assert jnp.isfinite(out).all()

    # Numerical check against the unpadded f32 pure-JAX reference.  Tolerance
    # widened to 2e-2 because the kernel intentionally uses bf16 MXU operands
    # (weights / embeddings / activations) with f32 accumulation.
    ref = reference_forward(raw, entity_attrs, attrs_nums, entity_attr_lens)
    np.testing.assert_allclose(np.asarray(out), np.asarray(ref),
                               rtol=2e-2, atol=2e-2)
    print("KERNEL_OK")
</pallas_src>

<mosaic_0001>
module attributes {stable_mosaic.version = 11 : i64} {
  func.func @_bilstm_kernel(%arg0: i32, %arg1: memref<6x16x128xbf16, #tpu.memory_space<vmem>>, %arg2: memref<16x1xi32, #tpu.memory_space<vmem>>, %arg3: memref<128x1024xbf16, #tpu.memory_space<vmem>>, %arg4: memref<1x1024xf32, #tpu.memory_space<vmem>>, %arg5: memref<128x512xbf16, #tpu.memory_space<vmem>>, %arg6: memref<128x512xbf16, #tpu.memory_space<vmem>>, %arg7: memref<16x128xbf16, #tpu.memory_space<vmem>>, %arg8: memref<6x16x512xf32, #tpu.memory_space<vmem>>, %arg9: memref<6x16x512xf32, #tpu.memory_space<vmem>>) attributes {dimension_semantics = [#tpu.dimension_semantics<parallel>], iteration_bounds = array<i64: 2>, scalar_prefetch = 0 : i64, scratch_operands = 2 : i64, tpu.core_type = #tpu.core_type<tc>, window_params = [{transform_indices = @transform_0, window_bounds = array<i64: 6, 16, 128>}, {transform_indices = @transform_1, window_bounds = array<i64: 16, 1>}, {pipeline_mode = #tpu.pipeline_mode<synchronous>, transform_indices = @transform_2, window_bounds = array<i64: 128, 1024>}, {pipeline_mode = #tpu.pipeline_mode<synchronous>, transform_indices = @transform_3, window_bounds = array<i64: 1, 1024>}, {pipeline_mode = #tpu.pipeline_mode<synchronous>, transform_indices = @transform_4, window_bounds = array<i64: 128, 512>}, {pipeline_mode = #tpu.pipeline_mode<synchronous>, transform_indices = @transform_5, window_bounds = array<i64: 128, 512>}, {transform_indices = @transform_6, window_bounds = array<i64: 16, 128>}]} {
    %c0 = arith.constant 0 : index
    %c0_0 = arith.constant 0 : index
    %0 = vector.load %arg2[%c0, %c0_0] : memref<16x1xi32, #tpu.memory_space<vmem>>, vector<16x1xi32>
    %c0_1 = arith.constant 0 : index
    %c0_2 = arith.constant 0 : index
    %1 = vector.load %arg5[%c0_1, %c0_2] : memref<128x512xbf16, #tpu.memory_space<vmem>>, vector<128x512xbf16>
    %c0_3 = arith.constant 0 : index
    %c0_4 = arith.constant 0 : index
    %2 = vector.load %arg6[%c0_3, %c0_4] : memref<128x512xbf16, #tpu.memory_space<vmem>>, vector<128x512xbf16>
    %c0_5 = arith.constant 0 : index
    %c0_6 = arith.constant 0 : index
    %c0_7 = arith.constant 0 : index
    %3 = vector.load %arg1[%c0_5, %c0_6, %c0_7] : memref<6x16x128xbf16, #tpu.memory_space<vmem>>, vector<6x16x128xbf16>
    %4 = vector.shape_cast %3 : vector<6x16x128xbf16> to vector<96x128xbf16>
    %c0_8 = arith.constant 0 : index
    %c0_9 = arith.constant 0 : index
    %5 = vector.load %arg3[%c0_8, %c0_9] : memref<128x1024xbf16, #tpu.memory_space<vmem>>, vector<128x1024xbf16>
    %cst = arith.constant dense<0.000000e+00> : vector<96x1024xf32>
    %6 = tpu.matmul %4, %5, %cst {dimension_numbers = #tpu.dot_dimension_numbers<[1], [0], [0], [1], [0, 0, 1, 1], [], []>} : vector<96x128xbf16>, vector<128x1024xbf16>, vector<96x1024xf32> -> vector<96x1024xf32>
    %c0_10 = arith.constant 0 : index
    %c0_11 = arith.constant 0 : index
    %7 = vector.load %arg4[%c0_10, %c0_11] : memref<1x1024xf32, #tpu.memory_space<vmem>>, vector<1x1024xf32>
    %8 = vector.broadcast %7 : vector<1x1024xf32> to vector<96x1024xf32>
    %9 = arith.addf %6, %8 : vector<96x1024xf32>
    %10 = vector.extract_strided_slice %9 {offsets = [0, 0], sizes = [96, 512], strides = [1, 1]} : vector<96x1024xf32> to vector<96x512xf32>
    %11 = vector.shape_cast %10 : vector<96x512xf32> to vector<6x16x512xf32>
    %c0_12 = arith.constant 0 : index
    %c0_13 = arith.constant 0 : index
    %c0_14 = arith.constant 0 : index
    %12 = vector.load %arg8[%c0_12, %c0_13, %c0_14] : memref<6x16x512xf32, #tpu.memory_space<vmem>>, vector<6x16x512xf32>
    tpu.vector_store %arg8[%c0_12, %c0_13, %c0_14], %11 {strides = array<i32>} : memref<6x16x512xf32, #tpu.memory_space<vmem>>, vector<6x16x512xf32>,
    %13 = vector.extract_strided_slice %9 {offsets = [0, 512], sizes = [96, 512], strides = [1, 1]} : vector<96x1024xf32> to vector<96x512xf32>
    %14 = vector.shape_cast %13 : vector<96x512xf32> to vector<6x16x512xf32>
    %c0_15 = arith.constant 0 : index
    %c0_16 = arith.constant 0 : index
    %c0_17 = arith.constant 0 : index
    %15 = vector.load %arg9[%c0_15, %c0_16, %c0_17] : memref<6x16x512xf32, #tpu.memory_space<vmem>>, vector<6x16x512xf32>
    tpu.vector_store %arg9[%c0_15, %c0_16, %c0_17], %14 {strides = array<i32>} : memref<6x16x512xf32, #tpu.memory_space<vmem>>, vector<6x16x512xf32>,
    %cst_18 = arith.constant 0.000000e+00 : f32
    %16 = vector.broadcast %cst_18 : f32 to vector<16x128xf32>
    %c0_i32 = arith.constant 0 : i32
    %17 = arith.truncf %16 : vector<16x128xf32> to vector<16x128xbf16>
    %cst_19 = arith.constant dense<0.000000e+00> : vector<16x512xf32>
    %18 = tpu.matmul %17, %1, %cst_19 {dimension_numbers = #tpu.dot_dimension_numbers<[1], [0], [0], [1], [0, 0, 1, 1], [], []>} : vector<16x128xbf16>, vector<128x512xbf16>, vector<16x512xf32> -> vector<16x512xf32>
    %19 = arith.index_cast %c0_i32 : i32 to index
    %c0_20 = arith.constant 0 : index
    %c0_21 = arith.constant 0 : index
    %20 = vector.load %arg8[%19, %c0_20, %c0_21] : memref<6x16x512xf32, #tpu.memory_space<vmem>>, vector<1x16x512xf32>
    %21 = vector.shape_cast %20 : vector<1x16x512xf32> to vector<16x512xf32>
    %22 = arith.addf %18, %21 : vector<16x512xf32>
    %23 = vector.extract_strided_slice %22 {offsets = [0, 0], sizes = [16, 128], strides = [1, 1]} : vector<16x512xf32> to vector<16x128xf32>
    %cst_22 = arith.constant 5.000000e-01 : f32
    %24 = vector.broadcast %cst_22 : f32 to vector<16x128xf32>
    %25 = arith.mulf %24, %23 : vector<16x128xf32>
    %26 = math.tanh %25 : vector<16x128xf32>
    %cst_23 = arith.constant 1.000000e+00 : f32
    %27 = vector.broadcast %cst_23 : f32 to vector<16x128xf32>
    %28 = arith.addf %26, %27 : vector<16x128xf32>
    %cst_24 = arith.constant 5.000000e-01 : f32
    %29 = vector.broadcast %cst_24 : f32 to vector<16x128xf32>
    %30 = arith.mulf %29, %28 : vector<16x128xf32>
    %31 = vector.extract_strided_slice %22 {offsets = [0, 128], sizes = [16, 128], strides = [1, 1]} : vector<16x512xf32> to vector<16x128xf32>
    %cst_25 = arith.constant 5.000000e-01 : f32
    %32 = vector.broadcast %cst_25 : f32 to vector<16x128xf32>
    %33 = arith.mulf %32, %31 : vector<16x128xf32>
    %34 = math.tanh %33 : vector<16x128xf32>
    %cst_26 = arith.constant 1.000000e+00 : f32
    %35 = vector.broadcast %cst_26 : f32 to vector<16x128xf32>
    %36 = arith.addf %34, %35 : vector<16x128xf32>
    %cst_27 = arith.constant 5.000000e-01 : f32
    %37 = vector.broadcast %cst_27 : f32 to vector<16x128xf32>
    %38 = arith.mulf %37, %36 : vector<16x128xf32>
    %39 = vector.extract_strided_slice %22 {offsets = [0, 256], sizes = [16, 128], strides = [1, 1]} : vector<16x512xf32> to vector<16x128xf32>
    %40 = math.tanh %39 : vector<16x128xf32>
    %41 = vector.extract_strided_slice %22 {offsets = [0, 384], sizes = [16, 128], strides = [1, 1]} : vector<16x512xf32> to vector<16x128xf32>
    %cst_28 = arith.constant 5.000000e-01 : f32
    %42 = vector.broadcast %cst_28 : f32 to vector<16x128xf32>
    %43 = arith.mulf %42, %41 : vector<16x128xf32>
    %44 = math.tanh %43 : vector<16x128xf32>
    %cst_29 = arith.constant 1.000000e+00 : f32
    %45 = vector.broadcast %cst_29 : f32 to vector<16x128xf32>
    %46 = arith.addf %44, %45 : vector<16x128xf32>
    %cst_30 = arith.constant 5.000000e-01 : f32
    %47 = vector.broadcast %cst_30 : f32 to vector<16x128xf32>
    %48 = arith.mulf %47, %46 : vector<16x128xf32>
    %49 = arith.mulf %38, %16 : vector<16x128xf32>
    %50 = arith.mulf %30, %40 : vector<16x128xf32>
    %51 = arith.addf %49, %50 : vector<16x128xf32>
    %52 = math.tanh %51 : vector<16x128xf32>
    %53 = arith.mulf %48, %52 : vector<16x128xf32>
    %54 = vector.broadcast %c0_i32 : i32 to vector<16x1xi32>
    %55 = arith.cmpi slt, %54, %0 : vector<16x1xi32>
    %56 = vector.shape_cast %55 : vector<16x1xi1> to vector<16x1xi1>
    %57 = vector.broadcast %56 : vector<16x1xi1> to vector<16x128xi1>
    %58 = arith.select %57, %53, %16 : vector<16x128xi1>, vector<16x128xf32>
    %59 = vector.shape_cast %55 : vector<16x1xi1> to vector<16x1xi1>
    %60 = vector.broadcast %59 : vector<16x1xi1> to vector<16x128xi1>
    %61 = arith.select %60, %51, %16 : vector<16x128xi1>, vector<16x128xf32>
    %c5_i32 = arith.constant 5 : i32
    %62 = arith.subi %c5_i32, %c0_i32 : i32
    %63 = arith.truncf %16 : vector<16x128xf32> to vector<16x128xbf16>
    %cst_31 = arith.constant dense<0.000000e+00> : vector<16x512xf32>
    %64 = tpu.matmul %63, %2, %cst_31 {dimension_numbers = #tpu.dot_dimension_numbers<[1], [0], [0], [1], [0, 0, 1, 1], [], []>} : vector<16x128xbf16>, vector<128x512xbf16>, vector<16x512xf32> -> vector<16x512xf32>
    %65 = arith.index_cast %62 : i32 to index
    %c0_32 = arith.constant 0 : index
    %c0_33 = arith.constant 0 : index
    %66 = vector.load %arg9[%65, %c0_32, %c0_33] : memref<6x16x512xf32, #tpu.memory_space<vmem>>, vector<1x16x512xf32>
    %67 = vector.shape_cast %66 : vector<1x16x512xf32> to vector<16x512xf32>
    %68 = arith.addf %64, %67 : vector<16x512xf32>
    %69 = vector.extract_strided_slice %68 {offsets = [0, 0], sizes = [16, 128], strides = [1, 1]} : vector<16x512xf32> to vector<16x128xf32>
    %cst_34 = arith.constant 5.000000e-01 : f32
    %70 = vector.broadcast %cst_34 : f32 to vector<16x128xf32>
    %71 = arith.mulf %70, %69 : vector<16x128xf32>
    %72 = math.tanh %71 : vector<16x128xf32>
    %cst_35 = arith.constant 1.000000e+00 : f32
    %73 = vector.broadcast %cst_35 : f32 to vector<16x128xf32>
    %74 = arith.addf %72, %73 : vector<16x128xf32>
    %cst_36 = arith.constant 5.000000e-01 : f32
    %75 = vector.broadcast %cst_36 : f32 to vector<16x128xf32>
    %76 = arith.mulf %75, %74 : vector<16x128xf32>
    %77 = vector.extract_strided_slice %68 {offsets = [0, 128], sizes = [16, 128], strides = [1, 1]} : vector<16x512xf32> to vector<16x128xf32>
    %cst_37 = arith.constant 5.000000e-01 : f32
    %78 = vector.broadcast %cst_37 : f32 to vector<16x128xf32>
    %79 = arith.mulf %78, %77 : vector<16x128xf32>
    %80 = math.tanh %79 : vector<16x128xf32>
    %cst_38 = arith.constant 1.000000e+00 : f32
    %81 = vector.broadcast %cst_38 : f32 to vector<16x128xf32>
    %82 = arith.addf %80, %81 : vector<16x128xf32>
    %cst_39 = arith.constant 5.000000e-01 : f32
    %83 = vector.broadcast %cst_39 : f32 to vector<16x128xf32>
    %84 = arith.mulf %83, %82 : vector<16x128xf32>
    %85 = vector.extract_strided_slice %68 {offsets = [0, 256], sizes = [16, 128], strides = [1, 1]} : vector<16x512xf32> to vector<16x128xf32>
    %86 = math.tanh %85 : vector<16x128xf32>
    %87 = vector.extract_strided_slice %68 {offsets = [0, 384], sizes = [16, 128], strides = [1, 1]} : vector<16x512xf32> to vector<16x128xf32>
    %cst_40 = arith.constant 5.000000e-01 : f32
    %88 = vector.broadcast %cst_40 : f32 to vector<16x128xf32>
    %89 = arith.mulf %88, %87 : vector<16x128xf32>
    %90 = math.tanh %89 : vector<16x128xf32>
    %cst_41 = arith.constant 1.000000e+00 : f32
    %91 = vector.broadcast %cst_41 : f32 to vector<16x128xf32>
    %92 = arith.addf %90, %91 : vector<16x128xf32>
    %cst_42 = arith.constant 5.000000e-01 : f32
    %93 = vector.broadcast %cst_42 : f32 to vector<16x128xf32>
    %94 = arith.mulf %93, %92 : vector<16x128xf32>
    %95 = arith.mulf %84, %16 : vector<16x128xf32>
    %96 = arith.mulf %76, %86 : vector<16x128xf32>
    %97 = arith.addf %95, %96 : vector<16x128xf32>
    %98 = math.tanh %97 : vector<16x128xf32>
    %99 = arith.mulf %94, %98 : vector<16x128xf32>
    %100 = vector.broadcast %62 : i32 to vector<16x1xi32>
    %101 = arith.cmpi slt, %100, %0 : vector<16x1xi32>
    %102 = vector.shape_cast %101 : vector<16x1xi1> to vector<16x1xi1>
    %103 = vector.broadcast %102 : vector<16x1xi1> to vector<16x128xi1>
    %104 = arith.select %103, %99, %16 : vector<16x128xi1>, vector<16x128xf32>
    %105 = vector.shape_cast %101 : vector<16x1xi1> to vector<16x1xi1>
    %106 = vector.broadcast %105 : vector<16x1xi1> to vector<16x128xi1>
    %107 = arith.select %106, %97, %16 : vector<16x128xi1>, vector<16x128xf32>
    %c1_i32 = arith.constant 1 : i32
    %108 = arith.truncf %58 : vector<16x128xf32> to vector<16x128xbf16>
    %cst_43 = arith.constant dense<0.000000e+00> : vector<16x512xf32>
    %109 = tpu.matmul %108, %1, %cst_43 {dimension_numbers = #tpu.dot_dimension_numbers<[1], [0], [0], [1], [0, 0, 1, 1], [], []>} : vector<16x128xbf16>, vector<128x512xbf16>, vector<16x512xf32> -> vector<16x512xf32>
    %110 = arith.index_cast %c1_i32 : i32 to index
    %c0_44 = arith.constant 0 : index
    %c0_45 = arith.constant 0 : index
    %111 = vector.load %arg8[%110, %c0_44, %c0_45] : memref<6x16x512xf32, #tpu.memory_space<vmem>>, vector<1x16x512xf32>
    %112 = vector.shape_cast %111 : vector<1x16x512xf32> to vector<16x512xf32>
    %113 = arith.addf %109, %112 : vector<16x512xf32>
    %114 = vector.extract_strided_slice %113 {offsets = [0, 0], sizes = [16, 128], strides = [1, 1]} : vector<16x512xf32> to vector<16x128xf32>
    %cst_46 = arith.constant 5.000000e-01 : f32
    %115 = vector.broadcast %cst_46 : f32 to vector<16x128xf32>
    %116 = arith.mulf %115, %114 : vector<16x128xf32>
    %117 = math.tanh %116 : vector<16x128xf32>
    %cst_47 = arith.constant 1.000000e+00 : f32
    %118 = vector.broadcast %cst_47 : f32 to vector<16x128xf32>
    %119 = arith.addf %117, %118 : vector<16x128xf32>
    %cst_48 = arith.constant 5.000000e-01 : f32
    %120 = vector.broadcast %cst_48 : f32 to vector<16x128xf32>
    %121 = arith.mulf %120, %119 : vector<16x128xf32>
    %122 = vector.extract_strided_slice %113 {offsets = [0, 128], sizes = [16, 128], strides = [1, 1]} : vector<16x512xf32> to vector<16x128xf32>
    %cst_49 = arith.constant 5.000000e-01 : f32
    %123 = vector.broadcast %cst_49 : f32 to vector<16x128xf32>
    %124 = arith.mulf %123, %122 : vector<16x128xf32>
    %125 = math.tanh %124 : vector<16x128xf32>
    %cst_50 = arith.constant 1.000000e+00 : f32
    %126 = vector.broadcast %cst_50 : f32 to vector<16x128xf32>
    %127 = arith.addf %125, %126 : vector<16x128xf32>
    %cst_51 = arith.constant 5.000000e-01 : f32
    %128 = vector.broadcast %cst_51 : f32 to vector<16x128xf32>
    %129 = arith.mulf %128, %127 : vector<16x128xf32>
    %130 = vector.extract_strided_slice %113 {offsets = [0, 256], sizes = [16, 128], strides = [1, 1]} : vector<16x512xf32> to vector<16x128xf32>
    %131 = math.tanh %130 : vector<16x128xf32>
    %132 = vector.extract_strided_slice %113 {offsets = [0, 384], sizes = [16, 128], strides = [1, 1]} : vector<16x512xf32> to vector<16x128xf32>
    %cst_52 = arith.constant 5.000000e-01 : f32
    %133 = vector.broadcast %cst_52 : f32 to vector<16x128xf32>
    %134 = arith.mulf %133, %132 : vector<16x128xf32>
    %135 = math.tanh %134 : vector<16x128xf32>
    %cst_53 = arith.constant 1.000000e+00 : f32
    %136 = vector.broadcast %cst_53 : f32 to vector<16x128xf32>
    %137 = arith.addf %135, %136 : vector<16x128xf32>
    %cst_54 = arith.constant 5.000000e-01 : f32
    %138 = vector.broadcast %cst_54 : f32 to vector<16x128xf32>
    %139 = arith.mulf %138, %137 : vector<16x128xf32>
    %140 = arith.mulf %129, %61 : vector<16x128xf32>
    %141 = arith.mulf %121, %131 : vector<16x128xf32>
    %142 = arith.addf %140, %141 : vector<16x128xf32>
    %143 = math.tanh %142 : vector<16x128xf32>
    %144 = arith.mulf %139, %143 : vector<16x128xf32>
    %145 = vector.broadcast %c1_i32 : i32 to vector<16x1xi32>
    %146 = arith.cmpi slt, %145, %0 : vector<16x1xi32>
    %147 = vector.shape_cast %146 : vector<16x1xi1> to vector<16x1xi1>
    %148 = vector.broadcast %147 : vector<16x1xi1> to vector<16x128xi1>
    %149 = arith.select %148, %144, %58 : vector<16x128xi1>, vector<16x128xf32>
    %150 = vector.shape_cast %146 : vector<16x1xi1> to vector<16x1xi1>
    %151 = vector.broadcast %150 : vector<16x1xi1> to vector<16x128xi1>
    %152 = arith.select %151, %142, %61 : vector<16x128xi1>, vector<16x128xf32>
    %c5_i32_55 = arith.constant 5 : i32
    %153 = arith.subi %c5_i32_55, %c1_i32 : i32
    %154 = arith.truncf %104 : vector<16x128xf32> to vector<16x128xbf16>
    %cst_56 = arith.constant dense<0.000000e+00> : vector<16x512xf32>
    %155 = tpu.matmul %154, %2, %cst_56 {dimension_numbers = #tpu.dot_dimension_numbers<[1], [0], [0], [1], [0, 0, 1, 1], [], []>} : vector<16x128xbf16>, vector<128x512xbf16>, vector<16x512xf32> -> vector<16x512xf32>
    %156 = arith.index_cast %153 : i32 to index
    %c0_57 = arith.constant 0 : index
    %c0_58 = arith.constant 0 : index
    %157 = vector.load %arg9[%156, %c0_57, %c0_58] : memref<6x16x512xf32, #tpu.memory_space<vmem>>, vector<1x16x512xf32>
    %158 = vector.shape_cast %157 : vector<1x16x512xf32> to vector<16x512xf32>
    %159 = arith.addf %155, %158 : vector<16x512xf32>
    %160 = vector.extract_strided_slice %159 {offsets = [0, 0], sizes = [16, 128], strides = [1, 1]} : vector<16x512xf32> to vector<16x128xf32>
    %cst_59 = arith.constant 5.000000e-01 : f32
    %161 = vector.broadcast %cst_59 : f32 to vector<16x128xf32>
    %162 = arith.mulf %161, %160 : vector<16x128xf32>
    %163 = math.tanh %162 : vector<16x128xf32>
    %cst_60 = arith.constant 1.000000e+00 : f32
    %164 = vector.broadcast %cst_60 : f32 to vector<16x128xf32>
    %165 = arith.addf %163, %164 : vector<16x128xf32>
    %cst_61 = arith.constant 5.000000e-01 : f32
    %166 = vector.broadcast %cst_61 : f32 to vector<16x128xf32>
    %167 = arith.mulf %166, %165 : vector<16x128xf32>
    %168 = vector.extract_strided_slice %159 {offsets = [0, 128], sizes = [16, 128], strides = [1, 1]} : vector<16x512xf32> to vector<16x128xf32>
    %cst_62 = arith.constant 5.000000e-01 : f32
    %169 = vector.broadcast %cst_62 : f32 to vector<16x128xf32>
    %170 = arith.mulf %169, %168 : vector<16x128xf32>
    %171 = math.tanh %170 : vector<16x128xf32>
    %cst_63 = arith.constant 1.000000e+00 : f32
    %172 = vector.broadcast %cst_63 : f32 to vector<16x128xf32>
    %173 = arith.addf %171, %172 : vector<16x128xf32>
    %cst_64 = arith.constant 5.000000e-01 : f32
    %174 = vector.broadcast %cst_64 : f32 to vector<16x128xf32>
    %175 = arith.mulf %174, %173 : vector<16x128xf32>
    %176 = vector.extract_strided_slice %159 {offsets = [0, 256], sizes = [16, 128], strides = [1, 1]} : vector<16x512xf32> to vector<16x128xf32>
    %177 = math.tanh %176 : vector<16x128xf32>
    %178 = vector.extract_strided_slice %159 {offsets = [0, 384], sizes = [16, 128], strides = [1, 1]} : vector<16x512xf32> to vector<16x128xf32>
    %cst_65 = arith.constant 5.000000e-01 : f32
    %179 = vector.broadcast %cst_65 : f32 to vector<16x128xf32>
    %180 = arith.mulf %179, %178 : vector<16x128xf32>
    %181 = math.tanh %180 : vector<16x128xf32>
    %cst_66 = arith.constant 1.000000e+00 : f32
    %182 = vector.broadcast %cst_66 : f32 to vector<16x128xf32>
    %183 = arith.addf %181, %182 : vector<16x128xf32>
    %cst_67 = arith.constant 5.000000e-01 : f32
    %184 = vector.broadcast %cst_67 : f32 to vector<16x128xf32>
    %185 = arith.mulf %184, %183 : vector<16x128xf32>
    %186 = arith.mulf %175, %107 : vector<16x128xf32>
    %187 = arith.mulf %167, %177 : vector<16x128xf32>
    %188 = arith.addf %186, %187 : vector<16x128xf32>
    %189 = math.tanh %188 : vector<16x128xf32>
    %190 = arith.mulf %185, %189 : vector<16x128xf32>
    %191 = vector.broadcast %153 : i32 to vector<16x1xi32>
    %192 = arith.cmpi slt, %191, %0 : vector<16x1xi32>
    %193 = vector.shape_cast %192 : vector<16x1xi1> to vector<16x1xi1>
    %194 = vector.broadcast %193 : vector<16x1xi1> to vector<16x128xi1>
    %195 = arith.select %194, %190, %104 : vector<16x128xi1>, vector<16x128xf32>
    %196 = vector.shape_cast %192 : vector<16x1xi1> to vector<16x1xi1>
    %197 = vector.broadcast %196 : vector<16x1xi1> to vector<16x128xi1>
    %198 = arith.select %197, %188, %107 : vector<16x128xi1>, vector<16x128xf32>
    %c2_i32 = arith.constant 2 : i32
    %199 = arith.truncf %149 : vector<16x128xf32> to vector<16x128xbf16>
    %cst_68 = arith.constant dense<0.000000e+00> : vector<16x512xf32>
    %200 = tpu.matmul %199, %1, %cst_68 {dimension_numbers = #tpu.dot_dimension_numbers<[1], [0], [0], [1], [0, 0, 1, 1], [], []>} : vector<16x128xbf16>, vector<128x512xbf16>, vector<16x512xf32> -> vector<16x512xf32>
    %201 = arith.index_cast %c2_i32 : i32 to index
    %c0_69 = arith.constant 0 : index
    %c0_70 = arith.constant 0 : index
    %202 = vector.load %arg8[%201, %c0_69, %c0_70] : memref<6x16x512xf32, #tpu.memory_space<vmem>>, vector<1x16x512xf32>
    %203 = vector.shape_cast %202 : vector<1x16x512xf32> to vector<16x512xf32>
    %204 = arith.addf %200, %203 : vector<16x512xf32>
    %205 = vector.extract_strided_slice %204 {offsets = [0, 0], sizes = [16, 128], strides = [1, 1]} : vector<16x512xf32> to vector<16x128xf32>
    %cst_71 = arith.constant 5.000000e-01 : f32
    %206 = vector.broadcast %cst_71 : f32 to vector<16x128xf32>
    %207 = arith.mulf %206, %205 : vector<16x128xf32>
    %208 = math.tanh %207 : vector<16x128xf32>
    %cst_72 = arith.constant 1.000000e+00 : f32
    %209 = vector.broadcast %cst_72 : f32 to vector<16x128xf32>
    %210 = arith.addf %208, %209 : vector<16x128xf32>
    %cst_73 = arith.constant 5.000000e-01 : f32
    %211 = vector.broadcast %cst_73 : f32 to vector<16x128xf32>
    %212 = arith.mulf %211, %210 : vector<16x128xf32>
    %213 = vector.extract_strided_slice %204 {offsets = [0, 128], sizes = [16, 128], strides = [1, 1]} : vector<16x512xf32> to vector<16x128xf32>
    %cst_74 = arith.constant 5.000000e-01 : f32
    %214 = vector.broadcast %cst_74 : f32 to vector<16x128xf32>
    %215 = arith.mulf %214, %213 : vector<16x128xf32>
    %216 = math.tanh %215 : vector<16x128xf32>
    %cst_75 = arith.constant 1.000000e+00 : f32
    %217 = vector.broadcast %cst_75 : f32 to vector<16x128xf32>
    %218 = arith.addf %216, %217 : vector<16x128xf32>
    %cst_76 = arith.constant 5.000000e-01 : f32
    %219 = vector.broadcast %cst_76 : f32 to vector<16x128xf32>
    %220 = arith.mulf %219, %218 : vector<16x128xf32>
    %221 = vector.extract_strided_slice %204 {offsets = [0, 256], sizes = [16, 128], strides = [1, 1]} : vector<16x512xf32> to vector<16x128xf32>
    %222 = math.tanh %221 : vector<16x128xf32>
    %223 = vector.extract_strided_slice %204 {offsets = [0, 384], sizes = [16, 128], strides = [1, 1]} : vector<16x512xf32> to vector<16x128xf32>
    %cst_77 = arith.constant 5.000000e-01 : f32
    %224 = vector.broadcast %cst_77 : f32 to vector<16x128xf32>
    %225 = arith.mulf %224, %223 : vector<16x128xf32>
    %226 = math.tanh %225 : vector<16x128xf32>
    %cst_78 = arith.constant 1.000000e+00 : f32
    %227 = vector.broadcast %cst_78 : f32 to vector<16x128xf32>
    %228 = arith.addf %226, %227 : vector<16x128xf32>
    %cst_79 = arith.constant 5.000000e-01 : f32
    %229 = vector.broadcast %cst_79 : f32 to vector<16x128xf32>
    %230 = arith.mulf %229, %228 : vector<16x128xf32>
    %231 = arith.mulf %220, %152 : vector<16x128xf32>
    %232 = arith.mulf %212, %222 : vector<16x128xf32>
    %233 = arith.addf %231, %232 : vector<16x128xf32>
    %234 = math.tanh %233 : vector<16x128xf32>
    %235 = arith.mulf %230, %234 : vector<16x128xf32>
    %236 = vector.broadcast %c2_i32 : i32 to vector<16x1xi32>
    %237 = arith.cmpi slt, %236, %0 : vector<16x1xi32>
    %238 = vector.shape_cast %237 : vector<16x1xi1> to vector<16x1xi1>
    %239 = vector.broadcast %238 : vector<16x1xi1> to vector<16x128xi1>
    %240 = arith.select %239, %235, %149 : vector<16x128xi1>, vector<16x128xf32>
    %241 = vector.shape_cast %237 : vector<16x1xi1> to vector<16x1xi1>
    %242 = vector.broadcast %241 : vector<16x1xi1> to vector<16x128xi1>
    %243 = arith.select %242, %233, %152 : vector<16x128xi1>, vector<16x128xf32>
    %c5_i32_80 = arith.constant 5 : i32
    %244 = arith.subi %c5_i32_80, %c2_i32 : i32
    %245 = arith.truncf %195 : vector<16x128xf32> to vector<16x128xbf16>
    %cst_81 = arith.constant dense<0.000000e+00> : vector<16x512xf32>
    %246 = tpu.matmul %245, %2, %cst_81 {dimension_numbers = #tpu.dot_dimension_numbers<[1], [0], [0], [1], [0, 0, 1, 1], [], []>} : vector<16x128xbf16>, vector<128x512xbf16>, vector<16x512xf32> -> vector<16x512xf32>
    %247 = arith.index_cast %244 : i32 to index
    %c0_82 = arith.constant 0 : index
    %c0_83 = arith.constant 0 : index
    %248 = vector.load %arg9[%247, %c0_82, %c0_83] : memref<6x16x512xf32, #tpu.memory_space<vmem>>, vector<1x16x512xf32>
    %249 = vector.shape_cast %248 : vector<1x16x512xf32> to vector<16x512xf32>
    %250 = arith.addf %246, %249 : vector<16x512xf32>
    %251 = vector.extract_strided_slice %250 {offsets = [0, 0], sizes = [16, 128], strides = [1, 1]} : vector<16x512xf32> to vector<16x128xf32>
    %cst_84 = arith.constant 5.000000e-01 : f32
    %252 = vector.broadcast %cst_84 : f32 to vector<16x128xf32>
    %253 = arith.mulf %252, %251 : vector<16x128xf32>
    %254 = math.tanh %253 : vector<16x128xf32>
    %cst_85 = arith.constant 1.000000e+00 : f32
    %255 = vector.broadcast %cst_85 : f32 to vector<16x128xf32>
    %256 = arith.addf %254, %255 : vector<16x128xf32>
    %cst_86 = arith.constant 5.000000e-01 : f32
    %257 = vector.broadcast %cst_86 : f32 to vector<16x128xf32>
    %258 = arith.mulf %257, %256 : vector<16x128xf32>
    %259 = vector.extract_strided_slice %250 {offsets = [0, 128], sizes = [16, 128], strides = [1, 1]} : vector<16x512xf32> to vector<16x128xf32>
    %cst_87 = arith.constant 5.000000e-01 : f32
    %260 = vector.broadcast %cst_87 : f32 to vector<16x128xf32>
    %261 = arith.mulf %260, %259 : vector<16x128xf32>
    %262 = math.tanh %261 : vector<16x128xf32>
    %cst_88 = arith.constant 1.000000e+00 : f32
    %263 = vector.broadcast %cst_88 : f32 to vector<16x128xf32>
    %264 = arith.addf %262, %263 : vector<16x128xf32>
    %cst_89 = arith.constant 5.000000e-01 : f32
    %265 = vector.broadcast %cst_89 : f32 to vector<16x128xf32>
    %266 = arith.mulf %265, %264 : vector<16x128xf32>
    %267 = vector.extract_strided_slice %250 {offsets = [0, 256], sizes = [16, 128], strides = [1, 1]} : vector<16x512xf32> to vector<16x128xf32>
    %268 = math.tanh %267 : vector<16x128xf32>
    %269 = vector.extract_strided_slice %250 {offsets = [0, 384], sizes = [16, 128], strides = [1, 1]} : vector<16x512xf32> to vector<16x128xf32>
    %cst_90 = arith.constant 5.000000e-01 : f32
    %270 = vector.broadcast %cst_90 : f32 to vector<16x128xf32>
    %271 = arith.mulf %270, %269 : vector<16x128xf32>
    %272 = math.tanh %271 : vector<16x128xf32>
    %cst_91 = arith.constant 1.000000e+00 : f32
    %273 = vector.broadcast %cst_91 : f32 to vector<16x128xf32>
    %274 = arith.addf %272, %273 : vector<16x128xf32>
    %cst_92 = arith.constant 5.000000e-01 : f32
    %275 = vector.broadcast %cst_92 : f32 to vector<16x128xf32>
    %276 = arith.mulf %275, %274 : vector<16x128xf32>
    %277 = arith.mulf %266, %198 : vector<16x128xf32>
    %278 = arith.mulf %258, %268 : vector<16x128xf32>
    %279 = arith.addf %277, %278 : vector<16x128xf32>
    %280 = math.tanh %279 : vector<16x128xf32>
    %281 = arith.mulf %276, %280 : vector<16x128xf32>
    %282 = vector.broadcast %244 : i32 to vector<16x1xi32>
    %283 = arith.cmpi slt, %282, %0 : vector<16x1xi32>
    %284 = vector.shape_cast %283 : vector<16x1xi1> to vector<16x1xi1>
    %285 = vector.broadcast %284 : vector<16x1xi1> to vector<16x128xi1>
    %286 = arith.select %285, %281, %195 : vector<16x128xi1>, vector<16x128xf32>
    %287 = vector.shape_cast %283 : vector<16x1xi1> to vector<16x1xi1>
    %288 = vector.broadcast %287 : vector<16x1xi1> to vector<16x128xi1>
    %289 = arith.select %288, %279, %198 : vector<16x128xi1>, vector<16x128xf32>
    %c3_i32 = arith.constant 3 : i32
    %290 = arith.truncf %240 : vector<16x128xf32> to vector<16x128xbf16>
    %cst_93 = arith.constant dense<0.000000e+00> : vector<16x512xf32>
    %291 = tpu.matmul %290, %1, %cst_93 {dimension_numbers = #tpu.dot_dimension_numbers<[1], [0], [0], [1], [0, 0, 1, 1], [], []>} : vector<16x128xbf16>, vector<128x512xbf16>, vector<16x512xf32> -> vector<16x512xf32>
    %292 = arith.index_cast %c3_i32 : i32 to index
    %c0_94 = arith.constant 0 : index
    %c0_95 = arith.constant 0 : index
    %293 = vector.load %arg8[%292, %c0_94, %c0_95] : memref<6x16x512xf32, #tpu.memory_space<vmem>>, vector<1x16x512xf32>
    %294 = vector.shape_cast %293 : vector<1x16x512xf32> to vector<16x512xf32>
    %295 = arith.addf %291, %294 : vector<16x512xf32>
    %296 = vector.extract_strided_slice %295 {offsets = [0, 0], sizes = [16, 128], strides = [1, 1]} : vector<16x512xf32> to vector<16x128xf32>
    %cst_96 = arith.constant 5.000000e-01 : f32
    %297 = vector.broadcast %cst_96 : f32 to vector<16x128xf32>
    %298 = arith.mulf %297, %296 : vector<16x128xf32>
    %299 = math.tanh %298 : vector<16x128xf32>
    %cst_97 = arith.constant 1.000000e+00 : f32
    %300 = vector.broadcast %cst_97 : f32 to vector<16x128xf32>
    %301 = arith.addf %299, %300 : vector<16x128xf32>
    %cst_98 = arith.constant 5.000000e-01 : f32
    %302 = vector.broadcast %cst_98 : f32 to vector<16x128xf32>
    %303 = arith.mulf %302, %301 : vector<16x128xf32>
    %304 = vector.extract_strided_slice %295 {offsets = [0, 128], sizes = [16, 128], strides = [1, 1]} : vector<16x512xf32> to vector<16x128xf32>
    %cst_99 = arith.constant 5.000000e-01 : f32
    %305 = vector.broadcast %cst_99 : f32 to vector<16x128xf32>
    %306 = arith.mulf %305, %304 : vector<16x128xf32>
    %307 = math.tanh %306 : vector<16x128xf32>
    %cst_100 = arith.constant 1.000000e+00 : f32
    %308 = vector.broadcast %cst_100 : f32 to vector<16x128xf32>
    %309 = arith.addf %307, %308 : vector<16x128xf32>
    %cst_101 = arith.constant 5.000000e-01 : f32
    %310 = vector.broadcast %cst_101 : f32 to vector<16x128xf32>
    %311 = arith.mulf %310, %309 : vector<16x128xf32>
    %312 = vector.extract_strided_slice %295 {offsets = [0, 256], sizes = [16, 128], strides = [1, 1]} : vector<16x512xf32> to vector<16x128xf32>
    %313 = math.tanh %312 : vector<16x128xf32>
    %314 = vector.extract_strided_slice %295 {offsets = [0, 384], sizes = [16, 128], strides = [1, 1]} : vector<16x512xf32> to vector<16x128xf32>
    %cst_102 = arith.constant 5.000000e-01 : f32
    %315 = vector.broadcast %cst_102 : f32 to vector<16x128xf32>
    %316 = arith.mulf %315, %314 : vector<16x128xf32>
    %317 = math.tanh %316 : vector<16x128xf32>
    %cst_103 = arith.constant 1.000000e+00 : f32
    %318 = vector.broadcast %cst_103 : f32 to vector<16x128xf32>
    %319 = arith.addf %317, %318 : vector<16x128xf32>
    %cst_104 = arith.constant 5.000000e-01 : f32
    %320 = vector.broadcast %cst_104 : f32 to vector<16x128xf32>
    %321 = arith.mulf %320, %319 : vector<16x128xf32>
    %322 = arith.mulf %311, %243 : vector<16x128xf32>
    %323 = arith.mulf %303, %313 : vector<16x128xf32>
    %324 = arith.addf %322, %323 : vector<16x128xf32>
    %325 = math.tanh %324 : vector<16x128xf32>
    %326 = arith.mulf %321, %325 : vector<16x128xf32>
    %327 = vector.broadcast %c3_i32 : i32 to vector<16x1xi32>
    %328 = arith.cmpi slt, %327, %0 : vector<16x1xi32>
    %329 = vector.shape_cast %328 : vector<16x1xi1> to vector<16x1xi1>
    %330 = vector.broadcast %329 : vector<16x1xi1> to vector<16x128xi1>
    %331 = arith.select %330, %326, %240 : vector<16x128xi1>, vector<16x128xf32>
    %332 = vector.shape_cast %328 : vector<16x1xi1> to vector<16x1xi1>
    %333 = vector.broadcast %332 : vector<16x1xi1> to vector<16x128xi1>
    %334 = arith.select %333, %324, %243 : vector<16x128xi1>, vector<16x128xf32>
    %c5_i32_105 = arith.constant 5 : i32
    %335 = arith.subi %c5_i32_105, %c3_i32 : i32
    %336 = arith.truncf %286 : vector<16x128xf32> to vector<16x128xbf16>
    %cst_106 = arith.constant dense<0.000000e+00> : vector<16x512xf32>
    %337 = tpu.matmul %336, %2, %cst_106 {dimension_numbers = #tpu.dot_dimension_numbers<[1], [0], [0], [1], [0, 0, 1, 1], [], []>} : vector<16x128xbf16>, vector<128x512xbf16>, vector<16x512xf32> -> vector<16x512xf32>
    %338 = arith.index_cast %335 : i32 to index
    %c0_107 = arith.constant 0 : index
    %c0_108 = arith.constant 0 : index
    %339 = vector.load %arg9[%338, %c0_107, %c0_108] : memref<6x16x512xf32, #tpu.memory_space<vmem>>, vector<1x16x512xf32>
    %340 = vector.shape_cast %339 : vector<1x16x512xf32> to vector<16x512xf32>
    %341 = arith.addf %337, %340 : vector<16x512xf32>
    %342 = vector.extract_strided_slice %341 {offsets = [0, 0], sizes = [16, 128], strides = [1, 1]} : vector<16x512xf32> to vector<16x128xf32>
    %cst_109 = arith.constant 5.000000e-01 : f32
    %343 = vector.broadcast %cst_109 : f32 to vector<16x128xf32>
    %344 = arith.mulf %343, %342 : vector<16x128xf32>
    %345 = math.tanh %344 : vector<16x128xf32>
    %cst_110 = arith.constant 1.000000e+00 : f32
    %346 = vector.broadcast %cst_110 : f32 to vector<16x128xf32>
    %347 = arith.addf %345, %346 : vector<16x128xf32>
    %cst_111 = arith.constant 5.000000e-01 : f32
    %348 = vector.broadcast %cst_111 : f32 to vector<16x128xf32>
    %349 = arith.mulf %348, %347 : vector<16x128xf32>
    %350 = vector.extract_strided_slice %341 {offsets = [0, 128], sizes = [16, 128], strides = [1, 1]} : vector<16x512xf32> to vector<16x128xf32>
    %cst_112 = arith.constant 5.000000e-01 : f32
    %351 = vector.broadcast %cst_112 : f32 to vector<16x128xf32>
    %352 = arith.mulf %351, %350 : vector<16x128xf32>
    %353 = math.tanh %352 : vector<16x128xf32>
    %cst_113 = arith.constant 1.000000e+00 : f32
    %354 = vector.broadcast %cst_113 : f32 to vector<16x128xf32>
    %355 = arith.addf %353, %354 : vector<16x128xf32>
    %cst_114 = arith.constant 5.000000e-01 : f32
    %356 = vector.broadcast %cst_114 : f32 to vector<16x128xf32>
    %357 = arith.mulf %356, %355 : vector<16x128xf32>
    %358 = vector.extract_strided_slice %341 {offsets = [0, 256], sizes = [16, 128], strides = [1, 1]} : vector<16x512xf32> to vector<16x128xf32>
    %359 = math.tanh %358 : vector<16x128xf32>
    %360 = vector.extract_strided_slice %341 {offsets = [0, 384], sizes = [16, 128], strides = [1, 1]} : vector<16x512xf32> to vector<16x128xf32>
    %cst_115 = arith.constant 5.000000e-01 : f32
    %361 = vector.broadcast %cst_115 : f32 to vector<16x128xf32>
    %362 = arith.mulf %361, %360 : vector<16x128xf32>
    %363 = math.tanh %362 : vector<16x128xf32>
    %cst_116 = arith.constant 1.000000e+00 : f32
    %364 = vector.broadcast %cst_116 : f32 to vector<16x128xf32>
    %365 = arith.addf %363, %364 : vector<16x128xf32>
    %cst_117 = arith.constant 5.000000e-01 : f32
    %366 = vector.broadcast %cst_117 : f32 to vector<16x128xf32>
    %367 = arith.mulf %366, %365 : vector<16x128xf32>
    %368 = arith.mulf %357, %289 : vector<16x128xf32>
    %369 = arith.mulf %349, %359 : vector<16x128xf32>
    %370 = arith.addf %368, %369 : vector<16x128xf32>
    %371 = math.tanh %370 : vector<16x128xf32>
    %372 = arith.mulf %367, %371 : vector<16x128xf32>
    %373 = vector.broadcast %335 : i32 to vector<16x1xi32>
    %374 = arith.cmpi slt, %373, %0 : vector<16x1xi32>
    %375 = vector.shape_cast %374 : vector<16x1xi1> to vector<16x1xi1>
    %376 = vector.broadcast %375 : vector<16x1xi1> to vector<16x128xi1>
    %377 = arith.select %376, %372, %286 : vector<16x128xi1>, vector<16x128xf32>
    %378 = vector.shape_cast %374 : vector<16x1xi1> to vector<16x1xi1>
    %379 = vector.broadcast %378 : vector<16x1xi1> to vector<16x128xi1>
    %380 = arith.select %379, %370, %289 : vector<16x128xi1>, vector<16x128xf32>
    %c4_i32 = arith.constant 4 : i32
    %381 = arith.truncf %331 : vector<16x128xf32> to vector<16x128xbf16>
    %cst_118 = arith.constant dense<0.000000e+00> : vector<16x512xf32>
    %382 = tpu.matmul %381, %1, %cst_118 {dimension_numbers = #tpu.dot_dimension_numbers<[1], [0], [0], [1], [0, 0, 1, 1], [], []>} : vector<16x128xbf16>, vector<128x512xbf16>, vector<16x512xf32> -> vector<16x512xf32>
    %383 = arith.index_cast %c4_i32 : i32 to index
    %c0_119 = arith.constant 0 : index
    %c0_120 = arith.constant 0 : index
    %384 = vector.load %arg8[%383, %c0_119, %c0_120] : memref<6x16x512xf32, #tpu.memory_space<vmem>>, vector<1x16x512xf32>
    %385 = vector.shape_cast %384 : vector<1x16x512xf32> to vector<16x512xf32>
    %386 = arith.addf %382, %385 : vector<16x512xf32>
    %387 = vector.extract_strided_slice %386 {offsets = [0, 0], sizes = [16, 128], strides = [1, 1]} : vector<16x512xf32> to vector<16x128xf32>
    %cst_121 = arith.constant 5.000000e-01 : f32
    %388 = vector.broadcast %cst_121 : f32 to vector<16x128xf32>
    %389 = arith.mulf %388, %387 : vector<16x128xf32>
    %390 = math.tanh %389 : vector<16x128xf32>
    %cst_122 = arith.constant 1.000000e+00 : f32
    %391 = vector.broadcast %cst_122 : f32 to vector<16x128xf32>
    %392 = arith.addf %390, %391 : vector<16x128xf32>
    %cst_123 = arith.constant 5.000000e-01 : f32
    %393 = vector.broadcast %cst_123 : f32 to vector<16x128xf32>
    %394 = arith.mulf %393, %392 : vector<16x128xf32>
    %395 = vector.extract_strided_slice %386 {offsets = [0, 128], sizes = [16, 128], strides = [1, 1]} : vector<16x512xf32> to vector<16x128xf32>
    %cst_124 = arith.constant 5.000000e-01 : f32
    %396 = vector.broadcast %cst_124 : f32 to vector<16x128xf32>
    %397 = arith.mulf %396, %395 : vector<16x128xf32>
    %398 = math.tanh %397 : vector<16x128xf32>
    %cst_125 = arith.constant 1.000000e+00 : f32
    %399 = vector.broadcast %cst_125 : f32 to vector<16x128xf32>
    %400 = arith.addf %398, %399 : vector<16x128xf32>
    %cst_126 = arith.constant 5.000000e-01 : f32
    %401 = vector.broadcast %cst_126 : f32 to vector<16x128xf32>
    %402 = arith.mulf %401, %400 : vector<16x128xf32>
    %403 = vector.extract_strided_slice %386 {offsets = [0, 256], sizes = [16, 128], strides = [1, 1]} : vector<16x512xf32> to vector<16x128xf32>
    %404 = math.tanh %403 : vector<16x128xf32>
    %405 = vector.extract_strided_slice %386 {offsets = [0, 384], sizes = [16, 128], strides = [1, 1]} : vector<16x512xf32> to vector<16x128xf32>
    %cst_127 = arith.constant 5.000000e-01 : f32
    %406 = vector.broadcast %cst_127 : f32 to vector<16x128xf32>
    %407 = arith.mulf %406, %405 : vector<16x128xf32>
    %408 = math.tanh %407 : vector<16x128xf32>
    %cst_128 = arith.constant 1.000000e+00 : f32
    %409 = vector.broadcast %cst_128 : f32 to vector<16x128xf32>
    %410 = arith.addf %408, %409 : vector<16x128xf32>
    %cst_129 = arith.constant 5.000000e-01 : f32
    %411 = vector.broadcast %cst_129 : f32 to vector<16x128xf32>
    %412 = arith.mulf %411, %410 : vector<16x128xf32>
    %413 = arith.mulf %402, %334 : vector<16x128xf32>
    %414 = arith.mulf %394, %404 : vector<16x128xf32>
    %415 = arith.addf %413, %414 : vector<16x128xf32>
    %416 = math.tanh %415 : vector<16x128xf32>
    %417 = arith.mulf %412, %416 : vector<16x128xf32>
    %418 = vector.broadcast %c4_i32 : i32 to vector<16x1xi32>
    %419 = arith.cmpi slt, %418, %0 : vector<16x1xi32>
    %420 = vector.shape_cast %419 : vector<16x1xi1> to vector<16x1xi1>
    %421 = vector.broadcast %420 : vector<16x1xi1> to vector<16x128xi1>
    %422 = arith.select %421, %417, %331 : vector<16x128xi1>, vector<16x128xf32>
    %423 = vector.shape_cast %419 : vector<16x1xi1> to vector<16x1xi1>
    %424 = vector.broadcast %423 : vector<16x1xi1> to vector<16x128xi1>
    %425 = arith.select %424, %415, %334 : vector<16x128xi1>, vector<16x128xf32>
    %c5_i32_130 = arith.constant 5 : i32
    %426 = arith.subi %c5_i32_130, %c4_i32 : i32
    %427 = arith.truncf %377 : vector<16x128xf32> to vector<16x128xbf16>
    %cst_131 = arith.constant dense<0.000000e+00> : vector<16x512xf32>
    %428 = tpu.matmul %427, %2, %cst_131 {dimension_numbers = #tpu.dot_dimension_numbers<[1], [0], [0], [1], [0, 0, 1, 1], [], []>} : vector<16x128xbf16>, vector<128x512xbf16>, vector<16x512xf32> -> vector<16x512xf32>
    %429 = arith.index_cast %426 : i32 to index
    %c0_132 = arith.constant 0 : index
    %c0_133 = arith.constant 0 : index
    %430 = vector.load %arg9[%429, %c0_132, %c0_133] : memref<6x16x512xf32, #tpu.memory_space<vmem>>, vector<1x16x512xf32>
    %431 = vector.shape_cast %430 : vector<1x16x512xf32> to vector<16x512xf32>
    %432 = arith.addf %428, %431 : vector<16x512xf32>
    %433 = vector.extract_strided_slice %432 {offsets = [0, 0], sizes = [16, 128], strides = [1, 1]} : vector<16x512xf32> to vector<16x128xf32>
    %cst_134 = arith.constant 5.000000e-01 : f32
    %434 = vector.broadcast %cst_134 : f32 to vector<16x128xf32>
    %435 = arith.mulf %434, %433 : vector<16x128xf32>
    %436 = math.tanh %435 : vector<16x128xf32>
    %cst_135 = arith.constant 1.000000e+00 : f32
    %437 = vector.broadcast %cst_135 : f32 to vector<16x128xf32>
    %438 = arith.addf %436, %437 : vector<16x128xf32>
    %cst_136 = arith.constant 5.000000e-01 : f32
    %439 = vector.broadcast %cst_136 : f32 to vector<16x128xf32>
    %440 = arith.mulf %439, %438 : vector<16x128xf32>
    %441 = vector.extract_strided_slice %432 {offsets = [0, 128], sizes = [16, 128], strides = [1, 1]} : vector<16x512xf32> to vector<16x128xf32>
    %cst_137 = arith.constant 5.000000e-01 : f32
    %442 = vector.broadcast %cst_137 : f32 to vector<16x128xf32>
    %443 = arith.mulf %442, %441 : vector<16x128xf32>
    %444 = math.tanh %443 : vector<16x128xf32>
    %cst_138 = arith.constant 1.000000e+00 : f32
    %445 = vector.broadcast %cst_138 : f32 to vector<16x128xf32>
    %446 = arith.addf %444, %445 : vector<16x128xf32>
    %cst_139 = arith.constant 5.000000e-01 : f32
    %447 = vector.broadcast %cst_139 : f32 to vector<16x128xf32>
    %448 = arith.mulf %447, %446 : vector<16x128xf32>
    %449 = vector.extract_strided_slice %432 {offsets = [0, 256], sizes = [16, 128], strides = [1, 1]} : vector<16x512xf32> to vector<16x128xf32>
    %450 = math.tanh %449 : vector<16x128xf32>
    %451 = vector.extract_strided_slice %432 {offsets = [0, 384], sizes = [16, 128], strides = [1, 1]} : vector<16x512xf32> to vector<16x128xf32>
    %cst_140 = arith.constant 5.000000e-01 : f32
    %452 = vector.broadcast %cst_140 : f32 to vector<16x128xf32>
    %453 = arith.mulf %452, %451 : vector<16x128xf32>
    %454 = math.tanh %453 : vector<16x128xf32>
    %cst_141 = arith.constant 1.000000e+00 : f32
    %455 = vector.broadcast %cst_141 : f32 to vector<16x128xf32>
    %456 = arith.addf %454, %455 : vector<16x128xf32>
    %cst_142 = arith.constant 5.000000e-01 : f32
    %457 = vector.broadcast %cst_142 : f32 to vector<16x128xf32>
    %458 = arith.mulf %457, %456 : vector<16x128xf32>
    %459 = arith.mulf %448, %380 : vector<16x128xf32>
    %460 = arith.mulf %440, %450 : vector<16x128xf32>
    %461 = arith.addf %459, %460 : vector<16x128xf32>
    %462 = math.tanh %461 : vector<16x128xf32>
    %463 = arith.mulf %458, %462 : vector<16x128xf32>
    %464 = vector.broadcast %426 : i32 to vector<16x1xi32>
    %465 = arith.cmpi slt, %464, %0 : vector<16x1xi32>
    %466 = vector.shape_cast %465 : vector<16x1xi1> to vector<16x1xi1>
    %467 = vector.broadcast %466 : vector<16x1xi1> to vector<16x128xi1>
    %468 = arith.select %467, %463, %377 : vector<16x128xi1>, vector<16x128xf32>
    %469 = vector.shape_cast %465 : vector<16x1xi1> to vector<16x1xi1>
    %470 = vector.broadcast %469 : vector<16x1xi1> to vector<16x128xi1>
    %471 = arith.select %470, %461, %380 : vector<16x128xi1>, vector<16x128xf32>
    %c5_i32_143 = arith.constant 5 : i32
    %472 = arith.truncf %422 : vector<16x128xf32> to vector<16x128xbf16>
    %cst_144 = arith.constant dense<0.000000e+00> : vector<16x512xf32>
    %473 = tpu.matmul %472, %1, %cst_144 {dimension_numbers = #tpu.dot_dimension_numbers<[1], [0], [0], [1], [0, 0, 1, 1], [], []>} : vector<16x128xbf16>, vector<128x512xbf16>, vector<16x512xf32> -> vector<16x512xf32>
    %474 = arith.index_cast %c5_i32_143 : i32 to index
    %c0_145 = arith.constant 0 : index
    %c0_146 = arith.constant 0 : index
    %475 = vector.load %arg8[%474, %c0_145, %c0_146] : memref<6x16x512xf32, #tpu.memory_space<vmem>>, vector<1x16x512xf32>
    %476 = vector.shape_cast %475 : vector<1x16x512xf32> to vector<16x512xf32>
    %477 = arith.addf %473, %476 : vector<16x512xf32>
    %478 = vector.extract_strided_slice %477 {offsets = [0, 0], sizes = [16, 128], strides = [1, 1]} : vector<16x512xf32> to vector<16x128xf32>
    %cst_147 = arith.constant 5.000000e-01 : f32
    %479 = vector.broadcast %cst_147 : f32 to vector<16x128xf32>
    %480 = arith.mulf %479, %478 : vector<16x128xf32>
    %481 = math.tanh %480 : vector<16x128xf32>
    %cst_148 = arith.constant 1.000000e+00 : f32
    %482 = vector.broadcast %cst_148 : f32 to vector<16x128xf32>
    %483 = arith.addf %481, %482 : vector<16x128xf32>
    %cst_149 = arith.constant 5.000000e-01 : f32
    %484 = vector.broadcast %cst_149 : f32 to vector<16x128xf32>
    %485 = arith.mulf %484, %483 : vector<16x128xf32>
    %486 = vector.extract_strided_slice %477 {offsets = [0, 128], sizes = [16, 128], strides = [1, 1]} : vector<16x512xf32> to vector<16x128xf32>
    %cst_150 = arith.constant 5.000000e-01 : f32
    %487 = vector.broadcast %cst_150 : f32 to vector<16x128xf32>
    %488 = arith.mulf %487, %486 : vector<16x128xf32>
    %489 = math.tanh %488 : vector<16x128xf32>
    %cst_151 = arith.constant 1.000000e+00 : f32
    %490 = vector.broadcast %cst_151 : f32 to vector<16x128xf32>
    %491 = arith.addf %489, %490 : vector<16x128xf32>
    %cst_152 = arith.constant 5.000000e-01 : f32
    %492 = vector.broadcast %cst_152 : f32 to vector<16x128xf32>
    %493 = arith.mulf %492, %491 : vector<16x128xf32>
    %494 = vector.extract_strided_slice %477 {offsets = [0, 256], sizes = [16, 128], strides = [1, 1]} : vector<16x512xf32> to vector<16x128xf32>
    %495 = math.tanh %494 : vector<16x128xf32>
    %496 = vector.extract_strided_slice %477 {offsets = [0, 384], sizes = [16, 128], strides = [1, 1]} : vector<16x512xf32> to vector<16x128xf32>
    %cst_153 = arith.constant 5.000000e-01 : f32
    %497 = vector.broadcast %cst_153 : f32 to vector<16x128xf32>
    %498 = arith.mulf %497, %496 : vector<16x128xf32>
    %499 = math.tanh %498 : vector<16x128xf32>
    %cst_154 = arith.constant 1.000000e+00 : f32
    %500 = vector.broadcast %cst_154 : f32 to vector<16x128xf32>
    %501 = arith.addf %499, %500 : vector<16x128xf32>
    %cst_155 = arith.constant 5.000000e-01 : f32
    %502 = vector.broadcast %cst_155 : f32 to vector<16x128xf32>
    %503 = arith.mulf %502, %501 : vector<16x128xf32>
    %504 = arith.mulf %493, %425 : vector<16x128xf32>
    %505 = arith.mulf %485, %495 : vector<16x128xf32>
    %506 = arith.addf %504, %505 : vector<16x128xf32>
    %507 = math.tanh %506 : vector<16x128xf32>
    %508 = arith.mulf %503, %507 : vector<16x128xf32>
    %509 = vector.broadcast %c5_i32_143 : i32 to vector<16x1xi32>
    %510 = arith.cmpi slt, %509, %0 : vector<16x1xi32>
    %511 = vector.shape_cast %510 : vector<16x1xi1> to vector<16x1xi1>
    %512 = vector.broadcast %511 : vector<16x1xi1> to vector<16x128xi1>
    %513 = arith.select %512, %508, %422 : vector<16x128xi1>, vector<16x128xf32>
    %514 = vector.shape_cast %510 : vector<16x1xi1> to vector<16x1xi1>
    %515 = vector.broadcast %514 : vector<16x1xi1> to vector<16x128xi1>
    %516 = arith.select %515, %506, %425 : vector<16x128xi1>, vector<16x128xf32>
    %c5_i32_156 = arith.constant 5 : i32
    %517 = arith.subi %c5_i32_156, %c5_i32_143 : i32
    %518 = arith.truncf %468 : vector<16x128xf32> to vector<16x128xbf16>
    %cst_157 = arith.constant dense<0.000000e+00> : vector<16x512xf32>
    %519 = tpu.matmul %518, %2, %cst_157 {dimension_numbers = #tpu.dot_dimension_numbers<[1], [0], [0], [1], [0, 0, 1, 1], [], []>} : vector<16x128xbf16>, vector<128x512xbf16>, vector<16x512xf32> -> vector<16x512xf32>
    %520 = arith.index_cast %517 : i32 to index
    %c0_158 = arith.constant 0 : index
    %c0_159 = arith.constant 0 : index
    %521 = vector.load %arg9[%520, %c0_158, %c0_159] : memref<6x16x512xf32, #tpu.memory_space<vmem>>, vector<1x16x512xf32>
    %522 = vector.shape_cast %521 : vector<1x16x512xf32> to vector<16x512xf32>
    %523 = arith.addf %519, %522 : vector<16x512xf32>
    %524 = vector.extract_strided_slice %523 {offsets = [0, 0], sizes = [16, 128], strides = [1, 1]} : vector<16x512xf32> to vector<16x128xf32>
    %cst_160 = arith.constant 5.000000e-01 : f32
    %525 = vector.broadcast %cst_160 : f32 to vector<16x128xf32>
    %526 = arith.mulf %525, %524 : vector<16x128xf32>
    %527 = math.tanh %526 : vector<16x128xf32>
    %cst_161 = arith.constant 1.000000e+00 : f32
    %528 = vector.broadcast %cst_161 : f32 to vector<16x128xf32>
    %529 = arith.addf %527, %528 : vector<16x128xf32>
    %cst_162 = arith.constant 5.000000e-01 : f32
    %530 = vector.broadcast %cst_162 : f32 to vector<16x128xf32>
    %531 = arith.mulf %530, %529 : vector<16x128xf32>
    %532 = vector.extract_strided_slice %523 {offsets = [0, 128], sizes = [16, 128], strides = [1, 1]} : vector<16x512xf32> to vector<16x128xf32>
    %cst_163 = arith.constant 5.000000e-01 : f32
    %533 = vector.broadcast %cst_163 : f32 to vector<16x128xf32>
    %534 = arith.mulf %533, %532 : vector<16x128xf32>
    %535 = math.tanh %534 : vector<16x128xf32>
    %cst_164 = arith.constant 1.000000e+00 : f32
    %536 = vector.broadcast %cst_164 : f32 to vector<16x128xf32>
    %537 = arith.addf %535, %536 : vector<16x128xf32>
    %cst_165 = arith.constant 5.000000e-01 : f32
    %538 = vector.broadcast %cst_165 : f32 to vector<16x128xf32>
    %539 = arith.mulf %538, %537 : vector<16x128xf32>
    %540 = vector.extract_strided_slice %523 {offsets = [0, 256], sizes = [16, 128], strides = [1, 1]} : vector<16x512xf32> to vector<16x128xf32>
    %541 = math.tanh %540 : vector<16x128xf32>
    %542 = vector.extract_strided_slice %523 {offsets = [0, 384], sizes = [16, 128], strides = [1, 1]} : vector<16x512xf32> to vector<16x128xf32>
    %cst_166 = arith.constant 5.000000e-01 : f32
    %543 = vector.broadcast %cst_166 : f32 to vector<16x128xf32>
    %544 = arith.mulf %543, %542 : vector<16x128xf32>
    %545 = math.tanh %544 : vector<16x128xf32>
    %cst_167 = arith.constant 1.000000e+00 : f32
    %546 = vector.broadcast %cst_167 : f32 to vector<16x128xf32>
    %547 = arith.addf %545, %546 : vector<16x128xf32>
    %cst_168 = arith.constant 5.000000e-01 : f32
    %548 = vector.broadcast %cst_168 : f32 to vector<16x128xf32>
    %549 = arith.mulf %548, %547 : vector<16x128xf32>
    %550 = arith.mulf %539, %471 : vector<16x128xf32>
    %551 = arith.mulf %531, %541 : vector<16x128xf32>
    %552 = arith.addf %550, %551 : vector<16x128xf32>
    %553 = math.tanh %552 : vector<16x128xf32>
    %554 = arith.mulf %549, %553 : vector<16x128xf32>
    %555 = vector.broadcast %517 : i32 to vector<16x1xi32>
    %556 = arith.cmpi slt, %555, %0 : vector<16x1xi32>
    %557 = vector.shape_cast %556 : vector<16x1xi1> to vector<16x1xi1>
    %558 = vector.broadcast %557 : vector<16x1xi1> to vector<16x128xi1>
    %559 = arith.select %558, %554, %468 : vector<16x128xi1>, vector<16x128xf32>
    %560 = vector.shape_cast %556 : vector<16x1xi1> to vector<16x1xi1>
    %561 = vector.broadcast %560 : vector<16x1xi1> to vector<16x128xi1>
    %562 = arith.select %561, %552, %471 : vector<16x128xi1>, vector<16x128xf32>
    %c6_i32 = arith.constant 6 : i32
    %c64_i32 = arith.constant 64 : i32
    %563 = tpu.dynamic_rotate %559 by %c64_i32 dim 1 : vector<16x128xf32>, i32 -> vector<16x128xf32>
    %564 = arith.addf %513, %563 : vector<16x128xf32>
    %565 = arith.truncf %564 : vector<16x128xf32> to vector<16x128xbf16>
    %c0_169 = arith.constant 0 : index
    %c0_170 = arith.constant 0 : index
    %566 = vector.load %arg7[%c0_169, %c0_170] : memref<16x128xbf16, #tpu.memory_space<vmem>>, vector<16x128xbf16>
    tpu.vector_store %arg7[%c0_169, %c0_170], %565 {strides = array<i32>} : memref<16x128xbf16, #tpu.memory_space<vmem>>, vector<16x128xbf16>,
    return
  }
  func.func @transform_0(%arg0: i32) -> (i32, i32, i32) {
    %c0_i32 = arith.constant 0 : i32
    %c0_i32_0 = arith.constant 0 : i32
    %c0_i32_1 = arith.constant 0 : i32
    return %c0_i32, %arg0, %c0_i32_0 : i32, i32, i32
  }
  func.func @transform_1(%arg0: i32) -> (i32, i32) {
    %c0_i32 = arith.constant 0 : i32
    %c0_i32_0 = arith.constant 0 : i32
    return %arg0, %c0_i32 : i32, i32
  }
  func.func @transform_2(%arg0: i32) -> (i32, i32) {
    %c0_i32 = arith.constant 0 : i32
    %c0_i32_0 = arith.constant 0 : i32
    %c0_i32_1 = arith.constant 0 : i32
    return %c0_i32, %c0_i32_0 : i32, i32
  }
  func.func @transform_3(%arg0: i32) -> (i32, i32) {
    %c0_i32 = arith.constant 0 : i32
    %c0_i32_0 = arith.constant 0 : i32
    %c0_i32_1 = arith.constant 0 : i32
    return %c0_i32, %c0_i32_0 : i32, i32
  }
  func.func @transform_4(%arg0: i32) -> (i32, i32) {
    %c0_i32 = arith.constant 0 : i32
    %c0_i32_0 = arith.constant 0 : i32
    %c0_i32_1 = arith.constant 0 : i32
    return %c0_i32, %c0_i32_0 : i32, i32
  }
  func.func @transform_5(%arg0: i32) -> (i32, i32) {
    %c0_i32 = arith.constant 0 : i32
    %c0_i32_0 = arith.constant 0 : i32
    %c0_i32_1 = arith.constant 0 : i32
    return %c0_i32, %c0_i32_0 : i32, i32
  }
  func.func @transform_6(%arg0: i32) -> (i32, i32) {
    %c0_i32 = arith.constant 0 : i32
    %c0_i32_0 = arith.constant 0 : i32
    return %arg0, %c0_i32 : i32, i32
  }
}

</mosaic_0001>

<llo_original>
// kernel: tpu_custom_call.1
$region0: #{tpu_custom_call.1}
  #allocation0 [shape = 'u32[]', space=smem, size = 0x4, offset = 0x4, fixed_abs, tag = 'smem constant byte address 0x4 - core index']
  #allocation1 [shape = 'u32[72,128]{1,0:T(1,128)}', space=vmem, size = 0x9000, scoped, tag = 'internal scratch']
  #allocation2 [shape = 'f32[6,16,512]{2,1,0:T(8,128)}', space=vmem, size = 0x30000, scoped, tag = 'scratch operand']
  #allocation3 [shape = 'f32[6,16,512]{2,1,0:T(8,128)}', space=vmem, size = 0x30000, scoped, tag = 'scratch operand']
  #allocation13 [shape = 's32[]', space=sflag, size = 0x4, offset = 0, fixed_abs, tag = 'sflag constant byte address 0x0 - dummy sync flag']
  %s0 = inlined_call_operand.hbm [shape: bf16[6,32,128], index: 0, kind: input, shape index: {}]
  %s1 = inlined_call_operand.vmem [shape: s32[32,1], index: 1, kind: input, shape index: {}]
  %s2 = inlined_call_operand.hbm [shape: bf16[128,1024], index: 2, kind: input, shape index: {}]
  %s3 = inlined_call_operand.vmem [shape: f32[1,1024], index: 3, kind: input, shape index: {}]
  %s4 = inlined_call_operand.hbm [shape: bf16[128,512], index: 4, kind: input, shape index: {}]
  %s5 = inlined_call_operand.hbm [shape: bf16[128,512], index: 5, kind: input, shape index: {}]
  %s6 = inlined_call_operand.hbm [shape: bf16[32,128], index: 6, kind: output, shape index: {}]
  %s7 = sld [smem:[#allocation0]]
  $region73: #{tpu_custom_call.1} parent=0
    _
  %s9 = ssub.s32 1, %s7
  %s10 = scalar_select 0, %s9, %s7
  $region1: #{tpu_custom_call.1} parent=0
    #allocation4 [shape = 'u8[49152]{0}', space=vmem, size = 0xc000, scoped, tag = 'input window, operand 0']
    #allocation5 [shape = 's32[2]{0}', space=sflag, size = 0x8, scoped, tag = 'scoped memory for tpu_custom_call.1']
    #allocation6 [shape = 's32[2]{0}', space=sflag, size = 0x8, scoped, tag = 'scoped memory for tpu_custom_call.1']
    #allocation7 [shape = 'u8[262144]{0}', space=vmem, size = 0x40000, scoped, tag = 'input window, operand 2, single buffered']
    #allocation8 [shape = 's32[1]{0}', space=sflag, size = 0x4, scoped, tag = 'scoped memory for tpu_custom_call.1']
    #allocation9 [shape = 'u8[131072]{0}', space=vmem, size = 0x20000, scoped, tag = 'input window, operand 4, single buffered']
    #allocation10 [shape = 'u8[131072]{0}', space=vmem, size = 0x20000, scoped, tag = 'input window, operand 5, single buffered']
    #allocation11 [shape = 's32[1]{0}', space=sflag, size = 0x4, scoped, tag = 'scoped memory for tpu_custom_call.1']
    #allocation12 [shape = 'u8[8192]{0}', space=vmem, size = 0x2000, scoped, tag = 'output window, operand 0']
    %11 = vsyncpa [#allocation5], 0
    %s12 = scalar_lea.sflag [#allocation5], 1
    %13 = vsyncpa %s12, 0
    %14 = vsyncpa [#allocation8], 0
    %15 = vsyncpa [#allocation11], 0
    %16 = vsyncpa [#allocation6], 0
    %s17 = scalar_lea.sflag [#allocation6], 1
    %18 = vsyncpa %s17, 0
    loop: start=0, step=1, limit=4
    $region2: #{tpu_custom_call.1} parent=1 // loop_pre_header
      _
    $region3: #{tpu_custom_call.1} parent=1 // loop_header
      %s20 = sphi 0, %s24
      %p21 = scmp.ge.s32.totalorder %s20, 4
      %s30 = sphi 0, %s32
      %s33 = sphi 0, %s30
      %s34 = sphi 0, %s33
      %s50 = sphi 0, %s34
      %s56 = sphi 0, %s58
      %s59 = sphi 0, %s56
      %s60 = sphi 0, %s59
      %s76 = sphi 0, %s60
      %s80 = sphi 0, %s80
      %s82 = sphi 0, %s80
      %s83 = sphi 0, %s82
      %s97 = sphi 0, %s83
      %s101 = sphi 0, %s101
      %s103 = sphi 0, %s101
      %s104 = sphi 0, %s103
      %s118 = sphi 0, %s104
      %s122 = sphi 0, %s122
      %s124 = sphi 0, %s122
      %s125 = sphi 0, %s124
      %s139 = sphi 0, %s125
      %s143 = sphi 0, %s143
      %s145 = sphi 0, %s143
      %s146 = sphi 0, %s145
      %s160 = sphi 0, %s146
      %s166 = sphi 0, %s168
      %s169 = sphi 0, %s166
      %s170 = sphi 0, %s169
      %s186 = sphi 0, %s170
    $region4: #{tpu_custom_call.1} parent=1 // loop_header_branch
      %23 = sbr.rel (%p21) target = $region8
    $region5: #{tpu_custom_call.1} parent=1 // loop_body
      %s25 = ssub.s32 %s20, 1
      %s26 = ssub.s32 %s20, 2
      %s27 = sadd.s32 %s20, 1
      %s28 = ssub.s32 %s20, %s27
      %p29 = scmp.eq.s32.totalorder %s28, 0
      %s31 = sadd.s32 %s30, 1
      %s32 = scalar_select %p29, %s30, %s31
      %p35 = pneg %p29
      %p36 = scmp.eq.s32.totalorder %s20, 1
      %p37 = por %p35, %p36
      %p38 = scmp.ne.s32.totalorder %s30, %s33
      %p39 = scmp.eq.s32.totalorder %s20, 0
      %p40 = por %p38, %p39
      %p41 = scmp.ne.s32.totalorder %s30, %s33
      %p42 = scmp.eq.s32.totalorder %s25, 1
      %p43 = por %p41, %p42
      %p44 = scmp.ne.s32.totalorder %s33, %s34
      %p45 = scmp.eq.s32.totalorder %s25, 0
      %p46 = por %p44, %p45
      %p47 = scmp.ne.s32.totalorder %s33, %s34
      %p48 = scmp.eq.s32.totalorder %s26, 1
      %p49 = por %p47, %p48
      %p51 = scmp.ne.s32.totalorder %s34, %s50
      %p52 = scmp.eq.s32.totalorder %s26, 0
      %p53 = por %p51, %p52
      %s54 = ssub.s32 %s20, %s27
      %p55 = scmp.eq.s32.totalorder %s54, 0
      %s57 = sadd.s32 %s56, 1
      %s58 = scalar_select %p55, %s56, %s57
      %p61 = pneg %p55
      %p62 = scmp.eq.s32.totalorder %s20, 1
      %p63 = por %p61, %p62
      %p64 = scmp.ne.s32.totalorder %s56, %s59
      %p65 = scmp.eq.s32.totalorder %s20, 0
      %p66 = por %p64, %p65
      %p67 = scmp.ne.s32.totalorder %s56, %s59
      %p68 = scmp.eq.s32.totalorder %s25, 1
      %p69 = por %p67, %p68
      %p70 = scmp.ne.s32.totalorder %s59, %s60
      %p71 = scmp.eq.s32.totalorder %s25, 0
      %p72 = por %p70, %p71
      %p73 = scmp.ne.s32.totalorder %s59, %s60
      %p74 = scmp.eq.s32.totalorder %s26, 1
      %p75 = por %p73, %p74
      %p77 = scmp.ne.s32.totalorder %s60, %s76
      %p78 = scmp.eq.s32.totalorder %s26, 0
      %p79 = por %p77, %p78
      %s81 = sadd.s32 %s80, 1
      %p84 = scmp.eq.s32.totalorder %s20, 1
      %p85 = scmp.ne.s32.totalorder %s80, %s82
      %p86 = scmp.eq.s32.totalorder %s20, 0
      %p87 = por %p85, %p86
      %p88 = scmp.ne.s32.totalorder %s80, %s82
      %p89 = scmp.eq.s32.totalorder %s25, 1
      %p90 = por %p88, %p89
      %p91 = scmp.ne.s32.totalorder %s82, %s83
      %p92 = scmp.eq.s32.totalorder %s25, 0
      %p93 = por %p91, %p92
      %p94 = scmp.ne.s32.totalorder %s82, %s83
      %p95 = scmp.eq.s32.totalorder %s26, 1
      %p96 = por %p94, %p95
      %p98 = scmp.ne.s32.totalorder %s83, %s97
      %p99 = scmp.eq.s32.totalorder %s26, 0
      %p100 = por %p98, %p99
      %s102 = sadd.s32 %s101, 1
      %p105 = scmp.eq.s32.totalorder %s20, 1
      %p106 = scmp.ne.s32.totalorder %s101, %s103
      %p107 = scmp.eq.s32.totalorder %s20, 0
      %p108 = por %p106, %p107
      %p109 = scmp.ne.s32.totalorder %s101, %s103
      %p110 = scmp.eq.s32.totalorder %s25, 1
      %p111 = por %p109, %p110
      %p112 = scmp.ne.s32.totalorder %s103, %s104
      %p113 = scmp.eq.s32.totalorder %s25, 0
      %p114 = por %p112, %p113
      %p115 = scmp.ne.s32.totalorder %s103, %s104
      %p116 = scmp.eq.s32.totalorder %s26, 1
      %p117 = por %p115, %p116
      %p119 = scmp.ne.s32.totalorder %s104, %s118
      %p120 = scmp.eq.s32.totalorder %s26, 0
      %p121 = por %p119, %p120
      %s123 = sadd.s32 %s122, 1
      %p126 = scmp.eq.s32.totalorder %s20, 1
      %p127 = scmp.ne.s32.totalorder %s122, %s124
      %p128 = scmp.eq.s32.totalorder %s20, 0
      %p129 = por %p127, %p128
      %p130 = scmp.ne.s32.totalorder %s122, %s124
      %p131 = scmp.eq.s32.totalorder %s25, 1
      %p132 = por %p130, %p131
      %p133 = scmp.ne.s32.totalorder %s124, %s125
      %p134 = scmp.eq.s32.totalorder %s25, 0
      %p135 = por %p133, %p134
      %p136 = scmp.ne.s32.totalorder %s124, %s125
      %p137 = scmp.eq.s32.totalorder %s26, 1
      %p138 = por %p136, %p137
      %p140 = scmp.ne.s32.totalorder %s125, %s139
      %p141 = scmp.eq.s32.totalorder %s26, 0
      %p142 = por %p140, %p141
      %s144 = sadd.s32 %s143, 1
      %p147 = scmp.eq.s32.totalorder %s20, 1
      %p148 = scmp.ne.s32.totalorder %s143, %s145
      %p149 = scmp.eq.s32.totalorder %s20, 0
      %p150 = por %p148, %p149
      %p151 = scmp.ne.s32.totalorder %s143, %s145
      %p152 = scmp.eq.s32.totalorder %s25, 1
      %p153 = por %p151, %p152
      %p154 = scmp.ne.s32.totalorder %s145, %s146
      %p155 = scmp.eq.s32.totalorder %s25, 0
      %p156 = por %p154, %p155
      %p157 = scmp.ne.s32.totalorder %s145, %s146
      %p158 = scmp.eq.s32.totalorder %s26, 1
      %p159 = por %p157, %p158
      %p161 = scmp.ne.s32.totalorder %s146, %s160
      %p162 = scmp.eq.s32.totalorder %s26, 0
      %p163 = por %p161, %p162
      %s164 = ssub.s32 %s20, %s27
      %p165 = scmp.eq.s32.totalorder %s164, 0
      %s167 = sadd.s32 %s166, 1
      %s168 = scalar_select %p165, %s166, %s167
      %p171 = pneg %p165
      %p172 = scmp.eq.s32.totalorder %s20, 1
      %p173 = por %p171, %p172
      %p174 = scmp.ne.s32.totalorder %s166, %s169
      %p175 = scmp.eq.s32.totalorder %s20, 0
      %p176 = por %p174, %p175
      %p177 = scmp.ne.s32.totalorder %s166, %s169
      %p178 = scmp.eq.s32.totalorder %s25, 1
      %p179 = por %p177, %p178
      %p180 = scmp.ne.s32.totalorder %s169, %s170
      %p181 = scmp.eq.s32.totalorder %s25, 0
      %p182 = por %p180, %p181
      %p183 = scmp.ne.s32.totalorder %s169, %s170
      %p184 = scmp.eq.s32.totalorder %s26, 1
      %p185 = por %p183, %p184
      %p187 = scmp.ne.s32.totalorder %s170, %s186
      %p188 = scmp.eq.s32.totalorder %s26, 0
      %p189 = por %p187, %p188
      %p190 = scmp.le.s32.totalorder 1, %s20
      %p191 = scmp.lt.s32.totalorder %s20, 3
      %p192 = pnand %p190, %p191
      %p193 = pneg %p192
      // Predicated region
      $region9: #{tpu_custom_call.1} parent=5 // pred_check
        _
      $region10: #{tpu_custom_call.1} parent=5 // pred_check_branch
        %195 = sbr.rel (%p192) target = $region12
      $region11: #{tpu_custom_call.1} parent=5 // pred_region
        %s196 = ssub.s32 %s20, 1
        // Predicated region
        $region13: #{tpu_custom_call.1} parent=11 // pred_check
          %p197 = pneg %p93
        $region14: #{tpu_custom_call.1} parent=11 // pred_check_branch
          %199 = sbr.rel (%p197) target = $region16
        $region15: #{tpu_custom_call.1} parent=11 // pred_region
          %201 = vsyncadd [#allocation8], 0
          %s202 = sshll.u32 %s2, 4
          %s203 = int_to_ptr.hbm [resolvable:$true] %s202
          %s204 = sshll.u32 [#allocation7], 4
          %s205 = int_to_ptr.vmem [resolvable:$true] %s204
          %210 = dma.hbm_to_vmem [thread:$0]  %s203, 8192, %s205, [#allocation8], 512, 512, 32
        $region16: #{tpu_custom_call.1} parent=11 // pred_fallthru
          _
        // Predicated region
        $region17: #{tpu_custom_call.1} parent=11 // pred_check
          %p211 = pneg %p114
        $region18: #{tpu_custom_call.1} parent=11 // pred_check_branch
          %213 = sbr.rel (%p211) target = $region20
        $region19: #{tpu_custom_call.1} parent=11 // pred_region
          _
        $region20: #{tpu_custom_call.1} parent=11 // pred_fallthru
          _
        // Predicated region
        $region21: #{tpu_custom_call.1} parent=11 // pred_check
          %p214 = pneg %p135
        $region22: #{tpu_custom_call.1} parent=11 // pred_check_branch
          %216 = sbr.rel (%p214) target = $region24
        $region23: #{tpu_custom_call.1} parent=11 // pred_region
          %218 = vsyncadd [#allocation8], 0
          %s219 = sshll.u32 %s4, 4
          %s220 = int_to_ptr.hbm [resolvable:$true] %s219
          %s221 = sshll.u32 [#allocation9], 4
          %s222 = int_to_ptr.vmem [resolvable:$true] %s221
          %227 = dma.hbm_to_vmem [thread:$0]  %s220, 4096, %s222, [#allocation8], 256, 256, 16
        $region24: #{tpu_custom_call.1} parent=11 // pred_fallthru
          _
        // Predicated region
        $region25: #{tpu_custom_call.1} parent=11 // pred_check
          %p228 = pneg %p156
        $region26: #{tpu_custom_call.1} parent=11 // pred_check_branch
          %230 = sbr.rel (%p228) target = $region28
        $region27: #{tpu_custom_call.1} parent=11 // pred_region
          %232 = vsyncadd [#allocation11], 0
          %s233 = sshll.u32 %s5, 4
          %s234 = int_to_ptr.hbm [resolvable:$true] %s233
          %s235 = sshll.u32 [#allocation10], 4
          %s236 = int_to_ptr.vmem [resolvable:$true] %s235
          %241 = dma.hbm_to_vmem [thread:$0]  %s234, 4096, %s236, [#allocation11], 256, 256, 16
        $region28: #{tpu_custom_call.1} parent=11 // pred_fallthru
          _
      $region12: #{tpu_custom_call.1} parent=5 // pred_fallthru
        _
      %p242 = scmp.lt.s32.totalorder %s20, 2
      // Predicated region
      $region29: #{tpu_custom_call.1} parent=5 // pred_check
        %p243 = pneg %p242
      $region30: #{tpu_custom_call.1} parent=5 // pred_check_branch
        %245 = sbr.rel (%p243) target = $region32
      $region31: #{tpu_custom_call.1} parent=5 // pred_region
        // Predicated region
        $region33: #{tpu_custom_call.1} parent=31 // pred_check
          %p246 = pneg %p40
        $region34: #{tpu_custom_call.1} parent=31 // pred_check_branch
          %248 = sbr.rel (%p246) target = $region36
        $region35: #{tpu_custom_call.1} parent=31 // pred_region
          #allocation14 [shape = 'u32[6]{0}', space=smem, size = 0x18, scoped, tag = 'DMA stride descriptor']
          %s249 = sand.u32 %s30, 1
          %s250 = scalar_lea.sflag [#allocation5], %s249
          %s251 = sand.u32 %s30, 1
          %s252 = smul.addr %s251, 48
          %s253 = scalar_lea.vmem [#allocation4], %s252
          %s254 = smul.u32 2, %s20
          %256 = vsyncadd %s250, 0
          %s257 = smul.addr %s254, 4
          %s258 = scalar_lea.hbm %s0, %s257
          %s260 = sshll.u32 1, 14
          %s261 = sxor.u32 4294967295, %s260
          %s263 = sld [smem:[#allocation0]]
          %s264 = sadd.s32 2, %s263
          %s266 = sshll.u32 7, 26
          %s267 = sxor.u32 4294967295, %s266
          %s268 = sand.u32 0, %s267
          %s269 = sshll.u32 %s264, 26
          %s270 = sor.u32 %s268, %s269
          %s271 = sshll.u32 %s258, 4
          %s272 = int_to_ptr.hbm [resolvable:$true] %s271
          %s273 = sshll.u32 %s253, 4
          %s274 = int_to_ptr.vmem [resolvable:$true] %s273
          %280 = sst [smem:[#allocation14]] 256
          %s281 = scalar_lea.smem [#allocation14], 1
          %282 = sst [smem:[%s281]] 128
          %s283 = scalar_lea.smem [#allocation14], 2
          %284 = sst [smem:[%s283]] 2
          %s285 = scalar_lea.smem [#allocation14], 3
          %286 = sst [smem:[%s285]] 64
          %s287 = scalar_lea.smem [#allocation14], 4
          %288 = sst [smem:[%s287]] 64
          %s289 = scalar_lea.smem [#allocation14], 5
          %290 = sst [smem:[%s289]] 4
          %292 = dma.general %s272, 768, %s274, %s250, [#allocation13], [#allocation14], %s270, 0
        $region36: #{tpu_custom_call.1} parent=31 // pred_fallthru
          _
        // Predicated region
        $region37: #{tpu_custom_call.1} parent=31 // pred_check
          %p293 = pneg %p66
        $region38: #{tpu_custom_call.1} parent=31 // pred_check_branch
          %295 = sbr.rel (%p293) target = $region40
        $region39: #{tpu_custom_call.1} parent=31 // pred_region
          %s296 = smul.u32 2, %s20
          %p297 = scmp.lt.s32.totalorder %s296, 3
          %s298 = scalar_select %p297, %s296, 3
          %s299 = smul.addr %s298, 8
          %s300 = scalar_lea.vmem %s1, %s299
          %s301 = smul.u32 2, %s20
        $region40: #{tpu_custom_call.1} parent=31 // pred_fallthru
          _
      $region32: #{tpu_custom_call.1} parent=5 // pred_fallthru
        _
      %p302 = scmp.le.s32.totalorder 1, %s20
      %p303 = scmp.lt.s32.totalorder %s20, 3
      %p304 = pnand %p302, %p303
      %p305 = pneg %p304
      // Predicated region
      $region41: #{tpu_custom_call.1} parent=5 // pred_check
        _
      $region42: #{tpu_custom_call.1} parent=5 // pred_check_branch
        %307 = sbr.rel (%p304) target = $region44
      $region43: #{tpu_custom_call.1} parent=5 // pred_region
        %s308 = ssub.s32 %s20, 1
        %s309 = sand.u32 %s33, 1
        %s310 = scalar_lea.sflag [#allocation5], %s309
        %s311 = sand.u32 %s33, 1
        %s312 = smul.addr %s311, 48
        %s313 = scalar_lea.vmem [#allocation4], %s312
        // Predicated region
        $region45: #{tpu_custom_call.1} parent=43 // pred_check
          %p314 = pneg %p46
        $region46: #{tpu_custom_call.1} parent=43 // pred_check_branch
          %316 = sbr.rel (%p314) target = $region48
        $region47: #{tpu_custom_call.1} parent=43 // pred_region
          %318 = dma.done %s310, 768
        $region48: #{tpu_custom_call.1} parent=43 // pred_fallthru
          _
        // Predicated region
        $region49: #{tpu_custom_call.1} parent=43 // pred_check
          %p319 = pneg %p93
        $region50: #{tpu_custom_call.1} parent=43 // pred_check_branch
          %321 = sbr.rel (%p319) target = $region52
        $region51: #{tpu_custom_call.1} parent=43 // pred_region
          %323 = dma.done [#allocation8], 8192
        $region52: #{tpu_custom_call.1} parent=43 // pred_fallthru
          _
        // Predicated region
        $region53: #{tpu_custom_call.1} parent=43 // pred_check
          %p324 = pneg %p135
        $region54: #{tpu_custom_call.1} parent=43 // pred_check_branch
          %326 = sbr.rel (%p324) target = $region56
        $region55: #{tpu_custom_call.1} parent=43 // pred_region
          %328 = dma.done [#allocation8], 4096
        $region56: #{tpu_custom_call.1} parent=43 // pred_fallthru
          _
        // Predicated region
        $region57: #{tpu_custom_call.1} parent=43 // pred_check
          %p329 = pneg %p156
        $region58: #{tpu_custom_call.1} parent=43 // pred_check_branch
          %331 = sbr.rel (%p329) target = $region60
        $region59: #{tpu_custom_call.1} parent=43 // pred_region
          %333 = dma.done [#allocation11], 4096
        $region60: #{tpu_custom_call.1} parent=43 // pred_fallthru
          _
        %s334 = sand.u32 %s33, 1
        %s335 = scalar_lea.sflag [#allocation5], %s334
        %s336 = sand.u32 %s33, 1
        %s337 = smul.addr %s336, 48
        %s338 = scalar_lea.vmem [#allocation4], %s337
        %p339 = pneg %p46
        %p340 = pneg %p43
        %s341 = smul.u32 2, %s25
        %p342 = scmp.lt.s32.totalorder %s341, 3
        %s343 = scalar_select %p342, %s341, 3
        %s344 = smul.addr %s343, 8
        %s345 = scalar_lea.vmem %s1, %s344
        %p346 = pneg %p72
        %p347 = pneg %p69
        %p348 = pneg %p93
        %p349 = pneg %p90
        %p350 = pneg %p114
        %p351 = pneg %p111
        %p352 = pneg %p135
        %p353 = pneg %p132
        %p354 = pneg %p156
        %p355 = pneg %p153
        %p356 = pneg %p182
        %p357 = pneg %p179
        %s358 = sand.u32 %s169, 1
        %s359 = scalar_lea.sflag [#allocation6], %s358
        %s360 = sand.u32 %s169, 1
        %s361 = smul.addr %s360, 8
        %s362 = scalar_lea.vmem [#allocation12], %s361
        %s363 = smul.u32 2, %s25
        %s364 = smul.u32 2, %s25
        %p365 = scmp.lt.s32.totalorder %s364, 3
        %s366 = scalar_select %p365, %s364, 3
        %s367 = smul.addr %s366, 8
        %s368 = scalar_lea.vmem %s1, %s367
        %s369 = smul.u32 2, %s25
        %s370 = smul.u32 2, %s25
        %v372 = vld [vmem:[%s368] sm:$0xff]
        %v373 = vld [vmem:[%s368 + $0x8] sm:$0xff]
        %v374 = vld [vmem:[#allocation9] sm:$0xff]
        %v375 = vld [vmem:[#allocation9 + $0x8] sm:$0xff]
        %v376 = vld [vmem:[#allocation9 + $0x10] sm:$0xff]
        %v377 = vld [vmem:[#allocation9 + $0x18] sm:$0xff]
        %v378 = vld [vmem:[#allocation9 + $0x20] sm:$0xff]
        %v379 = vld [vmem:[#allocation9 + $0x28] sm:$0xff]
        %v380 = vld [vmem:[#allocation9 + $0x30] sm:$0xff]
        %v381 = vld [vmem:[#allocation9 + $0x38] sm:$0xff]
        %v382 = vld [vmem:[#allocation9 + $0x40] sm:$0xff]
        %v383 = vld [vmem:[#allocation9 + $0x48] sm:$0xff]
        %v384 = vld [vmem:[#allocation9 + $0x50] sm:$0xff]
        %v385 = vld [vmem:[#allocation9 + $0x58] sm:$0xff]
        %v386 = vld [vmem:[#allocation9 + $0x60] sm:$0xff]
        %v387 = vld [vmem:[#allocation9 + $0x68] sm:$0xff]
        %v388 = vld [vmem:[#allocation9 + $0x70] sm:$0xff]
        %v389 = vld [vmem:[#allocation9 + $0x78] sm:$0xff]
        %v390 = vld [vmem:[#allocation9 + $0x80] sm:$0xff]
        %v391 = vld [vmem:[#allocation9 + $0x88] sm:$0xff]
        %v392 = vld [vmem:[#allocation9 + $0x90] sm:$0xff]
        %v393 = vld [vmem:[#allocation9 + $0x98] sm:$0xff]
        %v394 = vld [vmem:[#allocation9 + $0xa0] sm:$0xff]
        %v395 = vld [vmem:[#allocation9 + $0xa8] sm:$0xff]
        %v396 = vld [vmem:[#allocation9 + $0xb0] sm:$0xff]
        %v397 = vld [vmem:[#allocation9 + $0xb8] sm:$0xff]
        %v398 = vld [vmem:[#allocation9 + $0xc0] sm:$0xff]
        %v399 = vld [vmem:[#allocation9 + $0xc8] sm:$0xff]
        %v400 = vld [vmem:[#allocation9 + $0xd0] sm:$0xff]
        %v401 = vld [vmem:[#allocation9 + $0xd8] sm:$0xff]
        %v402 = vld [vmem:[#allocation9 + $0xe0] sm:$0xff]
        %v403 = vld [vmem:[#allocation9 + $0xe8] sm:$0xff]
        %v404 = vld [vmem:[#allocation9 + $0xf0] sm:$0xff]
        %v405 = vld [vmem:[#allocation9 + $0xf8] sm:$0xff]
        %v406 = vld [vmem:[#allocation10] sm:$0xff]
        %v407 = vld [vmem:[#allocation10 + $0x8] sm:$0xff]
        %v408 = vld [vmem:[#allocation10 + $0x10] sm:$0xff]
        %v409 = vld [vmem:[#allocation10 + $0x18] sm:$0xff]
        %v410 = vld [vmem:[#allocation10 + $0x20] sm:$0xff]
        %v411 = vld [vmem:[#allocation10 + $0x28] sm:$0xff]
        %v412 = vld [vmem:[#allocation10 + $0x30] sm:$0xff]
        %v413 = vld [vmem:[#allocation10 + $0x38] sm:$0xff]
        %v414 = vld [vmem:[#allocation10 + $0x40] sm:$0xff]
        %v415 = vld [vmem:[#allocation10 + $0x48] sm:$0xff]
        %v416 = vld [vmem:[#allocation10 + $0x50] sm:$0xff]
        %v417 = vld [vmem:[#allocation10 + $0x58] sm:$0xff]
        %v418 = vld [vmem:[#allocation10 + $0x60] sm:$0xff]
        %v419 = vld [vmem:[#allocation10 + $0x68] sm:$0xff]
        %v420 = vld [vmem:[#allocation10 + $0x70] sm:$0xff]
        %v421 = vld [vmem:[#allocation10 + $0x78] sm:$0xff]
        %v422 = vld [vmem:[#allocation10 + $0x80] sm:$0xff]
        %v423 = vld [vmem:[#allocation10 + $0x88] sm:$0xff]
        %v424 = vld [vmem:[#allocation10 + $0x90] sm:$0xff]
        %v425 = vld [vmem:[#allocation10 + $0x98] sm:$0xff]
        %v426 = vld [vmem:[#allocation10 + $0xa0] sm:$0xff]
        %v427 = vld [vmem:[#allocation10 + $0xa8] sm:$0xff]
        %v428 = vld [vmem:[#allocation10 + $0xb0] sm:$0xff]
        %v429 = vld [vmem:[#allocation10 + $0xb8] sm:$0xff]
        %v430 = vld [vmem:[#allocation10 + $0xc0] sm:$0xff]
        %v431 = vld [vmem:[#allocation10 + $0xc8] sm:$0xff]
        %v432 = vld [vmem:[#allocation10 + $0xd0] sm:$0xff]
        %v433 = vld [vmem:[#allocation10 + $0xd8] sm:$0xff]
        %v434 = vld [vmem:[#allocation10 + $0xe0] sm:$0xff]
        %v435 = vld [vmem:[#allocation10 + $0xe8] sm:$0xff]
        %v436 = vld [vmem:[#allocation10 + $0xf0] sm:$0xff]
        %v437 = vld [vmem:[#allocation10 + $0xf8] sm:$0xff]
        %v438 = vld [vmem:[%s313] sm:$0xf]
        %v439 = vld [vmem:[%s313 + $0x4] sm:$0xf]
        %v440 = vld [vmem:[%s313 + $0x8] sm:$0xf]
        %v441 = vld [vmem:[%s313 + $0xc] sm:$0xf]
        %v442 = vld [vmem:[%s313 + $0x10] sm:$0xf]
        %v443 = vld [vmem:[%s313 + $0x14] sm:$0xf]
        %v444 = vld [vmem:[%s313 + $0x18] sm:$0xf]
        %v445 = vld [vmem:[%s313 + $0x1c] sm:$0xf]
        %v446 = vld [vmem:[%s313 + $0x20] sm:$0xf]
        %v447 = vld [vmem:[%s313 + $0x24] sm:$0xf]
        %v448 = vld [vmem:[%s313 + $0x28] sm:$0xf]
        %v449 = vld [vmem:[%s313 + $0x2c] sm:$0xf]
        %v450 = vld [vmem:[#allocation7] sm:$0xff]
        %v451 = vld [vmem:[#allocation7 + $0x8] sm:$0xff]
        %v452 = vld [vmem:[#allocation7 + $0x10] sm:$0xff]
        %v453 = vld [vmem:[#allocation7 + $0x18] sm:$0xff]
        %v454 = vld [vmem:[#allocation7 + $0x20] sm:$0xff]
        %v455 = vld [vmem:[#allocation7 + $0x28] sm:$0xff]
        %v456 = vld [vmem:[#allocation7 + $0x30] sm:$0xff]
        %v457 = vld [vmem:[#allocation7 + $0x38] sm:$0xff]
        %v458 = vld [vmem:[#allocation7 + $0x40] sm:$0xff]
        %v459 = vld [vmem:[#allocation7 + $0x48] sm:$0xff]
        %v460 = vld [vmem:[#allocation7 + $0x50] sm:$0xff]
        %v461 = vld [vmem:[#allocation7 + $0x58] sm:$0xff]
        %v462 = vld [vmem:[#allocation7 + $0x60] sm:$0xff]
        %v463 = vld [vmem:[#allocation7 + $0x68] sm:$0xff]
        %v464 = vld [vmem:[#allocation7 + $0x70] sm:$0xff]
        %v465 = vld [vmem:[#allocation7 + $0x78] sm:$0xff]
        %v466 = vld [vmem:[#allocation7 + $0x80] sm:$0xff]
        %v467 = vld [vmem:[#allocation7 + $0x88] sm:$0xff]
        %v468 = vld [vmem:[#allocation7 + $0x90] sm:$0xff]
        %v469 = vld [vmem:[#allocation7 + $0x98] sm:$0xff]
        %v470 = vld [vmem:[#allocation7 + $0xa0] sm:$0xff]
        %v471 = vld [vmem:[#allocation7 + $0xa8] sm:$0xff]
        %v472 = vld [vmem:[#allocation7 + $0xb0] sm:$0xff]
        %v473 = vld [vmem:[#allocation7 + $0xb8] sm:$0xff]
        %v474 = vld [vmem:[#allocation7 + $0xc0] sm:$0xff]
        %v475 = vld [vmem:[#allocation7 + $0xc8] sm:$0xff]
        %v476 = vld [vmem:[#allocation7 + $0xd0] sm:$0xff]
        %v477 = vld [vmem:[#allocation7 + $0xd8] sm:$0xff]
        %v478 = vld [vmem:[#allocation7 + $0xe0] sm:$0xff]
        %v479 = vld [vmem:[#allocation7 + $0xe8] sm:$0xff]
        %v480 = vld [vmem:[#allocation7 + $0xf0] sm:$0xff]
        %v481 = vld [vmem:[#allocation7 + $0xf8] sm:$0xff]
        %v482 = vld [vmem:[#allocation7 + $0x100] sm:$0xff]
        %v483 = vld [vmem:[#allocation7 + $0x108] sm:$0xff]
        %v484 = vld [vmem:[#allocation7 + $0x110] sm:$0xff]
        %v485 = vld [vmem:[#allocation7 + $0x118] sm:$0xff]
        %v486 = vld [vmem:[#allocation7 + $0x120] sm:$0xff]
        %v487 = vld [vmem:[#allocation7 + $0x128] sm:$0xff]
        %v488 = vld [vmem:[#allocation7 + $0x130] sm:$0xff]
        %v489 = vld [vmem:[#allocation7 + $0x138] sm:$0xff]
        %v490 = vld [vmem:[#allocation7 + $0x140] sm:$0xff]
        %v491 = vld [vmem:[#allocation7 + $0x148] sm:$0xff]
        %v492 = vld [vmem:[#allocation7 + $0x150] sm:$0xff]
        %v493 = vld [vmem:[#allocation7 + $0x158] sm:$0xff]
        %v494 = vld [vmem:[#allocation7 + $0x160] sm:$0xff]
        %v495 = vld [vmem:[#allocation7 + $0x168] sm:$0xff]
        %v496 = vld [vmem:[#allocation7 + $0x170] sm:$0xff]
        %v497 = vld [vmem:[#allocation7 + $0x178] sm:$0xff]
        %v498 = vld [vmem:[#allocation7 + $0x180] sm:$0xff]
        %v499 = vld [vmem:[#allocation7 + $0x188] sm:$0xff]
        %v500 = vld [vmem:[#allocation7 + $0x190] sm:$0xff]
        %v501 = vld [vmem:[#allocation7 + $0x198] sm:$0xff]
        %v502 = vld [vmem:[#allocation7 + $0x1a0] sm:$0xff]
        %v503 = vld [vmem:[#allocation7 + $0x1a8] sm:$0xff]
        %v504 = vld [vmem:[#allocation7 + $0x1b0] sm:$0xff]
        %v505 = vld [vmem:[#allocation7 + $0x1b8] sm:$0xff]
        %v506 = vld [vmem:[#allocation7 + $0x1c0] sm:$0xff]
        %v507 = vld [vmem:[#allocation7 + $0x1c8] sm:$0xff]
        %v508 = vld [vmem:[#allocation7 + $0x1d0] sm:$0xff]
        %v509 = vld [vmem:[#allocation7 + $0x1d8] sm:$0xff]
        %v510 = vld [vmem:[#allocation7 + $0x1e0] sm:$0xff]
        %v511 = vld [vmem:[#allocation7 + $0x1e8] sm:$0xff]
        %v512 = vld [vmem:[#allocation7 + $0x1f0] sm:$0xff]
        %v513 = vld [vmem:[#allocation7 + $0x1f8] sm:$0xff]
        %v514 = vld [vmem:[%s3] sm:$0xff]
        %v516 = vperm.slane %v514, 0
        %v517 = vperm.slane %v514, 1
        %v518 = vperm.slane %v514, 2
        %v519 = vperm.slane %v514, 3
        %v520 = vperm.slane %v514, 4
        %v521 = vperm.slane %v514, 5
        %v522 = vperm.slane %v514, 6
        %v523 = vperm.slane %v514, 7
        %v544 = vunpack.c.l.b16 %v438
        %v545 = vunpack.c.l.b16 %v439
        %v546 = vunpack.c.l.b16 %v440
        %v547 = vunpack.c.l.b16 %v441
        %v548 = vunpack.c.l.b16 %v442
        %v549 = vunpack.c.l.b16 %v443
        %v550 = vunpack.c.l.b16 %v444
        %v551 = vunpack.c.l.b16 %v445
        %v552 = vunpack.c.l.b16 %v446
        %v553 = vunpack.c.l.b16 %v447
        %v554 = vunpack.c.l.b16 %v448
        %v555 = vunpack.c.l.b16 %v449
        %v556 = vpack.c.b16 %v545, %v544
        %v557 = vpack.c.b16 %v547, %v546
        %v558 = vpack.c.b16 %v549, %v548
        %v559 = vpack.c.b16 %v551, %v550
        %v560 = vpack.c.b16 %v553, %v552
        %v561 = vpack.c.b16 %v555, %v554
        %v632 = vunpack.c.l.b16 %v450
        %v633 = vunpack.c.h.b16 %v450
        %v634 = vunpack.c.l.b16 %v451
        %v635 = vunpack.c.h.b16 %v451
        %v636 = vunpack.c.l.b16 %v452
        %v637 = vunpack.c.h.b16 %v452
        %v638 = vunpack.c.l.b16 %v453
        %v639 = vunpack.c.h.b16 %v453
        %v640 = vunpack.c.l.b16 %v454
        %v641 = vunpack.c.h.b16 %v454
        %v642 = vunpack.c.l.b16 %v455
        %v643 = vunpack.c.h.b16 %v455
        %v644 = vunpack.c.l.b16 %v456
        %v645 = vunpack.c.h.b16 %v456
        %v646 = vunpack.c.l.b16 %v457
        %v647 = vunpack.c.h.b16 %v457
        %v648 = vunpack.c.l.b16 %v458
        %v649 = vunpack.c.h.b16 %v458
        %v650 = vunpack.c.l.b16 %v459
        %v651 = vunpack.c.h.b16 %v459
        %v652 = vunpack.c.l.b16 %v460
        %v653 = vunpack.c.h.b16 %v460
        %v654 = vunpack.c.l.b16 %v461
        %v655 = vunpack.c.h.b16 %v461
        %v656 = vunpack.c.l.b16 %v462
        %v657 = vunpack.c.h.b16 %v462
        %v658 = vunpack.c.l.b16 %v463
        %v659 = vunpack.c.h.b16 %v463
        %v660 = vunpack.c.l.b16 %v464
        %v661 = vunpack.c.h.b16 %v464
        %v662 = vunpack.c.l.b16 %v465
        %v663 = vunpack.c.h.b16 %v465
        %v664 = vunpack.c.l.b16 %v466
        %v665 = vunpack.c.h.b16 %v466
        %v666 = vunpack.c.l.b16 %v467
        %v667 = vunpack.c.h.b16 %v467
        %v668 = vunpack.c.l.b16 %v468
        %v669 = vunpack.c.h.b16 %v468
        %v670 = vunpack.c.l.b16 %v469
        %v671 = vunpack.c.h.b16 %v469
        %v672 = vunpack.c.l.b16 %v470
        %v673 = vunpack.c.h.b16 %v470
        %v674 = vunpack.c.l.b16 %v471
        %v675 = vunpack.c.h.b16 %v471
        %v676 = vunpack.c.l.b16 %v472
        %v677 = vunpack.c.h.b16 %v472
        %v678 = vunpack.c.l.b16 %v473
        %v679 = vunpack.c.h.b16 %v473
        %v680 = vunpack.c.l.b16 %v474
        %v681 = vunpack.c.h.b16 %v474
        %v682 = vunpack.c.l.b16 %v475
        %v683 = vunpack.c.h.b16 %v475
        %v684 = vunpack.c.l.b16 %v476
        %v685 = vunpack.c.h.b16 %v476
        %v686 = vunpack.c.l.b16 %v477
        %v687 = vunpack.c.h.b16 %v477
        %v688 = vunpack.c.l.b16 %v478
        %v689 = vunpack.c.h.b16 %v478
        %v690 = vunpack.c.l.b16 %v479
        %v691 = vunpack.c.h.b16 %v479
        %v692 = vunpack.c.l.b16 %v480
        %v693 = vunpack.c.h.b16 %v480
        %v694 = vunpack.c.l.b16 %v481
        %v695 = vunpack.c.h.b16 %v481
        %v696 = vunpack.c.l.b16 %v482
        %v697 = vunpack.c.h.b16 %v482
        %v698 = vunpack.c.l.b16 %v483
        %v699 = vunpack.c.h.b16 %v483
        %v700 = vunpack.c.l.b16 %v484
        %v701 = vunpack.c.h.b16 %v484
        %v702 = vunpack.c.l.b16 %v485
        %v703 = vunpack.c.h.b16 %v485
        %v704 = vunpack.c.l.b16 %v486
        %v705 = vunpack.c.h.b16 %v486
        %v706 = vunpack.c.l.b16 %v487
        %v707 = vunpack.c.h.b16 %v487
        %v708 = vunpack.c.l.b16 %v488
        %v709 = vunpack.c.h.b16 %v488
        %v710 = vunpack.c.l.b16 %v489
        %v711 = vunpack.c.h.b16 %v489
        %v712 = vunpack.c.l.b16 %v490
        %v713 = vunpack.c.h.b16 %v490
        %v714 = vunpack.c.l.b16 %v491
        %v715 = vunpack.c.h.b16 %v491
        %v716 = vunpack.c.l.b16 %v492
        %v717 = vunpack.c.h.b16 %v492
        %v718 = vunpack.c.l.b16 %v493
        %v719 = vunpack.c.h.b16 %v493
        %v720 = vunpack.c.l.b16 %v494
        %v721 = vunpack.c.h.b16 %v494
        %v722 = vunpack.c.l.b16 %v495
        %v723 = vunpack.c.h.b16 %v495
        %v724 = vunpack.c.l.b16 %v496
        %v725 = vunpack.c.h.b16 %v496
        %v726 = vunpack.c.l.b16 %v497
        %v727 = vunpack.c.h.b16 %v497
        %v728 = vunpack.c.l.b16 %v498
        %v729 = vunpack.c.h.b16 %v498
        %v730 = vunpack.c.l.b16 %v499
        %v731 = vunpack.c.h.b16 %v499
        %v732 = vunpack.c.l.b16 %v500
        %v733 = vunpack.c.h.b16 %v500
        %v734 = vunpack.c.l.b16 %v501
        %v735 = vunpack.c.h.b16 %v501
        %v736 = vunpack.c.l.b16 %v502
        %v737 = vunpack.c.h.b16 %v502
        %v738 = vunpack.c.l.b16 %v503
        %v739 = vunpack.c.h.b16 %v503
        %v740 = vunpack.c.l.b16 %v504
        %v741 = vunpack.c.h.b16 %v504
        %v742 = vunpack.c.l.b16 %v505
        %v743 = vunpack.c.h.b16 %v505
        %v744 = vunpack.c.l.b16 %v506
        %v745 = vunpack.c.h.b16 %v506
        %v746 = vunpack.c.l.b16 %v507
        %v747 = vunpack.c.h.b16 %v507
        %v748 = vunpack.c.l.b16 %v508
        %v749 = vunpack.c.h.b16 %v508
        %v750 = vunpack.c.l.b16 %v509
        %v751 = vunpack.c.h.b16 %v509
        %v752 = vunpack.c.l.b16 %v510
        %v753 = vunpack.c.h.b16 %v510
        %v754 = vunpack.c.l.b16 %v511
        %v755 = vunpack.c.h.b16 %v511
        %v756 = vunpack.c.l.b16 %v512
        %v757 = vunpack.c.h.b16 %v512
        %v758 = vunpack.c.l.b16 %v513
        %v759 = vunpack.c.h.b16 %v513
        %v760 = vpack.c.b16 %v640, %v632
        %v761 = vpack.c.b16 %v641, %v633
        %v762 = vpack.c.b16 %v642, %v634
        %v763 = vpack.c.b16 %v643, %v635
        %v764 = vpack.c.b16 %v644, %v636
        %v765 = vpack.c.b16 %v645, %v637
        %v766 = vpack.c.b16 %v646, %v638
        %v767 = vpack.c.b16 %v647, %v639
        %v768 = vpack.c.b16 %v656, %v648
        %v769 = vpack.c.b16 %v657, %v649
        %v770 = vpack.c.b16 %v658, %v650
        %v771 = vpack.c.b16 %v659, %v651
        %v772 = vpack.c.b16 %v660, %v652
        %v773 = vpack.c.b16 %v661, %v653
        %v774 = vpack.c.b16 %v662, %v654
        %v775 = vpack.c.b16 %v663, %v655
        %v776 = vpack.c.b16 %v672, %v664
        %v777 = vpack.c.b16 %v673, %v665
        %v778 = vpack.c.b16 %v674, %v666
        %v779 = vpack.c.b16 %v675, %v667
        %v780 = vpack.c.b16 %v676, %v668
        %v781 = vpack.c.b16 %v677, %v669
        %v782 = vpack.c.b16 %v678, %v670
        %v783 = vpack.c.b16 %v679, %v671
        %v784 = vpack.c.b16 %v688, %v680
        %v785 = vpack.c.b16 %v689, %v681
        %v786 = vpack.c.b16 %v690, %v682
        %v787 = vpack.c.b16 %v691, %v683
        %v788 = vpack.c.b16 %v692, %v684
        %v789 = vpack.c.b16 %v693, %v685
        %v790 = vpack.c.b16 %v694, %v686
        %v791 = vpack.c.b16 %v695, %v687
        %v792 = vpack.c.b16 %v704, %v696
        %v793 = vpack.c.b16 %v705, %v697
        %v794 = vpack.c.b16 %v706, %v698
        %v795 = vpack.c.b16 %v707, %v699
        %v796 = vpack.c.b16 %v708, %v700
        %v797 = vpack.c.b16 %v709, %v701
        %v798 = vpack.c.b16 %v710, %v702
        %v799 = vpack.c.b16 %v711, %v703
        %v800 = vpack.c.b16 %v720, %v712
        %v801 = vpack.c.b16 %v721, %v713
        %v802 = vpack.c.b16 %v722, %v714
        %v803 = vpack.c.b16 %v723, %v715
        %v804 = vpack.c.b16 %v724, %v716
        %v805 = vpack.c.b16 %v725, %v717
        %v806 = vpack.c.b16 %v726, %v718
        %v807 = vpack.c.b16 %v727, %v719
        %v808 = vpack.c.b16 %v736, %v728
        %v809 = vpack.c.b16 %v737, %v729
        %v810 = vpack.c.b16 %v738, %v730
        %v811 = vpack.c.b16 %v739, %v731
        %v812 = vpack.c.b16 %v740, %v732
        %v813 = vpack.c.b16 %v741, %v733
        %v814 = vpack.c.b16 %v742, %v734
        %v815 = vpack.c.b16 %v743, %v735
        %v816 = vpack.c.b16 %v752, %v744
        %v817 = vpack.c.b16 %v753, %v745
        %v818 = vpack.c.b16 %v754, %v746
        %v819 = vpack.c.b16 %v755, %v747
        %v820 = vpack.c.b16 %v756, %v748
        %v821 = vpack.c.b16 %v757, %v749
        %v822 = vpack.c.b16 %v758, %v750
        %v823 = vpack.c.b16 %v759, %v751
        %888 = vmatpush.bf16.msra.mxu0 %v816
        %889 = vmatpush.bf16.msra.mxu0 %v808
        %890 = vmatpush.bf16.msra.mxu0 %v800
        %891 = vmatpush.bf16.msra.mxu0 %v792
        %892 = vmatpush.bf16.msra.mxu0 %v784
        %893 = vmatpush.bf16.msra.mxu0 %v776
        %894 = vmatpush.bf16.msra.mxu0 %v768
        %895 = vmatpush.bf16.msra.mxu0 %v760
        %896 = vmatmul.bf16.gmra.mxu0 %v556
        %v897 = vpop.f32.mrf.mxu0
        %v898 = vadd.f32 %v516, %v897
        %v899 = vpop.f32.mrf.mxu0
        %v900 = vadd.f32 %v516, %v899
        %901 = vmatmul.bf16.gmra.mxu0 %v557
        %v902 = vpop.f32.mrf.mxu0
        %v903 = vadd.f32 %v516, %v902
        %v904 = vpop.f32.mrf.mxu0
        %v905 = vadd.f32 %v516, %v904
        %906 = vmatmul.bf16.gmra.mxu0 %v558
        %v907 = vpop.f32.mrf.mxu0
        %v908 = vadd.f32 %v516, %v907
        %v909 = vpop.f32.mrf.mxu0
        %v910 = vadd.f32 %v516, %v909
        %911 = vmatmul.bf16.gmra.mxu0 %v559
        %v912 = vpop.f32.mrf.mxu0
        %v913 = vadd.f32 %v516, %v912
        %v914 = vpop.f32.mrf.mxu0
        %v915 = vadd.f32 %v516, %v914
        %916 = vmatmul.bf16.gmra.mxu0 %v560
        %v917 = vpop.f32.mrf.mxu0
        %v918 = vadd.f32 %v516, %v917
        %v919 = vpop.f32.mrf.mxu0
        %v920 = vadd.f32 %v516, %v919
        %921 = vmatmul.bf16.gmra.mxu0 %v561
        %v922 = vpop.f32.mrf.mxu0
        %v923 = vadd.f32 %v516, %v922
        %v924 = vpop.f32.mrf.mxu0
        %v925 = vadd.f32 %v516, %v924
        %926 = vdwg.mxu0
        %927 = vmatpush.bf16.msra.mxu0 %v817
        %928 = vmatpush.bf16.msra.mxu0 %v809
        %929 = vmatpush.bf16.msra.mxu0 %v801
        %930 = vmatpush.bf16.msra.mxu0 %v793
        %931 = vmatpush.bf16.msra.mxu0 %v785
        %932 = vmatpush.bf16.msra.mxu0 %v777
        %933 = vmatpush.bf16.msra.mxu0 %v769
        %934 = vmatpush.bf16.msra.mxu0 %v761
        %935 = vmatmul.bf16.gmra.mxu0 %v556
        %v936 = vpop.f32.mrf.mxu0
        %v937 = vadd.f32 %v517, %v936
        %v938 = vpop.f32.mrf.mxu0
        %v939 = vadd.f32 %v517, %v938
        %940 = vmatmul.bf16.gmra.mxu0 %v557
        %v941 = vpop.f32.mrf.mxu0
        %v942 = vadd.f32 %v517, %v941
        %v943 = vpop.f32.mrf.mxu0
        %v944 = vadd.f32 %v517, %v943
        %945 = vmatmul.bf16.gmra.mxu0 %v558
        %v946 = vpop.f32.mrf.mxu0
        %v947 = vadd.f32 %v517, %v946
        %v948 = vpop.f32.mrf.mxu0
        %v949 = vadd.f32 %v517, %v948
        %950 = vmatmul.bf16.gmra.mxu0 %v559
        %v951 = vpop.f32.mrf.mxu0
        %v952 = vadd.f32 %v517, %v951
        %v953 = vpop.f32.mrf.mxu0
        %v954 = vadd.f32 %v517, %v953
        %955 = vmatmul.bf16.gmra.mxu0 %v560
        %v956 = vpop.f32.mrf.mxu0
        %v957 = vadd.f32 %v517, %v956
        %v958 = vpop.f32.mrf.mxu0
        %v959 = vadd.f32 %v517, %v958
        %960 = vmatmul.bf16.gmra.mxu0 %v561
        %v961 = vpop.f32.mrf.mxu0
        %v962 = vadd.f32 %v517, %v961
        %v963 = vpop.f32.mrf.mxu0
        %v964 = vadd.f32 %v517, %v963
        %965 = vdwg.mxu0
        %966 = vmatpush.bf16.msra.mxu0 %v818
        %967 = vmatpush.bf16.msra.mxu0 %v810
        %968 = vmatpush.bf16.msra.mxu0 %v802
        %969 = vmatpush.bf16.msra.mxu0 %v794
        %970 = vmatpush.bf16.msra.mxu0 %v786
        %971 = vmatpush.bf16.msra.mxu0 %v778
        %972 = vmatpush.bf16.msra.mxu0 %v770
        %973 = vmatpush.bf16.msra.mxu0 %v762
        %974 = vmatmul.bf16.gmra.mxu0 %v556
        %v975 = vpop.f32.mrf.mxu0
        %v976 = vadd.f32 %v518, %v975
        %v977 = vpop.f32.mrf.mxu0
        %v978 = vadd.f32 %v518, %v977
        %979 = vmatmul.bf16.gmra.mxu0 %v557
        %v980 = vpop.f32.mrf.mxu0
        %v981 = vadd.f32 %v518, %v980
        %v982 = vpop.f32.mrf.mxu0
        %v983 = vadd.f32 %v518, %v982
        %984 = vmatmul.bf16.gmra.mxu0 %v558
        %v985 = vpop.f32.mrf.mxu0
        %v986 = vadd.f32 %v518, %v985
        %v987 = vpop.f32.mrf.mxu0
        %v988 = vadd.f32 %v518, %v987
        %989 = vmatmul.bf16.gmra.mxu0 %v559
        %v990 = vpop.f32.mrf.mxu0
        %v991 = vadd.f32 %v518, %v990
        %v992 = vpop.f32.mrf.mxu0
        %v993 = vadd.f32 %v518, %v992
        %994 = vmatmul.bf16.gmra.mxu0 %v560
        %v995 = vpop.f32.mrf.mxu0
        %v996 = vadd.f32 %v518, %v995
        %v997 = vpop.f32.mrf.mxu0
        %v998 = vadd.f32 %v518, %v997
        %999 = vmatmul.bf16.gmra.mxu0 %v561
        %v1000 = vpop.f32.mrf.mxu0
        %v1001 = vadd.f32 %v518, %v1000
        %v1002 = vpop.f32.mrf.mxu0
        %v1003 = vadd.f32 %v518, %v1002
        %1004 = vdwg.mxu0
        %1005 = vmatpush.bf16.msra.mxu0 %v819
        %1006 = vmatpush.bf16.msra.mxu0 %v811
        %1007 = vmatpush.bf16.msra.mxu0 %v803
        %1008 = vmatpush.bf16.msra.mxu0 %v795
        %1009 = vmatpush.bf16.msra.mxu0 %v787
        %1010 = vmatpush.bf16.msra.mxu0 %v779
        %1011 = vmatpush.bf16.msra.mxu0 %v771
        %1012 = vmatpush.bf16.msra.mxu0 %v763
        %1013 = vmatmul.bf16.gmra.mxu0 %v556
        %v1014 = vpop.f32.mrf.mxu0
        %v1015 = vadd.f32 %v519, %v1014
        %v1016 = vpop.f32.mrf.mxu0
        %v1017 = vadd.f32 %v519, %v1016
        %1018 = vmatmul.bf16.gmra.mxu0 %v557
        %v1019 = vpop.f32.mrf.mxu0
        %v1020 = vadd.f32 %v519, %v1019
        %v1021 = vpop.f32.mrf.mxu0
        %v1022 = vadd.f32 %v519, %v1021
        %1023 = vmatmul.bf16.gmra.mxu0 %v558
        %v1024 = vpop.f32.mrf.mxu0
        %v1025 = vadd.f32 %v519, %v1024
        %v1026 = vpop.f32.mrf.mxu0
        %v1027 = vadd.f32 %v519, %v1026
        %1028 = vmatmul.bf16.gmra.mxu0 %v559
        %v1029 = vpop.f32.mrf.mxu0
        %v1030 = vadd.f32 %v519, %v1029
        %v1031 = vpop.f32.mrf.mxu0
        %v1032 = vadd.f32 %v519, %v1031
        %1033 = vmatmul.bf16.gmra.mxu0 %v560
        %v1034 = vpop.f32.mrf.mxu0
        %v1035 = vadd.f32 %v519, %v1034
        %v1036 = vpop.f32.mrf.mxu0
        %v1037 = vadd.f32 %v519, %v1036
        %1038 = vmatmul.bf16.gmra.mxu0 %v561
        %v1039 = vpop.f32.mrf.mxu0
        %v1040 = vadd.f32 %v519, %v1039
        %v1041 = vpop.f32.mrf.mxu0
        %v1042 = vadd.f32 %v519, %v1041
        %1043 = vdwg.mxu0
        %1044 = vmatpush.bf16.msra.mxu0 %v820
        %1045 = vmatpush.bf16.msra.mxu0 %v812
        %1046 = vmatpush.bf16.msra.mxu0 %v804
        %1047 = vmatpush.bf16.msra.mxu0 %v796
        %1048 = vmatpush.bf16.msra.mxu0 %v788
        %1049 = vmatpush.bf16.msra.mxu0 %v780
        %1050 = vmatpush.bf16.msra.mxu0 %v772
        %1051 = vmatpush.bf16.msra.mxu0 %v764
        %1052 = vmatmul.bf16.gmra.mxu0 %v556
        %v1053 = vpop.f32.mrf.mxu0
        %v1054 = vadd.f32 %v520, %v1053
        %v1055 = vpop.f32.mrf.mxu0
        %v1056 = vadd.f32 %v520, %v1055
        %1057 = vmatmul.bf16.gmra.mxu0 %v557
        %v1058 = vpop.f32.mrf.mxu0
        %v1059 = vadd.f32 %v520, %v1058
        %v1060 = vpop.f32.mrf.mxu0
        %v1061 = vadd.f32 %v520, %v1060
        %1062 = vmatmul.bf16.gmra.mxu0 %v558
        %v1063 = vpop.f32.mrf.mxu0
        %v1064 = vadd.f32 %v520, %v1063
        %v1065 = vpop.f32.mrf.mxu0
        %v1066 = vadd.f32 %v520, %v1065
        %1067 = vmatmul.bf16.gmra.mxu0 %v559
        %v1068 = vpop.f32.mrf.mxu0
        %v1069 = vadd.f32 %v520, %v1068
        %v1070 = vpop.f32.mrf.mxu0
        %v1071 = vadd.f32 %v520, %v1070
        %1072 = vmatmul.bf16.gmra.mxu0 %v560
        %v1073 = vpop.f32.mrf.mxu0
        %v1074 = vadd.f32 %v520, %v1073
        %v1075 = vpop.f32.mrf.mxu0
        %v1076 = vadd.f32 %v520, %v1075
        %1077 = vmatmul.bf16.gmra.mxu0 %v561
        %v1078 = vpop.f32.mrf.mxu0
        %v1079 = vadd.f32 %v520, %v1078
        %v1080 = vpop.f32.mrf.mxu0
        %v1081 = vadd.f32 %v520, %v1080
        %1082 = vdwg.mxu0
        %1083 = vmatpush.bf16.msra.mxu0 %v821
        %1084 = vmatpush.bf16.msra.mxu0 %v813
        %1085 = vmatpush.bf16.msra.mxu0 %v805
        %1086 = vmatpush.bf16.msra.mxu0 %v797
        %1087 = vmatpush.bf16.msra.mxu0 %v789
        %1088 = vmatpush.bf16.msra.mxu0 %v781
        %1089 = vmatpush.bf16.msra.mxu0 %v773
        %1090 = vmatpush.bf16.msra.mxu0 %v765
        %1091 = vmatmul.bf16.gmra.mxu0 %v556
        %v1092 = vpop.f32.mrf.mxu0
        %v1093 = vadd.f32 %v521, %v1092
        %v1094 = vpop.f32.mrf.mxu0
        %v1095 = vadd.f32 %v521, %v1094
        %1096 = vmatmul.bf16.gmra.mxu0 %v557
        %v1097 = vpop.f32.mrf.mxu0
        %v1098 = vadd.f32 %v521, %v1097
        %v1099 = vpop.f32.mrf.mxu0
        %v1100 = vadd.f32 %v521, %v1099
        %1101 = vmatmul.bf16.gmra.mxu0 %v558
        %v1102 = vpop.f32.mrf.mxu0
        %v1103 = vadd.f32 %v521, %v1102
        %v1104 = vpop.f32.mrf.mxu0
        %v1105 = vadd.f32 %v521, %v1104
        %1106 = vmatmul.bf16.gmra.mxu0 %v559
        %v1107 = vpop.f32.mrf.mxu0
        %v1108 = vadd.f32 %v521, %v1107
        %v1109 = vpop.f32.mrf.mxu0
        %v1110 = vadd.f32 %v521, %v1109
        %1111 = vmatmul.bf16.gmra.mxu0 %v560
        %v1112 = vpop.f32.mrf.mxu0
        %v1113 = vadd.f32 %v521, %v1112
        %v1114 = vpop.f32.mrf.mxu0
        %v1115 = vadd.f32 %v521, %v1114
        %1116 = vmatmul.bf16.gmra.mxu0 %v561
        %v1117 = vpop.f32.mrf.mxu0
        %v1118 = vadd.f32 %v521, %v1117
        %v1119 = vpop.f32.mrf.mxu0
        %v1120 = vadd.f32 %v521, %v1119
        %1121 = vdwg.mxu0
        %1122 = vmatpush.bf16.msra.mxu0 %v822
        %1123 = vmatpush.bf16.msra.mxu0 %v814
        %1124 = vmatpush.bf16.msra.mxu0 %v806
        %1125 = vmatpush.bf16.msra.mxu0 %v798
        %1126 = vmatpush.bf16.msra.mxu0 %v790
        %1127 = vmatpush.bf16.msra.mxu0 %v782
        %1128 = vmatpush.bf16.msra.mxu0 %v774
        %1129 = vmatpush.bf16.msra.mxu0 %v766
        %1130 = vmatmul.bf16.gmra.mxu0 %v556
        %v1131 = vpop.f32.mrf.mxu0
        %v1132 = vadd.f32 %v522, %v1131
        %v1133 = vpop.f32.mrf.mxu0
        %v1134 = vadd.f32 %v522, %v1133
        %1135 = vmatmul.bf16.gmra.mxu0 %v557
        %v1136 = vpop.f32.mrf.mxu0
        %v1137 = vadd.f32 %v522, %v1136
        %v1138 = vpop.f32.mrf.mxu0
        %v1139 = vadd.f32 %v522, %v1138
        %1140 = vmatmul.bf16.gmra.mxu0 %v558
        %v1141 = vpop.f32.mrf.mxu0
        %v1142 = vadd.f32 %v522, %v1141
        %v1143 = vpop.f32.mrf.mxu0
        %v1144 = vadd.f32 %v522, %v1143
        %1145 = vmatmul.bf16.gmra.mxu0 %v559
        %v1146 = vpop.f32.mrf.mxu0
        %v1147 = vadd.f32 %v522, %v1146
        %v1148 = vpop.f32.mrf.mxu0
        %v1149 = vadd.f32 %v522, %v1148
        %1150 = vmatmul.bf16.gmra.mxu0 %v560
        %v1151 = vpop.f32.mrf.mxu0
        %v1152 = vadd.f32 %v522, %v1151
        %v1153 = vpop.f32.mrf.mxu0
        %v1154 = vadd.f32 %v522, %v1153
        %1155 = vmatmul.bf16.gmra.mxu0 %v561
        %v1156 = vpop.f32.mrf.mxu0
        %v1157 = vadd.f32 %v522, %v1156
        %v1158 = vpop.f32.mrf.mxu0
        %v1159 = vadd.f32 %v522, %v1158
        %1160 = vdwg.mxu0
        %1161 = vmatpush.bf16.msra.mxu0 %v823
        %1162 = vmatpush.bf16.msra.mxu0 %v815
        %1163 = vmatpush.bf16.msra.mxu0 %v807
        %1164 = vmatpush.bf16.msra.mxu0 %v799
        %1165 = vmatpush.bf16.msra.mxu0 %v791
        %1166 = vmatpush.bf16.msra.mxu0 %v783
        %1167 = vmatpush.bf16.msra.mxu0 %v775
        %1168 = vmatpush.bf16.msra.mxu0 %v767
        %1169 = vmatmul.bf16.gmra.mxu0 %v556
        %v1170 = vpop.f32.mrf.mxu0
        %v1171 = vadd.f32 %v523, %v1170
        %v1172 = vpop.f32.mrf.mxu0
        %v1173 = vadd.f32 %v523, %v1172
        %1174 = vmatmul.bf16.gmra.mxu0 %v557
        %v1175 = vpop.f32.mrf.mxu0
        %v1176 = vadd.f32 %v523, %v1175
        %v1177 = vpop.f32.mrf.mxu0
        %v1178 = vadd.f32 %v523, %v1177
        %1179 = vmatmul.bf16.gmra.mxu0 %v558
        %v1180 = vpop.f32.mrf.mxu0
        %v1181 = vadd.f32 %v523, %v1180
        %v1182 = vpop.f32.mrf.mxu0
        %v1183 = vadd.f32 %v523, %v1182
        %1184 = vmatmul.bf16.gmra.mxu0 %v559
        %v1185 = vpop.f32.mrf.mxu0
        %v1186 = vadd.f32 %v523, %v1185
        %v1187 = vpop.f32.mrf.mxu0
        %v1188 = vadd.f32 %v523, %v1187
        %1189 = vmatmul.bf16.gmra.mxu0 %v560
        %v1190 = vpop.f32.mrf.mxu0
        %v1191 = vadd.f32 %v523, %v1190
        %v1192 = vpop.f32.mrf.mxu0
        %v1193 = vadd.f32 %v523, %v1192
        %1194 = vmatmul.bf16.gmra.mxu0 %v561
        %v1195 = vpop.f32.mrf.mxu0
        %v1196 = vadd.f32 %v523, %v1195
        %v1197 = vpop.f32.mrf.mxu0
        %v1198 = vadd.f32 %v523, %v1197
        %1199 = vdwg.mxu0
        %1200 = vst [vmem:[#allocation2] sm:$0xff] %v898
        %1201 = vst [vmem:[#allocation2 + $0x8] sm:$0xff] %v937
        %1202 = vst [vmem:[#allocation2 + $0x10] sm:$0xff] %v976
        %1203 = vst [vmem:[#allocation2 + $0x18] sm:$0xff] %v1015
        %1204 = vst [vmem:[#allocation2 + $0x20] sm:$0xff] %v900
        %1205 = vst [vmem:[#allocation2 + $0x28] sm:$0xff] %v939
        %1206 = vst [vmem:[#allocation2 + $0x30] sm:$0xff] %v978
        %1207 = vst [vmem:[#allocation2 + $0x38] sm:$0xff] %v1017
        %1208 = vst [vmem:[#allocation2 + $0x40] sm:$0xff] %v903
        %1209 = vst [vmem:[#allocation2 + $0x48] sm:$0xff] %v942
        %1210 = vst [vmem:[#allocation2 + $0x50] sm:$0xff] %v981
        %1211 = vst [vmem:[#allocation2 + $0x58] sm:$0xff] %v1020
        %1212 = vst [vmem:[#allocation2 + $0x60] sm:$0xff] %v905
        %1213 = vst [vmem:[#allocation2 + $0x68] sm:$0xff] %v944
        %1214 = vst [vmem:[#allocation2 + $0x70] sm:$0xff] %v983
        %1215 = vst [vmem:[#allocation2 + $0x78] sm:$0xff] %v1022
        %1216 = vst [vmem:[#allocation2 + $0x80] sm:$0xff] %v908
        %1217 = vst [vmem:[#allocation2 + $0x88] sm:$0xff] %v947
        %1218 = vst [vmem:[#allocation2 + $0x90] sm:$0xff] %v986
        %1219 = vst [vmem:[#allocation2 + $0x98] sm:$0xff] %v1025
        %1220 = vst [vmem:[#allocation2 + $0xa0] sm:$0xff] %v910
        %1221 = vst [vmem:[#allocation2 + $0xa8] sm:$0xff] %v949
        %1222 = vst [vmem:[#allocation2 + $0xb0] sm:$0xff] %v988
        %1223 = vst [vmem:[#allocation2 + $0xb8] sm:$0xff] %v1027
        %1224 = vst [vmem:[#allocation2 + $0xc0] sm:$0xff] %v913
        %1225 = vst [vmem:[#allocation2 + $0xc8] sm:$0xff] %v952
        %1226 = vst [vmem:[#allocation2 + $0xd0] sm:$0xff] %v991
        %1227 = vst [vmem:[#allocation2 + $0xd8] sm:$0xff] %v1030
        %1228 = vst [vmem:[#allocation2 + $0xe0] sm:$0xff] %v915
        %1229 = vst [vmem:[#allocation2 + $0xe8] sm:$0xff] %v954
        %1230 = vst [vmem:[#allocation2 + $0xf0] sm:$0xff] %v993
        %1231 = vst [vmem:[#allocation2 + $0xf8] sm:$0xff] %v1032
        %1232 = vst [vmem:[#allocation2 + $0x100] sm:$0xff] %v918
        %1233 = vst [vmem:[#allocation2 + $0x108] sm:$0xff] %v957
        %1234 = vst [vmem:[#allocation2 + $0x110] sm:$0xff] %v996
        %1235 = vst [vmem:[#allocation2 + $0x118] sm:$0xff] %v1035
        %1236 = vst [vmem:[#allocation2 + $0x120] sm:$0xff] %v920
        %1237 = vst [vmem:[#allocation2 + $0x128] sm:$0xff] %v959
        %1238 = vst [vmem:[#allocation2 + $0x130] sm:$0xff] %v998
        %1239 = vst [vmem:[#allocation2 + $0x138] sm:$0xff] %v1037
        %1240 = vst [vmem:[#allocation2 + $0x140] sm:$0xff] %v923
        %1241 = vst [vmem:[#allocation2 + $0x148] sm:$0xff] %v962
        %1242 = vst [vmem:[#allocation2 + $0x150] sm:$0xff] %v1001
        %1243 = vst [vmem:[#allocation2 + $0x158] sm:$0xff] %v1040
        %1244 = vst [vmem:[#allocation2 + $0x160] sm:$0xff] %v925
        %1245 = vst [vmem:[#allocation2 + $0x168] sm:$0xff] %v964
        %1246 = vst [vmem:[#allocation2 + $0x170] sm:$0xff] %v1003
        %1247 = vst [vmem:[#allocation2 + $0x178] sm:$0xff] %v1042
        %1248 = vst [vmem:[#allocation3] sm:$0xff] %v1054
        %1249 = vst [vmem:[#allocation3 + $0x8] sm:$0xff] %v1093
        %1250 = vst [vmem:[#allocation3 + $0x10] sm:$0xff] %v1132
        %1251 = vst [vmem:[#allocation3 + $0x18] sm:$0xff] %v1171
        %1252 = vst [vmem:[#allocation3 + $0x20] sm:$0xff] %v1056
        %1253 = vst [vmem:[#allocation3 + $0x28] sm:$0xff] %v1095
        %1254 = vst [vmem:[#allocation3 + $0x30] sm:$0xff] %v1134
        %1255 = vst [vmem:[#allocation3 + $0x38] sm:$0xff] %v1173
        %1256 = vst [vmem:[#allocation3 + $0x40] sm:$0xff] %v1059
        %1257 = vst [vmem:[#allocation3 + $0x48] sm:$0xff] %v1098
        %1258 = vst [vmem:[#allocation3 + $0x50] sm:$0xff] %v1137
        %1259 = vst [vmem:[#allocation3 + $0x58] sm:$0xff] %v1176
        %1260 = vst [vmem:[#allocation3 + $0x60] sm:$0xff] %v1061
        %1261 = vst [vmem:[#allocation3 + $0x68] sm:$0xff] %v1100
        %1262 = vst [vmem:[#allocation3 + $0x70] sm:$0xff] %v1139
        %1263 = vst [vmem:[#allocation3 + $0x78] sm:$0xff] %v1178
        %1264 = vst [vmem:[#allocation3 + $0x80] sm:$0xff] %v1064
        %1265 = vst [vmem:[#allocation3 + $0x88] sm:$0xff] %v1103
        %1266 = vst [vmem:[#allocation3 + $0x90] sm:$0xff] %v1142
        %1267 = vst [vmem:[#allocation3 + $0x98] sm:$0xff] %v1181
        %1268 = vst [vmem:[#allocation3 + $0xa0] sm:$0xff] %v1066
        %1269 = vst [vmem:[#allocation3 + $0xa8] sm:$0xff] %v1105
        %1270 = vst [vmem:[#allocation3 + $0xb0] sm:$0xff] %v1144
        %1271 = vst [vmem:[#allocation3 + $0xb8] sm:$0xff] %v1183
        %1272 = vst [vmem:[#allocation3 + $0xc0] sm:$0xff] %v1069
        %1273 = vst [vmem:[#allocation3 + $0xc8] sm:$0xff] %v1108
        %1274 = vst [vmem:[#allocation3 + $0xd0] sm:$0xff] %v1147
        %1275 = vst [vmem:[#allocation3 + $0xd8] sm:$0xff] %v1186
        %1276 = vst [vmem:[#allocation3 + $0xe0] sm:$0xff] %v1071
        %1277 = vst [vmem:[#allocation3 + $0xe8] sm:$0xff] %v1110
        %1278 = vst [vmem:[#allocation3 + $0xf0] sm:$0xff] %v1149
        %1279 = vst [vmem:[#allocation3 + $0xf8] sm:$0xff] %v1188
        %1280 = vst [vmem:[#allocation3 + $0x100] sm:$0xff] %v1074
        %1281 = vst [vmem:[#allocation3 + $0x108] sm:$0xff] %v1113
        %1282 = vst [vmem:[#allocation3 + $0x110] sm:$0xff] %v1152
        %1283 = vst [vmem:[#allocation3 + $0x118] sm:$0xff] %v1191
        %1284 = vst [vmem:[#allocation3 + $0x120] sm:$0xff] %v1076
        %1285 = vst [vmem:[#allocation3 + $0x128] sm:$0xff] %v1115
        %1286 = vst [vmem:[#allocation3 + $0x130] sm:$0xff] %v1154
        %1287 = vst [vmem:[#allocation3 + $0x138] sm:$0xff] %v1193
        %1288 = vst [vmem:[#allocation3 + $0x140] sm:$0xff] %v1079
        %1289 = vst [vmem:[#allocation3 + $0x148] sm:$0xff] %v1118
        %1290 = vst [vmem:[#allocation3 + $0x150] sm:$0xff] %v1157
        %1291 = vst [vmem:[#allocation3 + $0x158] sm:$0xff] %v1196
        %1292 = vst [vmem:[#allocation3 + $0x160] sm:$0xff] %v1081
        %1293 = vst [vmem:[#allocation3 + $0x168] sm:$0xff] %v1120
        %1294 = vst [vmem:[#allocation3 + $0x170] sm:$0xff] %v1159
        %1295 = vst [vmem:[#allocation3 + $0x178] sm:$0xff] %v1198
        %v1296 = vld [vmem:[#allocation2] sm:$0xff]
        %v1297 = vld [vmem:[#allocation2 + $0x8] sm:$0xff]
        %v1298 = vld [vmem:[#allocation2 + $0x10] sm:$0xff]
        %v1299 = vld [vmem:[#allocation2 + $0x18] sm:$0xff]
        %v1300 = vld [vmem:[#allocation2 + $0x20] sm:$0xff]
        %v1301 = vld [vmem:[#allocation2 + $0x28] sm:$0xff]
        %v1302 = vld [vmem:[#allocation2 + $0x30] sm:$0xff]
        %v1303 = vld [vmem:[#allocation2 + $0x38] sm:$0xff]
        %v1336 = vunpack.c.l.b16 %v374
        %v1337 = vunpack.c.h.b16 %v374
        %v1338 = vunpack.c.l.b16 %v375
        %v1339 = vunpack.c.h.b16 %v375
        %v1340 = vunpack.c.l.b16 %v376
        %v1341 = vunpack.c.h.b16 %v376
        %v1342 = vunpack.c.l.b16 %v377
        %v1343 = vunpack.c.h.b16 %v377
        %v1344 = vunpack.c.l.b16 %v378
        %v1345 = vunpack.c.h.b16 %v378
        %v1346 = vunpack.c.l.b16 %v379
        %v1347 = vunpack.c.h.b16 %v379
        %v1348 = vunpack.c.l.b16 %v380
        %v1349 = vunpack.c.h.b16 %v380
        %v1350 = vunpack.c.l.b16 %v381
        %v1351 = vunpack.c.h.b16 %v381
        %v1352 = vunpack.c.l.b16 %v382
        %v1353 = vunpack.c.h.b16 %v382
        %v1354 = vunpack.c.l.b16 %v383
        %v1355 = vunpack.c.h.b16 %v383
        %v1356 = vunpack.c.l.b16 %v384
        %v1357 = vunpack.c.h.b16 %v384
        %v1358 = vunpack.c.l.b16 %v385
        %v1359 = vunpack.c.h.b16 %v385
        %v1360 = vunpack.c.l.b16 %v386
        %v1361 = vunpack.c.h.b16 %v386
        %v1362 = vunpack.c.l.b16 %v387
        %v1363 = vunpack.c.h.b16 %v387
        %v1364 = vunpack.c.l.b16 %v388
        %v1365 = vunpack.c.h.b16 %v388
        %v1366 = vunpack.c.l.b16 %v389
        %v1367 = vunpack.c.h.b16 %v389
        %v1368 = vunpack.c.l.b16 %v390
        %v1369 = vunpack.c.h.b16 %v390
        %v1370 = vunpack.c.l.b16 %v391
        %v1371 = vunpack.c.h.b16 %v391
        %v1372 = vunpack.c.l.b16 %v392
        %v1373 = vunpack.c.h.b16 %v392
        %v1374 = vunpack.c.l.b16 %v393
        %v1375 = vunpack.c.h.b16 %v393
        %v1376 = vunpack.c.l.b16 %v394
        %v1377 = vunpack.c.h.b16 %v394
        %v1378 = vunpack.c.l.b16 %v395
        %v1379 = vunpack.c.h.b16 %v395
        %v1380 = vunpack.c.l.b16 %v396
        %v1381 = vunpack.c.h.b16 %v396
        %v1382 = vunpack.c.l.b16 %v397
        %v1383 = vunpack.c.h.b16 %v397
        %v1384 = vunpack.c.l.b16 %v398
        %v1385 = vunpack.c.h.b16 %v398
        %v1386 = vunpack.c.l.b16 %v399
        %v1387 = vunpack.c.h.b16 %v399
        %v1388 = vunpack.c.l.b16 %v400
        %v1389 = vunpack.c.h.b16 %v400
        %v1390 = vunpack.c.l.b16 %v401
        %v1391 = vunpack.c.h.b16 %v401
        %v1392 = vunpack.c.l.b16 %v402
        %v1393 = vunpack.c.h.b16 %v402
        %v1394 = vunpack.c.l.b16 %v403
        %v1395 = vunpack.c.h.b16 %v403
        %v1396 = vunpack.c.l.b16 %v404
        %v1397 = vunpack.c.h.b16 %v404
        %v1398 = vunpack.c.l.b16 %v405
        %v1399 = vunpack.c.h.b16 %v405
        %v1400 = vpack.c.b16 %v1340, %v1336
        %v1401 = vpack.c.b16 %v1341, %v1337
        %v1402 = vpack.c.b16 %v1342, %v1338
        %v1403 = vpack.c.b16 %v1343, %v1339
        %v1404 = vpack.c.b16 %v1348, %v1344
        %v1405 = vpack.c.b16 %v1349, %v1345
        %v1406 = vpack.c.b16 %v1350, %v1346
        %v1407 = vpack.c.b16 %v1351, %v1347
        %v1408 = vpack.c.b16 %v1356, %v1352
        %v1409 = vpack.c.b16 %v1357, %v1353
        %v1410 = vpack.c.b16 %v1358, %v1354
        %v1411 = vpack.c.b16 %v1359, %v1355
        %v1412 = vpack.c.b16 %v1364, %v1360
        %v1413 = vpack.c.b16 %v1365, %v1361
        %v1414 = vpack.c.b16 %v1366, %v1362
        %v1415 = vpack.c.b16 %v1367, %v1363
        %v1416 = vpack.c.b16 %v1372, %v1368
        %v1417 = vpack.c.b16 %v1373, %v1369
        %v1418 = vpack.c.b16 %v1374, %v1370
        %v1419 = vpack.c.b16 %v1375, %v1371
        %v1420 = vpack.c.b16 %v1380, %v1376
        %v1421 = vpack.c.b16 %v1381, %v1377
        %v1422 = vpack.c.b16 %v1382, %v1378
        %v1423 = vpack.c.b16 %v1383, %v1379
        %v1424 = vpack.c.b16 %v1388, %v1384
        %v1425 = vpack.c.b16 %v1389, %v1385
        %v1426 = vpack.c.b16 %v1390, %v1386
        %v1427 = vpack.c.b16 %v1391, %v1387
        %v1428 = vpack.c.b16 %v1396, %v1392
        %v1429 = vpack.c.b16 %v1397, %v1393
        %v1430 = vpack.c.b16 %v1398, %v1394
        %v1431 = vpack.c.b16 %v1399, %v1395
        %1464 = vmatpush.bf16.msra.mxu0 %v1428
        %1465 = vmatpush.bf16.msra.mxu0 %v1424
        %1466 = vmatpush.bf16.msra.mxu0 %v1420
        %1467 = vmatpush.bf16.msra.mxu0 %v1416
        %1468 = vmatpush.bf16.msra.mxu0 %v1412
        %1469 = vmatpush.bf16.msra.mxu0 %v1408
        %1470 = vmatpush.bf16.msra.mxu0 %v1404
        %1471 = vmatpush.bf16.msra.mxu0 %v1400
        %1472 = vmatmul.bf16.gmra.mxu0 0
        %v1473 = vpop.f32.mrf.mxu0
        %v1474 = vadd.f32 %v1296, %v1473
        %v1475 = vpop.f32.mrf.mxu0
        %v1476 = vadd.f32 %v1300, %v1475
        %1477 = vdwg.mxu0
        %1478 = vmatpush.bf16.msra.mxu0 %v1429
        %1479 = vmatpush.bf16.msra.mxu0 %v1425
        %1480 = vmatpush.bf16.msra.mxu0 %v1421
        %1481 = vmatpush.bf16.msra.mxu0 %v1417
        %1482 = vmatpush.bf16.msra.mxu0 %v1413
        %1483 = vmatpush.bf16.msra.mxu0 %v1409
        %1484 = vmatpush.bf16.msra.mxu0 %v1405
        %1485 = vmatpush.bf16.msra.mxu0 %v1401
        %1486 = vmatmul.bf16.gmra.mxu0 0
        %v1487 = vpop.f32.mrf.mxu0
        %v1488 = vadd.f32 %v1297, %v1487
        %v1489 = vpop.f32.mrf.mxu0
        %v1490 = vadd.f32 %v1301, %v1489
        %1491 = vdwg.mxu0
        %1492 = vmatpush.bf16.msra.mxu0 %v1430
        %1493 = vmatpush.bf16.msra.mxu0 %v1426
        %1494 = vmatpush.bf16.msra.mxu0 %v1422
        %1495 = vmatpush.bf16.msra.mxu0 %v1418
        %1496 = vmatpush.bf16.msra.mxu0 %v1414
        %1497 = vmatpush.bf16.msra.mxu0 %v1410
        %1498 = vmatpush.bf16.msra.mxu0 %v1406
        %1499 = vmatpush.bf16.msra.mxu0 %v1402
        %1500 = vmatmul.bf16.gmra.mxu0 0
        %v1501 = vpop.f32.mrf.mxu0
        %v1502 = vadd.f32 %v1298, %v1501
        %v1503 = vpop.f32.mrf.mxu0
        %v1504 = vadd.f32 %v1302, %v1503
        %1505 = vdwg.mxu0
        %1506 = vmatpush.bf16.msra.mxu0 %v1431
        %1507 = vmatpush.bf16.msra.mxu0 %v1427
        %1508 = vmatpush.bf16.msra.mxu0 %v1423
        %1509 = vmatpush.bf16.msra.mxu0 %v1419
        %1510 = vmatpush.bf16.msra.mxu0 %v1415
        %1511 = vmatpush.bf16.msra.mxu0 %v1411
        %1512 = vmatpush.bf16.msra.mxu0 %v1407
        %1513 = vmatpush.bf16.msra.mxu0 %v1403
        %1514 = vmatmul.bf16.gmra.mxu0 0
        %v1515 = vpop.f32.mrf.mxu0
        %v1516 = vadd.f32 %v1299, %v1515
        %v1517 = vpop.f32.mrf.mxu0
        %v1518 = vadd.f32 %v1303, %v1517
        %1519 = vdwg.mxu0
        %v1520 = vmul.f32 %v1474, 0.5
        %v1521 = vmul.f32 %v1476, 0.5
        %v1522 = vtanh.pop %v1520
        %v1523 = vtanh.pop %v1521
        %v1524 = vadd.f32 %v1522, 1.0
        %v1525 = vadd.f32 %v1523, 1.0
        %v1526 = vmul.f32 %v1524, 0.5
        %v1527 = vmul.f32 %v1525, 0.5
        %v1528 = vmul.f32 %v1488, 0.5
        %v1529 = vmul.f32 %v1490, 0.5
        %v1530 = vtanh.pop %v1528
        %v1531 = vtanh.pop %v1529
        %v1532 = vadd.f32 %v1530, 1.0
        %v1533 = vadd.f32 %v1531, 1.0
        %v1534 = vmul.f32 %v1532, 0.5
        %v1535 = vmul.f32 %v1533, 0.5
        %v1536 = vtanh.pop %v1502
        %v1537 = vtanh.pop %v1504
        %v1538 = vmul.f32 %v1516, 0.5
        %v1539 = vmul.f32 %v1518, 0.5
        %v1540 = vtanh.pop %v1538
        %v1541 = vtanh.pop %v1539
        %v1542 = vadd.f32 %v1540, 1.0
        %v1543 = vadd.f32 %v1541, 1.0
        %v1544 = vmul.f32 %v1542, 0.5
        %v1545 = vmul.f32 %v1543, 0.5
        %v1546 = vmul.f32 %v1534, 0.0
        %v1547 = vmul.f32 %v1535, 0.0
        %v1548 = vmul.f32 %v1526, %v1536
        %v1549 = vmul.f32 %v1527, %v1537
        %v1550 = vadd.f32 %v1546, %v1548
        %v1551 = vadd.f32 %v1547, %v1549
        %v1552 = vtanh.pop %v1550
        %v1553 = vtanh.pop %v1551
        %v1554 = vmul.f32 %v1544, %v1552
        %v1555 = vmul.f32 %v1545, %v1553
        %vm1556 = vcmp.gt.s32.totalorder %v372, 0
        %vm1557 = vcmp.gt.s32.totalorder %v373, 0
        %v1558 = vsel %vm1556, 1, 0
        %v1559 = vsel %vm1557, 1, 0
        %1560 = vset.pattern.permute.xlu0 0
        %1561 = vperm.xlu0 %1560, %v1558
        %v1562 = vpop.permute.xlu0 %1561
        %1563 = vset.pattern.permute.xlu0 0
        %1564 = vperm.xlu0 %1563, %v1559
        %v1565 = vpop.permute.xlu0 %1564
        %vm1566 = vcmp.eq.s32.totalorder %v1562, 1
        %vm1567 = vcmp.eq.s32.totalorder %v1565, 1
        %v1568 = vsel %vm1566, %v1554, 0.0
        %v1569 = vsel %vm1567, %v1555, 0.0
        %v1570 = vsel %vm1566, %v1550, 0.0
        %v1571 = vsel %vm1567, %v1551, 0.0
        %s1572 = scalar_lea.vmem [#allocation3], 320
        %v1573 = vld [vmem:[%s1572] sm:$0xff]
        %v1574 = vld [vmem:[%s1572 + $0x8] sm:$0xff]
        %v1575 = vld [vmem:[%s1572 + $0x10] sm:$0xff]
        %v1576 = vld [vmem:[%s1572 + $0x18] sm:$0xff]
        %v1577 = vld [vmem:[%s1572 + $0x20] sm:$0xff]
        %v1578 = vld [vmem:[%s1572 + $0x28] sm:$0xff]
        %v1579 = vld [vmem:[%s1572 + $0x30] sm:$0xff]
        %v1580 = vld [vmem:[%s1572 + $0x38] sm:$0xff]
        %v1613 = vunpack.c.l.b16 %v406
        %v1614 = vunpack.c.h.b16 %v406
        %v1615 = vunpack.c.l.b16 %v407
        %v1616 = vunpack.c.h.b16 %v407
        %v1617 = vunpack.c.l.b16 %v408
        %v1618 = vunpack.c.h.b16 %v408
        %v1619 = vunpack.c.l.b16 %v409
        %v1620 = vunpack.c.h.b16 %v409
        %v1621 = vunpack.c.l.b16 %v410
        %v1622 = vunpack.c.h.b16 %v410
        %v1623 = vunpack.c.l.b16 %v411
        %v1624 = vunpack.c.h.b16 %v411
        %v1625 = vunpack.c.l.b16 %v412
        %v1626 = vunpack.c.h.b16 %v412
        %v1627 = vunpack.c.l.b16 %v413
        %v1628 = vunpack.c.h.b16 %v413
        %v1629 = vunpack.c.l.b16 %v414
        %v1630 = vunpack.c.h.b16 %v414
        %v1631 = vunpack.c.l.b16 %v415
        %v1632 = vunpack.c.h.b16 %v415
        %v1633 = vunpack.c.l.b16 %v416
        %v1634 = vunpack.c.h.b16 %v416
        %v1635 = vunpack.c.l.b16 %v417
        %v1636 = vunpack.c.h.b16 %v417
        %v1637 = vunpack.c.l.b16 %v418
        %v1638 = vunpack.c.h.b16 %v418
        %v1639 = vunpack.c.l.b16 %v419
        %v1640 = vunpack.c.h.b16 %v419
        %v1641 = vunpack.c.l.b16 %v420
        %v1642 = vunpack.c.h.b16 %v420
        %v1643 = vunpack.c.l.b16 %v421
        %v1644 = vunpack.c.h.b16 %v421
        %v1645 = vunpack.c.l.b16 %v422
        %v1646 = vunpack.c.h.b16 %v422
        %v1647 = vunpack.c.l.b16 %v423
        %v1648 = vunpack.c.h.b16 %v423
        %v1649 = vunpack.c.l.b16 %v424
        %v1650 = vunpack.c.h.b16 %v424
        %v1651 = vunpack.c.l.b16 %v425
        %v1652 = vunpack.c.h.b16 %v425
        %v1653 = vunpack.c.l.b16 %v426
        %v1654 = vunpack.c.h.b16 %v426
        %v1655 = vunpack.c.l.b16 %v427
        %v1656 = vunpack.c.h.b16 %v427
        %v1657 = vunpack.c.l.b16 %v428
        %v1658 = vunpack.c.h.b16 %v428
        %v1659 = vunpack.c.l.b16 %v429
        %v1660 = vunpack.c.h.b16 %v429
        %v1661 = vunpack.c.l.b16 %v430
        %v1662 = vunpack.c.h.b16 %v430
        %v1663 = vunpack.c.l.b16 %v431
        %v1664 = vunpack.c.h.b16 %v431
        %v1665 = vunpack.c.l.b16 %v432
        %v1666 = vunpack.c.h.b16 %v432
        %v1667 = vunpack.c.l.b16 %v433
        %v1668 = vunpack.c.h.b16 %v433
        %v1669 = vunpack.c.l.b16 %v434
        %v1670 = vunpack.c.h.b16 %v434
        %v1671 = vunpack.c.l.b16 %v435
        %v1672 = vunpack.c.h.b16 %v435
        %v1673 = vunpack.c.l.b16 %v436
        %v1674 = vunpack.c.h.b16 %v436
        %v1675 = vunpack.c.l.b16 %v437
        %v1676 = vunpack.c.h.b16 %v437
        %v1677 = vpack.c.b16 %v1617, %v1613
        %v1678 = vpack.c.b16 %v1618, %v1614
        %v1679 = vpack.c.b16 %v1619, %v1615
        %v1680 = vpack.c.b16 %v1620, %v1616
        %v1681 = vpack.c.b16 %v1625, %v1621
        %v1682 = vpack.c.b16 %v1626, %v1622
        %v1683 = vpack.c.b16 %v1627, %v1623
        %v1684 = vpack.c.b16 %v1628, %v1624
        %v1685 = vpack.c.b16 %v1633, %v1629
        %v1686 = vpack.c.b16 %v1634, %v1630
        %v1687 = vpack.c.b16 %v1635, %v1631
        %v1688 = vpack.c.b16 %v1636, %v1632
        %v1689 = vpack.c.b16 %v1641, %v1637
        %v1690 = vpack.c.b16 %v1642, %v1638
        %v1691 = vpack.c.b16 %v1643, %v1639
        %v1692 = vpack.c.b16 %v1644, %v1640
        %v1693 = vpack.c.b16 %v1649, %v1645
        %v1694 = vpack.c.b16 %v1650, %v1646
        %v1695 = vpack.c.b16 %v1651, %v1647
        %v1696 = vpack.c.b16 %v1652, %v1648
        %v1697 = vpack.c.b16 %v1657, %v1653
        %v1698 = vpack.c.b16 %v1658, %v1654
        %v1699 = vpack.c.b16 %v1659, %v1655
        %v1700 = vpack.c.b16 %v1660, %v1656
        %v1701 = vpack.c.b16 %v1665, %v1661
        %v1702 = vpack.c.b16 %v1666, %v1662
        %v1703 = vpack.c.b16 %v1667, %v1663
        %v1704 = vpack.c.b16 %v1668, %v1664
        %v1705 = vpack.c.b16 %v1673, %v1669
        %v1706 = vpack.c.b16 %v1674, %v1670
        %v1707 = vpack.c.b16 %v1675, %v1671
        %v1708 = vpack.c.b16 %v1676, %v1672
        %1741 = vmatpush.bf16.msra.mxu0 %v1705
        %1742 = vmatpush.bf16.msra.mxu0 %v1701
        %1743 = vmatpush.bf16.msra.mxu0 %v1697
        %1744 = vmatpush.bf16.msra.mxu0 %v1693
        %1745 = vmatpush.bf16.msra.mxu0 %v1689
        %1746 = vmatpush.bf16.msra.mxu0 %v1685
        %1747 = vmatpush.bf16.msra.mxu0 %v1681
        %1748 = vmatpush.bf16.msra.mxu0 %v1677
        %1749 = vmatmul.bf16.gmra.mxu0 0
        %v1750 = vpop.f32.mrf.mxu0
        %v1751 = vadd.f32 %v1573, %v1750
        %v1752 = vpop.f32.mrf.mxu0
        %v1753 = vadd.f32 %v1577, %v1752
        %1754 = vdwg.mxu0
        %1755 = vmatpush.bf16.msra.mxu0 %v1706
        %1756 = vmatpush.bf16.msra.mxu0 %v1702
        %1757 = vmatpush.bf16.msra.mxu0 %v1698
        %1758 = vmatpush.bf16.msra.mxu0 %v1694
        %1759 = vmatpush.bf16.msra.mxu0 %v1690
        %1760 = vmatpush.bf16.msra.mxu0 %v1686
        %1761 = vmatpush.bf16.msra.mxu0 %v1682
        %1762 = vmatpush.bf16.msra.mxu0 %v1678
        %1763 = vmatmul.bf16.gmra.mxu0 0
        %v1764 = vpop.f32.mrf.mxu0
        %v1765 = vadd.f32 %v1574, %v1764
        %v1766 = vpop.f32.mrf.mxu0
        %v1767 = vadd.f32 %v1578, %v1766
        %1768 = vdwg.mxu0
        %1769 = vmatpush.bf16.msra.mxu0 %v1707
        %1770 = vmatpush.bf16.msra.mxu0 %v1703
        %1771 = vmatpush.bf16.msra.mxu0 %v1699
        %1772 = vmatpush.bf16.msra.mxu0 %v1695
        %1773 = vmatpush.bf16.msra.mxu0 %v1691
        %1774 = vmatpush.bf16.msra.mxu0 %v1687
        %1775 = vmatpush.bf16.msra.mxu0 %v1683
        %1776 = vmatpush.bf16.msra.mxu0 %v1679
        %1777 = vmatmul.bf16.gmra.mxu0 0
        %v1778 = vpop.f32.mrf.mxu0
        %v1779 = vadd.f32 %v1575, %v1778
        %v1780 = vpop.f32.mrf.mxu0
        %v1781 = vadd.f32 %v1579, %v1780
        %1782 = vdwg.mxu0
        %1783 = vmatpush.bf16.msra.mxu0 %v1708
        %1784 = vmatpush.bf16.msra.mxu0 %v1704
        %1785 = vmatpush.bf16.msra.mxu0 %v1700
        %1786 = vmatpush.bf16.msra.mxu0 %v1696
        %1787 = vmatpush.bf16.msra.mxu0 %v1692
        %1788 = vmatpush.bf16.msra.mxu0 %v1688
        %1789 = vmatpush.bf16.msra.mxu0 %v1684
        %1790 = vmatpush.bf16.msra.mxu0 %v1680
        %1791 = vmatmul.bf16.gmra.mxu0 0
        %v1792 = vpop.f32.mrf.mxu0
        %v1793 = vadd.f32 %v1576, %v1792
        %v1794 = vpop.f32.mrf.mxu0
        %v1795 = vadd.f32 %v1580, %v1794
        %1796 = vdwg.mxu0
        %v1797 = vmul.f32 %v1751, 0.5
        %v1798 = vmul.f32 %v1753, 0.5
        %v1799 = vtanh.pop %v1797
        %v1800 = vtanh.pop %v1798
        %v1801 = vadd.f32 %v1799, 1.0
        %v1802 = vadd.f32 %v1800, 1.0
        %v1803 = vmul.f32 %v1801, 0.5
        %v1804 = vmul.f32 %v1802, 0.5
        %v1805 = vmul.f32 %v1765, 0.5
        %v1806 = vmul.f32 %v1767, 0.5
        %v1807 = vtanh.pop %v1805
        %v1808 = vtanh.pop %v1806
        %v1809 = vadd.f32 %v1807, 1.0
        %v1810 = vadd.f32 %v1808, 1.0
        %v1811 = vmul.f32 %v1809, 0.5
        %v1812 = vmul.f32 %v1810, 0.5
        %v1813 = vtanh.pop %v1779
        %v1814 = vtanh.pop %v1781
        %v1815 = vmul.f32 %v1793, 0.5
        %v1816 = vmul.f32 %v1795, 0.5
        %v1817 = vtanh.pop %v1815
        %v1818 = vtanh.pop %v1816
        %v1819 = vadd.f32 %v1817, 1.0
        %v1820 = vadd.f32 %v1818, 1.0
        %v1821 = vmul.f32 %v1819, 0.5
        %v1822 = vmul.f32 %v1820, 0.5
        %v1823 = vmul.f32 %v1811, 0.0
        %v1824 = vmul.f32 %v1812, 0.0
        %v1825 = vmul.f32 %v1803, %v1813
        %v1826 = vmul.f32 %v1804, %v1814
        %v1827 = vadd.f32 %v1823, %v1825
        %v1828 = vadd.f32 %v1824, %v1826
        %v1829 = vtanh.pop %v1827
        %v1830 = vtanh.pop %v1828
        %v1831 = vmul.f32 %v1821, %v1829
        %v1832 = vmul.f32 %v1822, %v1830
        %vm1833 = vcmp.gt.s32.totalorder %v372, 5
        %vm1834 = vcmp.gt.s32.totalorder %v373, 5
        %v1835 = vsel %vm1833, 1, 0
        %v1836 = vsel %vm1834, 1, 0
        %1837 = vset.pattern.permute.xlu0 0
        %1838 = vperm.xlu0 %1837, %v1835
        %v1839 = vpop.permute.xlu0 %1838
        %1840 = vset.pattern.permute.xlu0 0
        %1841 = vperm.xlu0 %1840, %v1836
        %v1842 = vpop.permute.xlu0 %1841
        %vm1843 = vcmp.eq.s32.totalorder %v1839, 1
        %vm1844 = vcmp.eq.s32.totalorder %v1842, 1
        %v1845 = vsel %vm1843, %v1831, 0.0
        %v1846 = vsel %vm1844, %v1832, 0.0
        %v1847 = vsel %vm1843, %v1827, 0.0
        %v1848 = vsel %vm1844, %v1828, 0.0
        %v1849 = vpack.c.bf16 %v1569, %v1568
        %s1850 = scalar_lea.vmem [#allocation2], 64
        %v1851 = vld [vmem:[%s1850] sm:$0xff]
        %v1852 = vld [vmem:[%s1850 + $0x8] sm:$0xff]
        %v1853 = vld [vmem:[%s1850 + $0x10] sm:$0xff]
        %v1854 = vld [vmem:[%s1850 + $0x18] sm:$0xff]
        %v1855 = vld [vmem:[%s1850 + $0x20] sm:$0xff]
        %v1856 = vld [vmem:[%s1850 + $0x28] sm:$0xff]
        %v1857 = vld [vmem:[%s1850 + $0x30] sm:$0xff]
        %v1858 = vld [vmem:[%s1850 + $0x38] sm:$0xff]
        %1859 = vmatpush.bf16.msra.mxu0 %v1428
        %1860 = vmatpush.bf16.msra.mxu0 %v1424
        %1861 = vmatpush.bf16.msra.mxu0 %v1420
        %1862 = vmatpush.bf16.msra.mxu0 %v1416
        %1863 = vmatpush.bf16.msra.mxu0 %v1412
        %1864 = vmatpush.bf16.msra.mxu0 %v1408
        %1865 = vmatpush.bf16.msra.mxu0 %v1404
        %1866 = vmatpush.bf16.msra.mxu0 %v1400
        %1867 = vmatmul.bf16.gmra.mxu0 %v1849
        %v1868 = vpop.f32.mrf.mxu0
        %v1869 = vadd.f32 %v1851, %v1868
        %v1870 = vpop.f32.mrf.mxu0
        %v1871 = vadd.f32 %v1855, %v1870
        %1872 = vdwg.mxu0
        %1873 = vmatpush.bf16.msra.mxu0 %v1429
        %1874 = vmatpush.bf16.msra.mxu0 %v1425
        %1875 = vmatpush.bf16.msra.mxu0 %v1421
        %1876 = vmatpush.bf16.msra.mxu0 %v1417
        %1877 = vmatpush.bf16.msra.mxu0 %v1413
        %1878 = vmatpush.bf16.msra.mxu0 %v1409
        %1879 = vmatpush.bf16.msra.mxu0 %v1405
        %1880 = vmatpush.bf16.msra.mxu0 %v1401
        %1881 = vmatmul.bf16.gmra.mxu0 %v1849
        %v1882 = vpop.f32.mrf.mxu0
        %v1883 = vadd.f32 %v1852, %v1882
        %v1884 = vpop.f32.mrf.mxu0
        %v1885 = vadd.f32 %v1856, %v1884
        %1886 = vdwg.mxu0
        %1887 = vmatpush.bf16.msra.mxu0 %v1430
        %1888 = vmatpush.bf16.msra.mxu0 %v1426
        %1889 = vmatpush.bf16.msra.mxu0 %v1422
        %1890 = vmatpush.bf16.msra.mxu0 %v1418
        %1891 = vmatpush.bf16.msra.mxu0 %v1414
        %1892 = vmatpush.bf16.msra.mxu0 %v1410
        %1893 = vmatpush.bf16.msra.mxu0 %v1406
        %1894 = vmatpush.bf16.msra.mxu0 %v1402
        %1895 = vmatmul.bf16.gmra.mxu0 %v1849
        %v1896 = vpop.f32.mrf.mxu0
        %v1897 = vadd.f32 %v1853, %v1896
        %v1898 = vpop.f32.mrf.mxu0
        %v1899 = vadd.f32 %v1857, %v1898
        %1900 = vdwg.mxu0
        %1901 = vmatpush.bf16.msra.mxu0 %v1431
        %1902 = vmatpush.bf16.msra.mxu0 %v1427
        %1903 = vmatpush.bf16.msra.mxu0 %v1423
        %1904 = vmatpush.bf16.msra.mxu0 %v1419
        %1905 = vmatpush.bf16.msra.mxu0 %v1415
        %1906 = vmatpush.bf16.msra.mxu0 %v1411
        %1907 = vmatpush.bf16.msra.mxu0 %v1407
        %1908 = vmatpush.bf16.msra.mxu0 %v1403
        %1909 = vmatmul.bf16.gmra.mxu0 %v1849
        %v1910 = vpop.f32.mrf.mxu0
        %v1911 = vadd.f32 %v1854, %v1910
        %v1912 = vpop.f32.mrf.mxu0
        %v1913 = vadd.f32 %v1858, %v1912
        %1914 = vdwg.mxu0
        %v1915 = vmul.f32 %v1869, 0.5
        %v1916 = vmul.f32 %v1871, 0.5
        %v1917 = vtanh.pop %v1915
        %v1918 = vtanh.pop %v1916
        %v1919 = vadd.f32 %v1917, 1.0
        %v1920 = vadd.f32 %v1918, 1.0
        %v1921 = vmul.f32 %v1919, 0.5
        %v1922 = vmul.f32 %v1920, 0.5
        %v1923 = vmul.f32 %v1883, 0.5
        %v1924 = vmul.f32 %v1885, 0.5
        %v1925 = vtanh.pop %v1923
        %v1926 = vtanh.pop %v1924
        %v1927 = vadd.f32 %v1925, 1.0
        %v1928 = vadd.f32 %v1926, 1.0
        %v1929 = vmul.f32 %v1927, 0.5
        %v1930 = vmul.f32 %v1928, 0.5
        %v1931 = vtanh.pop %v1897
        %v1932 = vtanh.pop %v1899
        %v1933 = vmul.f32 %v1911, 0.5
        %v1934 = vmul.f32 %v1913, 0.5
        %v1935 = vtanh.pop %v1933
        %v1936 = vtanh.pop %v1934
        %v1937 = vadd.f32 %v1935, 1.0
        %v1938 = vadd.f32 %v1936, 1.0
        %v1939 = vmul.f32 %v1937, 0.5
        %v1940 = vmul.f32 %v1938, 0.5
        %v1941 = vmul.f32 %v1929, %v1570
        %v1942 = vmul.f32 %v1930, %v1571
        %v1943 = vmul.f32 %v1921, %v1931
        %v1944 = vmul.f32 %v1922, %v1932
        %v1945 = vadd.f32 %v1941, %v1943
        %v1946 = vadd.f32 %v1942, %v1944
        %v1947 = vtanh.pop %v1945
        %v1948 = vtanh.pop %v1946
        %v1949 = vmul.f32 %v1939, %v1947
        %v1950 = vmul.f32 %v1940, %v1948
        %vm1951 = vcmp.gt.s32.totalorder %v372, 1
        %vm1952 = vcmp.gt.s32.totalorder %v373, 1
        %v1953 = vsel %vm1951, 1, 0
        %v1954 = vsel %vm1952, 1, 0
        %1955 = vset.pattern.permute.xlu0 0
        %1956 = vperm.xlu0 %1955, %v1953
        %v1957 = vpop.permute.xlu0 %1956
        %1958 = vset.pattern.permute.xlu0 0
        %1959 = vperm.xlu0 %1958, %v1954
        %v1960 = vpop.permute.xlu0 %1959
        %vm1961 = vcmp.eq.s32.totalorder %v1957, 1
        %vm1962 = vcmp.eq.s32.totalorder %v1960, 1
        %v1963 = vsel %vm1961, %v1949, %v1568
        %v1964 = vsel %vm1962, %v1950, %v1569
        %v1965 = vsel %vm1961, %v1945, %v1570
        %v1966 = vsel %vm1962, %v1946, %v1571
        %v1967 = vpack.c.bf16 %v1846, %v1845
        %s1968 = scalar_lea.vmem [#allocation3], 256
        %v1969 = vld [vmem:[%s1968] sm:$0xff]
        %v1970 = vld [vmem:[%s1968 + $0x8] sm:$0xff]
        %v1971 = vld [vmem:[%s1968 + $0x10] sm:$0xff]
        %v1972 = vld [vmem:[%s1968 + $0x18] sm:$0xff]
        %v1973 = vld [vmem:[%s1968 + $0x20] sm:$0xff]
        %v1974 = vld [vmem:[%s1968 + $0x28] sm:$0xff]
        %v1975 = vld [vmem:[%s1968 + $0x30] sm:$0xff]
        %v1976 = vld [vmem:[%s1968 + $0x38] sm:$0xff]
        %1977 = vmatpush.bf16.msra.mxu0 %v1705
        %1978 = vmatpush.bf16.msra.mxu0 %v1701
        %1979 = vmatpush.bf16.msra.mxu0 %v1697
        %1980 = vmatpush.bf16.msra.mxu0 %v1693
        %1981 = vmatpush.bf16.msra.mxu0 %v1689
        %1982 = vmatpush.bf16.msra.mxu0 %v1685
        %1983 = vmatpush.bf16.msra.mxu0 %v1681
        %1984 = vmatpush.bf16.msra.mxu0 %v1677
        %1985 = vmatmul.bf16.gmra.mxu0 %v1967
        %v1986 = vpop.f32.mrf.mxu0
        %v1987 = vadd.f32 %v1969, %v1986
        %v1988 = vpop.f32.mrf.mxu0
        %v1989 = vadd.f32 %v1973, %v1988
        %1990 = vdwg.mxu0
        %1991 = vmatpush.bf16.msra.mxu0 %v1706
        %1992 = vmatpush.bf16.msra.mxu0 %v1702
        %1993 = vmatpush.bf16.msra.mxu0 %v1698
        %1994 = vmatpush.bf16.msra.mxu0 %v1694
        %1995 = vmatpush.bf16.msra.mxu0 %v1690
        %1996 = vmatpush.bf16.msra.mxu0 %v1686
        %1997 = vmatpush.bf16.msra.mxu0 %v1682
        %1998 = vmatpush.bf16.msra.mxu0 %v1678
        %1999 = vmatmul.bf16.gmra.mxu0 %v1967
        %v2000 = vpop.f32.mrf.mxu0
        %v2001 = vadd.f32 %v1970, %v2000
        %v2002 = vpop.f32.mrf.mxu0
        %v2003 = vadd.f32 %v1974, %v2002
        %2004 = vdwg.mxu0
        %2005 = vmatpush.bf16.msra.mxu0 %v1707
        %2006 = vmatpush.bf16.msra.mxu0 %v1703
        %2007 = vmatpush.bf16.msra.mxu0 %v1699
        %2008 = vmatpush.bf16.msra.mxu0 %v1695
        %2009 = vmatpush.bf16.msra.mxu0 %v1691
        %2010 = vmatpush.bf16.msra.mxu0 %v1687
        %2011 = vmatpush.bf16.msra.mxu0 %v1683
        %2012 = vmatpush.bf16.msra.mxu0 %v1679
        %2013 = vmatmul.bf16.gmra.mxu0 %v1967
        %v2014 = vpop.f32.mrf.mxu0
        %v2015 = vadd.f32 %v1971, %v2014
        %v2016 = vpop.f32.mrf.mxu0
        %v2017 = vadd.f32 %v1975, %v2016
        %2018 = vdwg.mxu0
        %2019 = vmatpush.bf16.msra.mxu0 %v1708
        %2020 = vmatpush.bf16.msra.mxu0 %v1704
        %2021 = vmatpush.bf16.msra.mxu0 %v1700
        %2022 = vmatpush.bf16.msra.mxu0 %v1696
        %2023 = vmatpush.bf16.msra.mxu0 %v1692
        %2024 = vmatpush.bf16.msra.mxu0 %v1688
        %2025 = vmatpush.bf16.msra.mxu0 %v1684
        %2026 = vmatpush.bf16.msra.mxu0 %v1680
        %2027 = vmatmul.bf16.gmra.mxu0 %v1967
        %v2028 = vpop.f32.mrf.mxu0
        %v2029 = vadd.f32 %v1972, %v2028
        %v2030 = vpop.f32.mrf.mxu0
        %v2031 = vadd.f32 %v1976, %v2030
        %2032 = vdwg.mxu0
        %v2033 = vmul.f32 %v1987, 0.5
        %v2034 = vmul.f32 %v1989, 0.5
        %v2035 = vtanh.pop %v2033
        %v2036 = vtanh.pop %v2034
        %v2037 = vadd.f32 %v2035, 1.0
        %v2038 = vadd.f32 %v2036, 1.0
        %v2039 = vmul.f32 %v2037, 0.5
        %v2040 = vmul.f32 %v2038, 0.5
        %v2041 = vmul.f32 %v2001, 0.5
        %v2042 = vmul.f32 %v2003, 0.5
        %v2043 = vtanh.pop %v2041
        %v2044 = vtanh.pop %v2042
        %v2045 = vadd.f32 %v2043, 1.0
        %v2046 = vadd.f32 %v2044, 1.0
        %v2047 = vmul.f32 %v2045, 0.5
        %v2048 = vmul.f32 %v2046, 0.5
        %v2049 = vtanh.pop %v2015
        %v2050 = vtanh.pop %v2017
        %v2051 = vmul.f32 %v2029, 0.5
        %v2052 = vmul.f32 %v2031, 0.5
        %v2053 = vtanh.pop %v2051
        %v2054 = vtanh.pop %v2052
        %v2055 = vadd.f32 %v2053, 1.0
        %v2056 = vadd.f32 %v2054, 1.0
        %v2057 = vmul.f32 %v2055, 0.5
        %v2058 = vmul.f32 %v2056, 0.5
        %v2059 = vmul.f32 %v2047, %v1847
        %v2060 = vmul.f32 %v2048, %v1848
        %v2061 = vmul.f32 %v2039, %v2049
        %v2062 = vmul.f32 %v2040, %v2050
        %v2063 = vadd.f32 %v2059, %v2061
        %v2064 = vadd.f32 %v2060, %v2062
        %v2065 = vtanh.pop %v2063
        %v2066 = vtanh.pop %v2064
        %v2067 = vmul.f32 %v2057, %v2065
        %v2068 = vmul.f32 %v2058, %v2066
        %vm2069 = vcmp.gt.s32.totalorder %v372, 4
        %vm2070 = vcmp.gt.s32.totalorder %v373, 4
        %v2071 = vsel %vm2069, 1, 0
        %v2072 = vsel %vm2070, 1, 0
        %2073 = vset.pattern.permute.xlu0 0
        %2074 = vperm.xlu0 %2073, %v2071
        %v2075 = vpop.permute.xlu0 %2074
        %2076 = vset.pattern.permute.xlu0 0
        %2077 = vperm.xlu0 %2076, %v2072
        %v2078 = vpop.permute.xlu0 %2077
        %vm2079 = vcmp.eq.s32.totalorder %v2075, 1
        %vm2080 = vcmp.eq.s32.totalorder %v2078, 1
        %v2081 = vsel %vm2079, %v2067, %v1845
        %v2082 = vsel %vm2080, %v2068, %v1846
        %v2083 = vsel %vm2079, %v2063, %v1847
        %v2084 = vsel %vm2080, %v2064, %v1848
        %v2085 = vpack.c.bf16 %v1964, %v1963
        %s2086 = scalar_lea.vmem [#allocation2], 128
        %v2087 = vld [vmem:[%s2086] sm:$0xff]
        %v2088 = vld [vmem:[%s2086 + $0x8] sm:$0xff]
        %v2089 = vld [vmem:[%s2086 + $0x10] sm:$0xff]
        %v2090 = vld [vmem:[%s2086 + $0x18] sm:$0xff]
        %v2091 = vld [vmem:[%s2086 + $0x20] sm:$0xff]
        %v2092 = vld [vmem:[%s2086 + $0x28] sm:$0xff]
        %v2093 = vld [vmem:[%s2086 + $0x30] sm:$0xff]
        %v2094 = vld [vmem:[%s2086 + $0x38] sm:$0xff]
        %2095 = vmatpush.bf16.msra.mxu0 %v1428
        %2096 = vmatpush.bf16.msra.mxu0 %v1424
        %2097 = vmatpush.bf16.msra.mxu0 %v1420
        %2098 = vmatpush.bf16.msra.mxu0 %v1416
        %2099 = vmatpush.bf16.msra.mxu0 %v1412
        %2100 = vmatpush.bf16.msra.mxu0 %v1408
        %2101 = vmatpush.bf16.msra.mxu0 %v1404
        %2102 = vmatpush.bf16.msra.mxu0 %v1400
        %2103 = vmatmul.bf16.gmra.mxu0 %v2085
        %v2104 = vpop.f32.mrf.mxu0
        %v2105 = vadd.f32 %v2087, %v2104
        %v2106 = vpop.f32.mrf.mxu0
        %v2107 = vadd.f32 %v2091, %v2106
        %2108 = vdwg.mxu0
        %2109 = vmatpush.bf16.msra.mxu0 %v1429
        %2110 = vmatpush.bf16.msra.mxu0 %v1425
        %2111 = vmatpush.bf16.msra.mxu0 %v1421
        %2112 = vmatpush.bf16.msra.mxu0 %v1417
        %2113 = vmatpush.bf16.msra.mxu0 %v1413
        %2114 = vmatpush.bf16.msra.mxu0 %v1409
        %2115 = vmatpush.bf16.msra.mxu0 %v1405
        %2116 = vmatpush.bf16.msra.mxu0 %v1401
        %2117 = vmatmul.bf16.gmra.mxu0 %v2085
        %v2118 = vpop.f32.mrf.mxu0
        %v2119 = vadd.f32 %v2088, %v2118
        %v2120 = vpop.f32.mrf.mxu0
        %v2121 = vadd.f32 %v2092, %v2120
        %2122 = vdwg.mxu0
        %2123 = vmatpush.bf16.msra.mxu0 %v1430
        %2124 = vmatpush.bf16.msra.mxu0 %v1426
        %2125 = vmatpush.bf16.msra.mxu0 %v1422
        %2126 = vmatpush.bf16.msra.mxu0 %v1418
        %2127 = vmatpush.bf16.msra.mxu0 %v1414
        %2128 = vmatpush.bf16.msra.mxu0 %v1410
        %2129 = vmatpush.bf16.msra.mxu0 %v1406
        %2130 = vmatpush.bf16.msra.mxu0 %v1402
        %2131 = vmatmul.bf16.gmra.mxu0 %v2085
        %v2132 = vpop.f32.mrf.mxu0
        %v2133 = vadd.f32 %v2089, %v2132
        %v2134 = vpop.f32.mrf.mxu0
        %v2135 = vadd.f32 %v2093, %v2134
        %2136 = vdwg.mxu0
        %2137 = vmatpush.bf16.msra.mxu0 %v1431
        %2138 = vmatpush.bf16.msra.mxu0 %v1427
        %2139 = vmatpush.bf16.msra.mxu0 %v1423
        %2140 = vmatpush.bf16.msra.mxu0 %v1419
        %2141 = vmatpush.bf16.msra.mxu0 %v1415
        %2142 = vmatpush.bf16.msra.mxu0 %v1411
        %2143 = vmatpush.bf16.msra.mxu0 %v1407
        %2144 = vmatpush.bf16.msra.mxu0 %v1403
        %2145 = vmatmul.bf16.gmra.mxu0 %v2085
        %v2146 = vpop.f32.mrf.mxu0
        %v2147 = vadd.f32 %v2090, %v2146
        %v2148 = vpop.f32.mrf.mxu0
        %v2149 = vadd.f32 %v2094, %v2148
        %2150 = vdwg.mxu0
        %v2151 = vmul.f32 %v2105, 0.5
        %v2152 = vmul.f32 %v2107, 0.5
        %v2153 = vtanh.pop %v2151
        %v2154 = vtanh.pop %v2152
        %v2155 = vadd.f32 %v2153, 1.0
        %v2156 = vadd.f32 %v2154, 1.0
        %v2157 = vmul.f32 %v2155, 0.5
        %v2158 = vmul.f32 %v2156, 0.5
        %v2159 = vmul.f32 %v2119, 0.5
        %v2160 = vmul.f32 %v2121, 0.5
        %v2161 = vtanh.pop %v2159
        %v2162 = vtanh.pop %v2160
        %v2163 = vadd.f32 %v2161, 1.0
        %v2164 = vadd.f32 %v2162, 1.0
        %v2165 = vmul.f32 %v2163, 0.5
        %v2166 = vmul.f32 %v2164, 0.5
        %v2167 = vtanh.pop %v2133
        %v2168 = vtanh.pop %v2135
        %v2169 = vmul.f32 %v2147, 0.5
        %v2170 = vmul.f32 %v2149, 0.5
        %v2171 = vtanh.pop %v2169
        %v2172 = vtanh.pop %v2170
        %v2173 = vadd.f32 %v2171, 1.0
        %v2174 = vadd.f32 %v2172, 1.0
        %v2175 = vmul.f32 %v2173, 0.5
        %v2176 = vmul.f32 %v2174, 0.5
        %v2177 = vmul.f32 %v2165, %v1965
        %v2178 = vmul.f32 %v2166, %v1966
        %v2179 = vmul.f32 %v2157, %v2167
        %v2180 = vmul.f32 %v2158, %v2168
        %v2181 = vadd.f32 %v2177, %v2179
        %v2182 = vadd.f32 %v2178, %v2180
        %v2183 = vtanh.pop %v2181
        %v2184 = vtanh.pop %v2182
        %v2185 = vmul.f32 %v2175, %v2183
        %v2186 = vmul.f32 %v2176, %v2184
        %vm2187 = vcmp.gt.s32.totalorder %v372, 2
        %vm2188 = vcmp.gt.s32.totalorder %v373, 2
        %v2189 = vsel %vm2187, 1, 0
        %v2190 = vsel %vm2188, 1, 0
        %2191 = vset.pattern.permute.xlu0 0
        %2192 = vperm.xlu0 %2191, %v2189
        %v2193 = vpop.permute.xlu0 %2192
        %2194 = vset.pattern.permute.xlu0 0
        %2195 = vperm.xlu0 %2194, %v2190
        %v2196 = vpop.permute.xlu0 %2195
        %vm2197 = vcmp.eq.s32.totalorder %v2193, 1
        %vm2198 = vcmp.eq.s32.totalorder %v2196, 1
        %v2199 = vsel %vm2197, %v2185, %v1963
        %v2200 = vsel %vm2198, %v2186, %v1964
        %v2201 = vsel %vm2197, %v2181, %v1965
        %v2202 = vsel %vm2198, %v2182, %v1966
        %v2203 = vpack.c.bf16 %v2082, %v2081
        %s2204 = scalar_lea.vmem [#allocation3], 192
        %v2205 = vld [vmem:[%s2204] sm:$0xff]
        %v2206 = vld [vmem:[%s2204 + $0x8] sm:$0xff]
        %v2207 = vld [vmem:[%s2204 + $0x10] sm:$0xff]
        %v2208 = vld [vmem:[%s2204 + $0x18] sm:$0xff]
        %v2209 = vld [vmem:[%s2204 + $0x20] sm:$0xff]
        %v2210 = vld [vmem:[%s2204 + $0x28] sm:$0xff]
        %v2211 = vld [vmem:[%s2204 + $0x30] sm:$0xff]
        %v2212 = vld [vmem:[%s2204 + $0x38] sm:$0xff]
        %2213 = vmatpush.bf16.msra.mxu0 %v1705
        %2214 = vmatpush.bf16.msra.mxu0 %v1701
        %2215 = vmatpush.bf16.msra.mxu0 %v1697
        %2216 = vmatpush.bf16.msra.mxu0 %v1693
        %2217 = vmatpush.bf16.msra.mxu0 %v1689
        %2218 = vmatpush.bf16.msra.mxu0 %v1685
        %2219 = vmatpush.bf16.msra.mxu0 %v1681
        %2220 = vmatpush.bf16.msra.mxu0 %v1677
        %2221 = vmatmul.bf16.gmra.mxu0 %v2203
        %v2222 = vpop.f32.mrf.mxu0
        %v2223 = vadd.f32 %v2205, %v2222
        %v2224 = vpop.f32.mrf.mxu0
        %v2225 = vadd.f32 %v2209, %v2224
        %2226 = vdwg.mxu0
        %2227 = vmatpush.bf16.msra.mxu0 %v1706
        %2228 = vmatpush.bf16.msra.mxu0 %v1702
        %2229 = vmatpush.bf16.msra.mxu0 %v1698
        %2230 = vmatpush.bf16.msra.mxu0 %v1694
        %2231 = vmatpush.bf16.msra.mxu0 %v1690
        %2232 = vmatpush.bf16.msra.mxu0 %v1686
        %2233 = vmatpush.bf16.msra.mxu0 %v1682
        %2234 = vmatpush.bf16.msra.mxu0 %v1678
        %2235 = vmatmul.bf16.gmra.mxu0 %v2203
        %v2236 = vpop.f32.mrf.mxu0
        %v2237 = vadd.f32 %v2206, %v2236
        %v2238 = vpop.f32.mrf.mxu0
        %v2239 = vadd.f32 %v2210, %v2238
        %2240 = vdwg.mxu0
        %2241 = vmatpush.bf16.msra.mxu0 %v1707
        %2242 = vmatpush.bf16.msra.mxu0 %v1703
        %2243 = vmatpush.bf16.msra.mxu0 %v1699
        %2244 = vmatpush.bf16.msra.mxu0 %v1695
        %2245 = vmatpush.bf16.msra.mxu0 %v1691
        %2246 = vmatpush.bf16.msra.mxu0 %v1687
        %2247 = vmatpush.bf16.msra.mxu0 %v1683
        %2248 = vmatpush.bf16.msra.mxu0 %v1679
        %2249 = vmatmul.bf16.gmra.mxu0 %v2203
        %v2250 = vpop.f32.mrf.mxu0
        %v2251 = vadd.f32 %v2207, %v2250
        %v2252 = vpop.f32.mrf.mxu0
        %v2253 = vadd.f32 %v2211, %v2252
        %2254 = vdwg.mxu0
        %2255 = vmatpush.bf16.msra.mxu0 %v1708
        %2256 = vmatpush.bf16.msra.mxu0 %v1704
        %2257 = vmatpush.bf16.msra.mxu0 %v1700
        %2258 = vmatpush.bf16.msra.mxu0 %v1696
        %2259 = vmatpush.bf16.msra.mxu0 %v1692
        %2260 = vmatpush.bf16.msra.mxu0 %v1688
        %2261 = vmatpush.bf16.msra.mxu0 %v1684
        %2262 = vmatpush.bf16.msra.mxu0 %v1680
        %2263 = vmatmul.bf16.gmra.mxu0 %v2203
        %v2264 = vpop.f32.mrf.mxu0
        %v2265 = vadd.f32 %v2208, %v2264
        %v2266 = vpop.f32.mrf.mxu0
        %v2267 = vadd.f32 %v2212, %v2266
        %2268 = vdwg.mxu0
        %v2269 = vmul.f32 %v2223, 0.5
        %v2270 = vmul.f32 %v2225, 0.5
        %v2271 = vtanh.pop %v2269
        %v2272 = vtanh.pop %v2270
        %v2273 = vadd.f32 %v2271, 1.0
        %v2274 = vadd.f32 %v2272, 1.0
        %v2275 = vmul.f32 %v2273, 0.5
        %v2276 = vmul.f32 %v2274, 0.5
        %v2277 = vmul.f32 %v2237, 0.5
        %v2278 = vmul.f32 %v2239, 0.5
        %v2279 = vtanh.pop %v2277
        %v2280 = vtanh.pop %v2278
        %v2281 = vadd.f32 %v2279, 1.0
        %v2282 = vadd.f32 %v2280, 1.0
        %v2283 = vmul.f32 %v2281, 0.5
        %v2284 = vmul.f32 %v2282, 0.5
        %v2285 = vtanh.pop %v2251
        %v2286 = vtanh.pop %v2253
        %v2287 = vmul.f32 %v2265, 0.5
        %v2288 = vmul.f32 %v2267, 0.5
        %v2289 = vtanh.pop %v2287
        %v2290 = vtanh.pop %v2288
        %v2291 = vadd.f32 %v2289, 1.0
        %v2292 = vadd.f32 %v2290, 1.0
        %v2293 = vmul.f32 %v2291, 0.5
        %v2294 = vmul.f32 %v2292, 0.5
        %v2295 = vmul.f32 %v2283, %v2083
        %v2296 = vmul.f32 %v2284, %v2084
        %v2297 = vmul.f32 %v2275, %v2285
        %v2298 = vmul.f32 %v2276, %v2286
        %v2299 = vadd.f32 %v2295, %v2297
        %v2300 = vadd.f32 %v2296, %v2298
        %v2301 = vtanh.pop %v2299
        %v2302 = vtanh.pop %v2300
        %v2303 = vmul.f32 %v2293, %v2301
        %v2304 = vmul.f32 %v2294, %v2302
        %vm2305 = vcmp.gt.s32.totalorder %v372, 3
        %vm2306 = vcmp.gt.s32.totalorder %v373, 3
        %v2307 = vsel %vm2305, 1, 0
        %v2308 = vsel %vm2306, 1, 0
        %2309 = vset.pattern.permute.xlu0 0
        %2310 = vperm.xlu0 %2309, %v2307
        %v2311 = vpop.permute.xlu0 %2310
        %2312 = vset.pattern.permute.xlu0 0
        %2313 = vperm.xlu0 %2312, %v2308
        %v2314 = vpop.permute.xlu0 %2313
        %vm2315 = vcmp.eq.s32.totalorder %v2311, 1
        %vm2316 = vcmp.eq.s32.totalorder %v2314, 1
        %v2317 = vsel %vm2315, %v2303, %v2081
        %v2318 = vsel %vm2316, %v2304, %v2082
        %v2319 = vsel %vm2315, %v2299, %v2083
        %v2320 = vsel %vm2316, %v2300, %v2084
        %v2321 = vpack.c.bf16 %v2200, %v2199
        %s2322 = scalar_lea.vmem [#allocation2], 192
        %v2323 = vld [vmem:[%s2322] sm:$0xff]
        %v2324 = vld [vmem:[%s2322 + $0x8] sm:$0xff]
        %v2325 = vld [vmem:[%s2322 + $0x10] sm:$0xff]
        %v2326 = vld [vmem:[%s2322 + $0x18] sm:$0xff]
        %v2327 = vld [vmem:[%s2322 + $0x20] sm:$0xff]
        %v2328 = vld [vmem:[%s2322 + $0x28] sm:$0xff]
        %v2329 = vld [vmem:[%s2322 + $0x30] sm:$0xff]
        %v2330 = vld [vmem:[%s2322 + $0x38] sm:$0xff]
        %2331 = vmatpush.bf16.msra.mxu0 %v1428
        %2332 = vmatpush.bf16.msra.mxu0 %v1424
        %2333 = vmatpush.bf16.msra.mxu0 %v1420
        %2334 = vmatpush.bf16.msra.mxu0 %v1416
        %2335 = vmatpush.bf16.msra.mxu0 %v1412
        %2336 = vmatpush.bf16.msra.mxu0 %v1408
        %2337 = vmatpush.bf16.msra.mxu0 %v1404
        %2338 = vmatpush.bf16.msra.mxu0 %v1400
        %2339 = vmatmul.bf16.gmra.mxu0 %v2321
        %v2340 = vpop.f32.mrf.mxu0
        %v2341 = vadd.f32 %v2323, %v2340
        %v2342 = vpop.f32.mrf.mxu0
        %v2343 = vadd.f32 %v2327, %v2342
        %2344 = vdwg.mxu0
        %2345 = vmatpush.bf16.msra.mxu0 %v1429
        %2346 = vmatpush.bf16.msra.mxu0 %v1425
        %2347 = vmatpush.bf16.msra.mxu0 %v1421
        %2348 = vmatpush.bf16.msra.mxu0 %v1417
        %2349 = vmatpush.bf16.msra.mxu0 %v1413
        %2350 = vmatpush.bf16.msra.mxu0 %v1409
        %2351 = vmatpush.bf16.msra.mxu0 %v1405
        %2352 = vmatpush.bf16.msra.mxu0 %v1401
        %2353 = vmatmul.bf16.gmra.mxu0 %v2321
        %v2354 = vpop.f32.mrf.mxu0
        %v2355 = vadd.f32 %v2324, %v2354
        %v2356 = vpop.f32.mrf.mxu0
        %v2357 = vadd.f32 %v2328, %v2356
        %2358 = vdwg.mxu0
        %2359 = vmatpush.bf16.msra.mxu0 %v1430
        %2360 = vmatpush.bf16.msra.mxu0 %v1426
        %2361 = vmatpush.bf16.msra.mxu0 %v1422
        %2362 = vmatpush.bf16.msra.mxu0 %v1418
        %2363 = vmatpush.bf16.msra.mxu0 %v1414
        %2364 = vmatpush.bf16.msra.mxu0 %v1410
        %2365 = vmatpush.bf16.msra.mxu0 %v1406
        %2366 = vmatpush.bf16.msra.mxu0 %v1402
        %2367 = vmatmul.bf16.gmra.mxu0 %v2321
        %v2368 = vpop.f32.mrf.mxu0
        %v2369 = vadd.f32 %v2325, %v2368
        %v2370 = vpop.f32.mrf.mxu0
        %v2371 = vadd.f32 %v2329, %v2370
        %2372 = vdwg.mxu0
        %2373 = vmatpush.bf16.msra.mxu0 %v1431
        %2374 = vmatpush.bf16.msra.mxu0 %v1427
        %2375 = vmatpush.bf16.msra.mxu0 %v1423
        %2376 = vmatpush.bf16.msra.mxu0 %v1419
        %2377 = vmatpush.bf16.msra.mxu0 %v1415
        %2378 = vmatpush.bf16.msra.mxu0 %v1411
        %2379 = vmatpush.bf16.msra.mxu0 %v1407
        %2380 = vmatpush.bf16.msra.mxu0 %v1403
        %2381 = vmatmul.bf16.gmra.mxu0 %v2321
        %v2382 = vpop.f32.mrf.mxu0
        %v2383 = vadd.f32 %v2326, %v2382
        %v2384 = vpop.f32.mrf.mxu0
        %v2385 = vadd.f32 %v2330, %v2384
        %2386 = vdwg.mxu0
        %v2387 = vmul.f32 %v2341, 0.5
        %v2388 = vmul.f32 %v2343, 0.5
        %v2389 = vtanh.pop %v2387
        %v2390 = vtanh.pop %v2388
        %v2391 = vadd.f32 %v2389, 1.0
        %v2392 = vadd.f32 %v2390, 1.0
        %v2393 = vmul.f32 %v2391, 0.5
        %v2394 = vmul.f32 %v2392, 0.5
        %v2395 = vmul.f32 %v2355, 0.5
        %v2396 = vmul.f32 %v2357, 0.5
        %v2397 = vtanh.pop %v2395
        %v2398 = vtanh.pop %v2396
        %v2399 = vadd.f32 %v2397, 1.0
        %v2400 = vadd.f32 %v2398, 1.0
        %v2401 = vmul.f32 %v2399, 0.5
        %v2402 = vmul.f32 %v2400, 0.5
        %v2403 = vtanh.pop %v2369
        %v2404 = vtanh.pop %v2371
        %v2405 = vmul.f32 %v2383, 0.5
        %v2406 = vmul.f32 %v2385, 0.5
        %v2407 = vtanh.pop %v2405
        %v2408 = vtanh.pop %v2406
        %v2409 = vadd.f32 %v2407, 1.0
        %v2410 = vadd.f32 %v2408, 1.0
        %v2411 = vmul.f32 %v2409, 0.5
        %v2412 = vmul.f32 %v2410, 0.5
        %v2413 = vmul.f32 %v2401, %v2201
        %v2414 = vmul.f32 %v2402, %v2202
        %v2415 = vmul.f32 %v2393, %v2403
        %v2416 = vmul.f32 %v2394, %v2404
        %v2417 = vadd.f32 %v2413, %v2415
        %v2418 = vadd.f32 %v2414, %v2416
        %v2419 = vtanh.pop %v2417
        %v2420 = vtanh.pop %v2418
        %v2421 = vmul.f32 %v2411, %v2419
        %v2422 = vmul.f32 %v2412, %v2420
        %v2423 = vsel %vm2315, %v2421, %v2199
        %v2424 = vsel %vm2316, %v2422, %v2200
        %v2425 = vsel %vm2315, %v2417, %v2201
        %v2426 = vsel %vm2316, %v2418, %v2202
        %v2427 = vpack.c.bf16 %v2318, %v2317
        %s2428 = scalar_lea.vmem [#allocation3], 128
        %v2429 = vld [vmem:[%s2428] sm:$0xff]
        %v2430 = vld [vmem:[%s2428 + $0x8] sm:$0xff]
        %v2431 = vld [vmem:[%s2428 + $0x10] sm:$0xff]
        %v2432 = vld [vmem:[%s2428 + $0x18] sm:$0xff]
        %v2433 = vld [vmem:[%s2428 + $0x20] sm:$0xff]
        %v2434 = vld [vmem:[%s2428 + $0x28] sm:$0xff]
        %v2435 = vld [vmem:[%s2428 + $0x30] sm:$0xff]
        %v2436 = vld [vmem:[%s2428 + $0x38] sm:$0xff]
        %2437 = vmatpush.bf16.msra.mxu0 %v1705
        %2438 = vmatpush.bf16.msra.mxu0 %v1701
        %2439 = vmatpush.bf16.msra.mxu0 %v1697
        %2440 = vmatpush.bf16.msra.mxu0 %v1693
        %2441 = vmatpush.bf16.msra.mxu0 %v1689
        %2442 = vmatpush.bf16.msra.mxu0 %v1685
        %2443 = vmatpush.bf16.msra.mxu0 %v1681
        %2444 = vmatpush.bf16.msra.mxu0 %v1677
        %2445 = vmatmul.bf16.gmra.mxu0 %v2427
        %v2446 = vpop.f32.mrf.mxu0
        %v2447 = vadd.f32 %v2429, %v2446
        %v2448 = vpop.f32.mrf.mxu0
        %v2449 = vadd.f32 %v2433, %v2448
        %2450 = vdwg.mxu0
        %2451 = vmatpush.bf16.msra.mxu0 %v1706
        %2452 = vmatpush.bf16.msra.mxu0 %v1702
        %2453 = vmatpush.bf16.msra.mxu0 %v1698
        %2454 = vmatpush.bf16.msra.mxu0 %v1694
        %2455 = vmatpush.bf16.msra.mxu0 %v1690
        %2456 = vmatpush.bf16.msra.mxu0 %v1686
        %2457 = vmatpush.bf16.msra.mxu0 %v1682
        %2458 = vmatpush.bf16.msra.mxu0 %v1678
        %2459 = vmatmul.bf16.gmra.mxu0 %v2427
        %v2460 = vpop.f32.mrf.mxu0
        %v2461 = vadd.f32 %v2430, %v2460
        %v2462 = vpop.f32.mrf.mxu0
        %v2463 = vadd.f32 %v2434, %v2462
        %2464 = vdwg.mxu0
        %2465 = vmatpush.bf16.msra.mxu0 %v1707
        %2466 = vmatpush.bf16.msra.mxu0 %v1703
        %2467 = vmatpush.bf16.msra.mxu0 %v1699
        %2468 = vmatpush.bf16.msra.mxu0 %v1695
        %2469 = vmatpush.bf16.msra.mxu0 %v1691
        %2470 = vmatpush.bf16.msra.mxu0 %v1687
        %2471 = vmatpush.bf16.msra.mxu0 %v1683
        %2472 = vmatpush.bf16.msra.mxu0 %v1679
        %2473 = vmatmul.bf16.gmra.mxu0 %v2427
        %v2474 = vpop.f32.mrf.mxu0
        %v2475 = vadd.f32 %v2431, %v2474
        %v2476 = vpop.f32.mrf.mxu0
        %v2477 = vadd.f32 %v2435, %v2476
        %2478 = vdwg.mxu0
        %2479 = vmatpush.bf16.msra.mxu0 %v1708
        %2480 = vmatpush.bf16.msra.mxu0 %v1704
        %2481 = vmatpush.bf16.msra.mxu0 %v1700
        %2482 = vmatpush.bf16.msra.mxu0 %v1696
        %2483 = vmatpush.bf16.msra.mxu0 %v1692
        %2484 = vmatpush.bf16.msra.mxu0 %v1688
        %2485 = vmatpush.bf16.msra.mxu0 %v1684
        %2486 = vmatpush.bf16.msra.mxu0 %v1680
        %2487 = vmatmul.bf16.gmra.mxu0 %v2427
        %v2488 = vpop.f32.mrf.mxu0
        %v2489 = vadd.f32 %v2432, %v2488
        %v2490 = vpop.f32.mrf.mxu0
        %v2491 = vadd.f32 %v2436, %v2490
        %2492 = vdwg.mxu0
        %v2493 = vmul.f32 %v2447, 0.5
        %v2494 = vmul.f32 %v2449, 0.5
        %v2495 = vtanh.pop %v2493
        %v2496 = vtanh.pop %v2494
        %v2497 = vadd.f32 %v2495, 1.0
        %v2498 = vadd.f32 %v2496, 1.0
        %v2499 = vmul.f32 %v2497, 0.5
        %v2500 = vmul.f32 %v2498, 0.5
        %v2501 = vmul.f32 %v2461, 0.5
        %v2502 = vmul.f32 %v2463, 0.5
        %v2503 = vtanh.pop %v2501
        %v2504 = vtanh.pop %v2502
        %v2505 = vadd.f32 %v2503, 1.0
        %v2506 = vadd.f32 %v2504, 1.0
        %v2507 = vmul.f32 %v2505, 0.5
        %v2508 = vmul.f32 %v2506, 0.5
        %v2509 = vtanh.pop %v2475
        %v2510 = vtanh.pop %v2477
        %v2511 = vmul.f32 %v2489, 0.5
        %v2512 = vmul.f32 %v2491, 0.5
        %v2513 = vtanh.pop %v2511
        %v2514 = vtanh.pop %v2512
        %v2515 = vadd.f32 %v2513, 1.0
        %v2516 = vadd.f32 %v2514, 1.0
        %v2517 = vmul.f32 %v2515, 0.5
        %v2518 = vmul.f32 %v2516, 0.5
        %v2519 = vmul.f32 %v2507, %v2319
        %v2520 = vmul.f32 %v2508, %v2320
        %v2521 = vmul.f32 %v2499, %v2509
        %v2522 = vmul.f32 %v2500, %v2510
        %v2523 = vadd.f32 %v2519, %v2521
        %v2524 = vadd.f32 %v2520, %v2522
        %v2525 = vtanh.pop %v2523
        %v2526 = vtanh.pop %v2524
        %v2527 = vmul.f32 %v2517, %v2525
        %v2528 = vmul.f32 %v2518, %v2526
        %v2529 = vsel %vm2197, %v2527, %v2317
        %v2530 = vsel %vm2198, %v2528, %v2318
        %v2531 = vsel %vm2197, %v2523, %v2319
        %v2532 = vsel %vm2198, %v2524, %v2320
        %v2533 = vpack.c.bf16 %v2424, %v2423
        %s2534 = scalar_lea.vmem [#allocation2], 256
        %v2535 = vld [vmem:[%s2534] sm:$0xff]
        %v2536 = vld [vmem:[%s2534 + $0x8] sm:$0xff]
        %v2537 = vld [vmem:[%s2534 + $0x10] sm:$0xff]
        %v2538 = vld [vmem:[%s2534 + $0x18] sm:$0xff]
        %v2539 = vld [vmem:[%s2534 + $0x20] sm:$0xff]
        %v2540 = vld [vmem:[%s2534 + $0x28] sm:$0xff]
        %v2541 = vld [vmem:[%s2534 + $0x30] sm:$0xff]
        %v2542 = vld [vmem:[%s2534 + $0x38] sm:$0xff]
        %2543 = vmatpush.bf16.msra.mxu0 %v1428
        %2544 = vmatpush.bf16.msra.mxu0 %v1424
        %2545 = vmatpush.bf16.msra.mxu0 %v1420
        %2546 = vmatpush.bf16.msra.mxu0 %v1416
        %2547 = vmatpush.bf16.msra.mxu0 %v1412
        %2548 = vmatpush.bf16.msra.mxu0 %v1408
        %2549 = vmatpush.bf16.msra.mxu0 %v1404
        %2550 = vmatpush.bf16.msra.mxu0 %v1400
        %2551 = vmatmul.bf16.gmra.mxu0 %v2533
        %v2552 = vpop.f32.mrf.mxu0
        %v2553 = vadd.f32 %v2535, %v2552
        %v2554 = vpop.f32.mrf.mxu0
        %v2555 = vadd.f32 %v2539, %v2554
        %2556 = vdwg.mxu0
        %2557 = vmatpush.bf16.msra.mxu0 %v1429
        %2558 = vmatpush.bf16.msra.mxu0 %v1425
        %2559 = vmatpush.bf16.msra.mxu0 %v1421
        %2560 = vmatpush.bf16.msra.mxu0 %v1417
        %2561 = vmatpush.bf16.msra.mxu0 %v1413
        %2562 = vmatpush.bf16.msra.mxu0 %v1409
        %2563 = vmatpush.bf16.msra.mxu0 %v1405
        %2564 = vmatpush.bf16.msra.mxu0 %v1401
        %2565 = vmatmul.bf16.gmra.mxu0 %v2533
        %v2566 = vpop.f32.mrf.mxu0
        %v2567 = vadd.f32 %v2536, %v2566
        %v2568 = vpop.f32.mrf.mxu0
        %v2569 = vadd.f32 %v2540, %v2568
        %2570 = vdwg.mxu0
        %2571 = vmatpush.bf16.msra.mxu0 %v1430
        %2572 = vmatpush.bf16.msra.mxu0 %v1426
        %2573 = vmatpush.bf16.msra.mxu0 %v1422
        %2574 = vmatpush.bf16.msra.mxu0 %v1418
        %2575 = vmatpush.bf16.msra.mxu0 %v1414
        %2576 = vmatpush.bf16.msra.mxu0 %v1410
        %2577 = vmatpush.bf16.msra.mxu0 %v1406
        %2578 = vmatpush.bf16.msra.mxu0 %v1402
        %2579 = vmatmul.bf16.gmra.mxu0 %v2533
        %v2580 = vpop.f32.mrf.mxu0
        %v2581 = vadd.f32 %v2537, %v2580
        %v2582 = vpop.f32.mrf.mxu0
        %v2583 = vadd.f32 %v2541, %v2582
        %2584 = vdwg.mxu0
        %2585 = vmatpush.bf16.msra.mxu0 %v1431
        %2586 = vmatpush.bf16.msra.mxu0 %v1427
        %2587 = vmatpush.bf16.msra.mxu0 %v1423
        %2588 = vmatpush.bf16.msra.mxu0 %v1419
        %2589 = vmatpush.bf16.msra.mxu0 %v1415
        %2590 = vmatpush.bf16.msra.mxu0 %v1411
        %2591 = vmatpush.bf16.msra.mxu0 %v1407
        %2592 = vmatpush.bf16.msra.mxu0 %v1403
        %2593 = vmatmul.bf16.gmra.mxu0 %v2533
        %v2594 = vpop.f32.mrf.mxu0
        %v2595 = vadd.f32 %v2538, %v2594
        %v2596 = vpop.f32.mrf.mxu0
        %v2597 = vadd.f32 %v2542, %v2596
        %2598 = vdwg.mxu0
        %v2599 = vmul.f32 %v2553, 0.5
        %v2600 = vmul.f32 %v2555, 0.5
        %v2601 = vtanh.pop %v2599
        %v2602 = vtanh.pop %v2600
        %v2603 = vadd.f32 %v2601, 1.0
        %v2604 = vadd.f32 %v2602, 1.0
        %v2605 = vmul.f32 %v2603, 0.5
        %v2606 = vmul.f32 %v2604, 0.5
        %v2607 = vmul.f32 %v2567, 0.5
        %v2608 = vmul.f32 %v2569, 0.5
        %v2609 = vtanh.pop %v2607
        %v2610 = vtanh.pop %v2608
        %v2611 = vadd.f32 %v2609, 1.0
        %v2612 = vadd.f32 %v2610, 1.0
        %v2613 = vmul.f32 %v2611, 0.5
        %v2614 = vmul.f32 %v2612, 0.5
        %v2615 = vtanh.pop %v2581
        %v2616 = vtanh.pop %v2583
        %v2617 = vmul.f32 %v2595, 0.5
        %v2618 = vmul.f32 %v2597, 0.5
        %v2619 = vtanh.pop %v2617
        %v2620 = vtanh.pop %v2618
        %v2621 = vadd.f32 %v2619, 1.0
        %v2622 = vadd.f32 %v2620, 1.0
        %v2623 = vmul.f32 %v2621, 0.5
        %v2624 = vmul.f32 %v2622, 0.5
        %v2625 = vmul.f32 %v2613, %v2425
        %v2626 = vmul.f32 %v2614, %v2426
        %v2627 = vmul.f32 %v2605, %v2615
        %v2628 = vmul.f32 %v2606, %v2616
        %v2629 = vadd.f32 %v2625, %v2627
        %v2630 = vadd.f32 %v2626, %v2628
        %v2631 = vtanh.pop %v2629
        %v2632 = vtanh.pop %v2630
        %v2633 = vmul.f32 %v2623, %v2631
        %v2634 = vmul.f32 %v2624, %v2632
        %v2635 = vsel %vm2079, %v2633, %v2423
        %v2636 = vsel %vm2080, %v2634, %v2424
        %v2637 = vsel %vm2079, %v2629, %v2425
        %v2638 = vsel %vm2080, %v2630, %v2426
        %v2639 = vpack.c.bf16 %v2530, %v2529
        %s2640 = scalar_lea.vmem [#allocation3], 64
        %v2641 = vld [vmem:[%s2640] sm:$0xff]
        %v2642 = vld [vmem:[%s2640 + $0x8] sm:$0xff]
        %v2643 = vld [vmem:[%s2640 + $0x10] sm:$0xff]
        %v2644 = vld [vmem:[%s2640 + $0x18] sm:$0xff]
        %v2645 = vld [vmem:[%s2640 + $0x20] sm:$0xff]
        %v2646 = vld [vmem:[%s2640 + $0x28] sm:$0xff]
        %v2647 = vld [vmem:[%s2640 + $0x30] sm:$0xff]
        %v2648 = vld [vmem:[%s2640 + $0x38] sm:$0xff]
        %2649 = vmatpush.bf16.msra.mxu0 %v1705
        %2650 = vmatpush.bf16.msra.mxu0 %v1701
        %2651 = vmatpush.bf16.msra.mxu0 %v1697
        %2652 = vmatpush.bf16.msra.mxu0 %v1693
        %2653 = vmatpush.bf16.msra.mxu0 %v1689
        %2654 = vmatpush.bf16.msra.mxu0 %v1685
        %2655 = vmatpush.bf16.msra.mxu0 %v1681
        %2656 = vmatpush.bf16.msra.mxu0 %v1677
        %2657 = vmatmul.bf16.gmra.mxu0 %v2639
        %v2658 = vpop.f32.mrf.mxu0
        %v2659 = vadd.f32 %v2641, %v2658
        %v2660 = vpop.f32.mrf.mxu0
        %v2661 = vadd.f32 %v2645, %v2660
        %2662 = vdwg.mxu0
        %2663 = vmatpush.bf16.msra.mxu0 %v1706
        %2664 = vmatpush.bf16.msra.mxu0 %v1702
        %2665 = vmatpush.bf16.msra.mxu0 %v1698
        %2666 = vmatpush.bf16.msra.mxu0 %v1694
        %2667 = vmatpush.bf16.msra.mxu0 %v1690
        %2668 = vmatpush.bf16.msra.mxu0 %v1686
        %2669 = vmatpush.bf16.msra.mxu0 %v1682
        %2670 = vmatpush.bf16.msra.mxu0 %v1678
        %2671 = vmatmul.bf16.gmra.mxu0 %v2639
        %v2672 = vpop.f32.mrf.mxu0
        %v2673 = vadd.f32 %v2642, %v2672
        %v2674 = vpop.f32.mrf.mxu0
        %v2675 = vadd.f32 %v2646, %v2674
        %2676 = vdwg.mxu0
        %2677 = vmatpush.bf16.msra.mxu0 %v1707
        %2678 = vmatpush.bf16.msra.mxu0 %v1703
        %2679 = vmatpush.bf16.msra.mxu0 %v1699
        %2680 = vmatpush.bf16.msra.mxu0 %v1695
        %2681 = vmatpush.bf16.msra.mxu0 %v1691
        %2682 = vmatpush.bf16.msra.mxu0 %v1687
        %2683 = vmatpush.bf16.msra.mxu0 %v1683
        %2684 = vmatpush.bf16.msra.mxu0 %v1679
        %2685 = vmatmul.bf16.gmra.mxu0 %v2639
        %v2686 = vpop.f32.mrf.mxu0
        %v2687 = vadd.f32 %v2643, %v2686
        %v2688 = vpop.f32.mrf.mxu0
        %v2689 = vadd.f32 %v2647, %v2688
        %2690 = vdwg.mxu0
        %2691 = vmatpush.bf16.msra.mxu0 %v1708
        %2692 = vmatpush.bf16.msra.mxu0 %v1704
        %2693 = vmatpush.bf16.msra.mxu0 %v1700
        %2694 = vmatpush.bf16.msra.mxu0 %v1696
        %2695 = vmatpush.bf16.msra.mxu0 %v1692
        %2696 = vmatpush.bf16.msra.mxu0 %v1688
        %2697 = vmatpush.bf16.msra.mxu0 %v1684
        %2698 = vmatpush.bf16.msra.mxu0 %v1680
        %2699 = vmatmul.bf16.gmra.mxu0 %v2639
        %v2700 = vpop.f32.mrf.mxu0
        %v2701 = vadd.f32 %v2644, %v2700
        %v2702 = vpop.f32.mrf.mxu0
        %v2703 = vadd.f32 %v2648, %v2702
        %2704 = vdwg.mxu0
        %v2705 = vmul.f32 %v2659, 0.5
        %v2706 = vmul.f32 %v2661, 0.5
        %v2707 = vtanh.pop %v2705
        %v2708 = vtanh.pop %v2706
        %v2709 = vadd.f32 %v2707, 1.0
        %v2710 = vadd.f32 %v2708, 1.0
        %v2711 = vmul.f32 %v2709, 0.5
        %v2712 = vmul.f32 %v2710, 0.5
        %v2713 = vmul.f32 %v2673, 0.5
        %v2714 = vmul.f32 %v2675, 0.5
        %v2715 = vtanh.pop %v2713
        %v2716 = vtanh.pop %v2714
        %v2717 = vadd.f32 %v2715, 1.0
        %v2718 = vadd.f32 %v2716, 1.0
        %v2719 = vmul.f32 %v2717, 0.5
        %v2720 = vmul.f32 %v2718, 0.5
        %v2721 = vtanh.pop %v2687
        %v2722 = vtanh.pop %v2689
        %v2723 = vmul.f32 %v2701, 0.5
        %v2724 = vmul.f32 %v2703, 0.5
        %v2725 = vtanh.pop %v2723
        %v2726 = vtanh.pop %v2724
        %v2727 = vadd.f32 %v2725, 1.0
        %v2728 = vadd.f32 %v2726, 1.0
        %v2729 = vmul.f32 %v2727, 0.5
        %v2730 = vmul.f32 %v2728, 0.5
        %v2731 = vmul.f32 %v2719, %v2531
        %v2732 = vmul.f32 %v2720, %v2532
        %v2733 = vmul.f32 %v2711, %v2721
        %v2734 = vmul.f32 %v2712, %v2722
        %v2735 = vadd.f32 %v2731, %v2733
        %v2736 = vadd.f32 %v2732, %v2734
        %v2737 = vtanh.pop %v2735
        %v2738 = vtanh.pop %v2736
        %v2739 = vmul.f32 %v2729, %v2737
        %v2740 = vmul.f32 %v2730, %v2738
        %v2741 = vsel %vm1961, %v2739, %v2529
        %v2742 = vsel %vm1962, %v2740, %v2530
        %v2743 = vsel %vm1961, %v2735, %v2531
        %v2744 = vsel %vm1962, %v2736, %v2532
        %v2745 = vpack.c.bf16 %v2636, %v2635
        %s2746 = scalar_lea.vmem [#allocation2], 320
        %v2747 = vld [vmem:[%s2746] sm:$0xff]
        %v2748 = vld [vmem:[%s2746 + $0x8] sm:$0xff]
        %v2749 = vld [vmem:[%s2746 + $0x10] sm:$0xff]
        %v2750 = vld [vmem:[%s2746 + $0x18] sm:$0xff]
        %v2751 = vld [vmem:[%s2746 + $0x20] sm:$0xff]
        %v2752 = vld [vmem:[%s2746 + $0x28] sm:$0xff]
        %v2753 = vld [vmem:[%s2746 + $0x30] sm:$0xff]
        %v2754 = vld [vmem:[%s2746 + $0x38] sm:$0xff]
        %2755 = vmatpush.bf16.msra.mxu0 %v1428
        %2756 = vmatpush.bf16.msra.mxu0 %v1424
        %2757 = vmatpush.bf16.msra.mxu0 %v1420
        %2758 = vmatpush.bf16.msra.mxu0 %v1416
        %2759 = vmatpush.bf16.msra.mxu0 %v1412
        %2760 = vmatpush.bf16.msra.mxu0 %v1408
        %2761 = vmatpush.bf16.msra.mxu0 %v1404
        %2762 = vmatpush.bf16.msra.mxu0 %v1400
        %2763 = vmatmul.bf16.gmra.mxu0 %v2745
        %v2764 = vpop.f32.mrf.mxu0
        %v2765 = vadd.f32 %v2747, %v2764
        %v2766 = vpop.f32.mrf.mxu0
        %v2767 = vadd.f32 %v2751, %v2766
        %2768 = vdwg.mxu0
        %2769 = vmatpush.bf16.msra.mxu0 %v1429
        %2770 = vmatpush.bf16.msra.mxu0 %v1425
        %2771 = vmatpush.bf16.msra.mxu0 %v1421
        %2772 = vmatpush.bf16.msra.mxu0 %v1417
        %2773 = vmatpush.bf16.msra.mxu0 %v1413
        %2774 = vmatpush.bf16.msra.mxu0 %v1409
        %2775 = vmatpush.bf16.msra.mxu0 %v1405
        %2776 = vmatpush.bf16.msra.mxu0 %v1401
        %2777 = vmatmul.bf16.gmra.mxu0 %v2745
        %v2778 = vpop.f32.mrf.mxu0
        %v2779 = vadd.f32 %v2748, %v2778
        %v2780 = vpop.f32.mrf.mxu0
        %v2781 = vadd.f32 %v2752, %v2780
        %2782 = vdwg.mxu0
        %2783 = vmatpush.bf16.msra.mxu0 %v1430
        %2784 = vmatpush.bf16.msra.mxu0 %v1426
        %2785 = vmatpush.bf16.msra.mxu0 %v1422
        %2786 = vmatpush.bf16.msra.mxu0 %v1418
        %2787 = vmatpush.bf16.msra.mxu0 %v1414
        %2788 = vmatpush.bf16.msra.mxu0 %v1410
        %2789 = vmatpush.bf16.msra.mxu0 %v1406
        %2790 = vmatpush.bf16.msra.mxu0 %v1402
        %2791 = vmatmul.bf16.gmra.mxu0 %v2745
        %v2792 = vpop.f32.mrf.mxu0
        %v2793 = vadd.f32 %v2749, %v2792
        %v2794 = vpop.f32.mrf.mxu0
        %v2795 = vadd.f32 %v2753, %v2794
        %2796 = vdwg.mxu0
        %2797 = vmatpush.bf16.msra.mxu0 %v1431
        %2798 = vmatpush.bf16.msra.mxu0 %v1427
        %2799 = vmatpush.bf16.msra.mxu0 %v1423
        %2800 = vmatpush.bf16.msra.mxu0 %v1419
        %2801 = vmatpush.bf16.msra.mxu0 %v1415
        %2802 = vmatpush.bf16.msra.mxu0 %v1411
        %2803 = vmatpush.bf16.msra.mxu0 %v1407
        %2804 = vmatpush.bf16.msra.mxu0 %v1403
        %2805 = vmatmul.bf16.gmra.mxu0 %v2745
        %v2806 = vpop.f32.mrf.mxu0
        %v2807 = vadd.f32 %v2750, %v2806
        %v2808 = vpop.f32.mrf.mxu0
        %v2809 = vadd.f32 %v2754, %v2808
        %2810 = vdwg.mxu0
        %v2811 = vmul.f32 %v2765, 0.5
        %v2812 = vmul.f32 %v2767, 0.5
        %v2813 = vtanh.pop %v2811
        %v2814 = vtanh.pop %v2812
        %v2815 = vadd.f32 %v2813, 1.0
        %v2816 = vadd.f32 %v2814, 1.0
        %v2817 = vmul.f32 %v2815, 0.5
        %v2818 = vmul.f32 %v2816, 0.5
        %v2819 = vmul.f32 %v2779, 0.5
        %v2820 = vmul.f32 %v2781, 0.5
        %v2821 = vtanh.pop %v2819
        %v2822 = vtanh.pop %v2820
        %v2823 = vadd.f32 %v2821, 1.0
        %v2824 = vadd.f32 %v2822, 1.0
        %v2825 = vmul.f32 %v2823, 0.5
        %v2826 = vmul.f32 %v2824, 0.5
        %v2827 = vtanh.pop %v2793
        %v2828 = vtanh.pop %v2795
        %v2829 = vmul.f32 %v2807, 0.5
        %v2830 = vmul.f32 %v2809, 0.5
        %v2831 = vtanh.pop %v2829
        %v2832 = vtanh.pop %v2830
        %v2833 = vadd.f32 %v2831, 1.0
        %v2834 = vadd.f32 %v2832, 1.0
        %v2835 = vmul.f32 %v2833, 0.5
        %v2836 = vmul.f32 %v2834, 0.5
        %v2837 = vmul.f32 %v2825, %v2637
        %v2838 = vmul.f32 %v2826, %v2638
        %v2839 = vmul.f32 %v2817, %v2827
        %v2840 = vmul.f32 %v2818, %v2828
        %v2841 = vadd.f32 %v2837, %v2839
        %v2842 = vadd.f32 %v2838, %v2840
        %v2843 = vtanh.pop %v2841
        %v2844 = vtanh.pop %v2842
        %v2845 = vmul.f32 %v2835, %v2843
        %v2846 = vmul.f32 %v2836, %v2844
        %v2847 = vsel %vm1843, %v2845, %v2635
        %v2848 = vsel %vm1844, %v2846, %v2636
        %v2849 = vpack.c.bf16 %v2742, %v2741
        %v2850 = vld [vmem:[#allocation3] sm:$0xff]
        %v2851 = vld [vmem:[#allocation3 + $0x8] sm:$0xff]
        %v2852 = vld [vmem:[#allocation3 + $0x10] sm:$0xff]
        %v2853 = vld [vmem:[#allocation3 + $0x18] sm:$0xff]
        %v2854 = vld [vmem:[#allocation3 + $0x20] sm:$0xff]
        %v2855 = vld [vmem:[#allocation3 + $0x28] sm:$0xff]
        %v2856 = vld [vmem:[#allocation3 + $0x30] sm:$0xff]
        %v2857 = vld [vmem:[#allocation3 + $0x38] sm:$0xff]
        %2858 = vmatpush.bf16.msra.mxu0 %v1705
        %2859 = vmatpush.bf16.msra.mxu0 %v1701
        %2860 = vmatpush.bf16.msra.mxu0 %v1697
        %2861 = vmatpush.bf16.msra.mxu0 %v1693
        %2862 = vmatpush.bf16.msra.mxu0 %v1689
        %2863 = vmatpush.bf16.msra.mxu0 %v1685
        %2864 = vmatpush.bf16.msra.mxu0 %v1681
        %2865 = vmatpush.bf16.msra.mxu0 %v1677
        %2866 = vmatmul.bf16.gmra.mxu0 %v2849
        %v2867 = vpop.f32.mrf.mxu0
        %v2868 = vadd.f32 %v2850, %v2867
        %v2869 = vpop.f32.mrf.mxu0
        %v2870 = vadd.f32 %v2854, %v2869
        %2871 = vdwg.mxu0
        %2872 = vmatpush.bf16.msra.mxu0 %v1706
        %2873 = vmatpush.bf16.msra.mxu0 %v1702
        %2874 = vmatpush.bf16.msra.mxu0 %v1698
        %2875 = vmatpush.bf16.msra.mxu0 %v1694
        %2876 = vmatpush.bf16.msra.mxu0 %v1690
        %2877 = vmatpush.bf16.msra.mxu0 %v1686
        %2878 = vmatpush.bf16.msra.mxu0 %v1682
        %2879 = vmatpush.bf16.msra.mxu0 %v1678
        %2880 = vmatmul.bf16.gmra.mxu0 %v2849
        %v2881 = vpop.f32.mrf.mxu0
        %v2882 = vadd.f32 %v2851, %v2881
        %v2883 = vpop.f32.mrf.mxu0
        %v2884 = vadd.f32 %v2855, %v2883
        %2885 = vdwg.mxu0
        %2886 = vmatpush.bf16.msra.mxu0 %v1707
        %2887 = vmatpush.bf16.msra.mxu0 %v1703
        %2888 = vmatpush.bf16.msra.mxu0 %v1699
        %2889 = vmatpush.bf16.msra.mxu0 %v1695
        %2890 = vmatpush.bf16.msra.mxu0 %v1691
        %2891 = vmatpush.bf16.msra.mxu0 %v1687
        %2892 = vmatpush.bf16.msra.mxu0 %v1683
        %2893 = vmatpush.bf16.msra.mxu0 %v1679
        %2894 = vmatmul.bf16.gmra.mxu0 %v2849
        %v2895 = vpop.f32.mrf.mxu0
        %v2896 = vadd.f32 %v2852, %v2895
        %v2897 = vpop.f32.mrf.mxu0
        %v2898 = vadd.f32 %v2856, %v2897
        %2899 = vdwg.mxu0
        %2900 = vmatpush.bf16.msra.mxu0 %v1708
        %2901 = vmatpush.bf16.msra.mxu0 %v1704
        %2902 = vmatpush.bf16.msra.mxu0 %v1700
        %2903 = vmatpush.bf16.msra.mxu0 %v1696
        %2904 = vmatpush.bf16.msra.mxu0 %v1692
        %2905 = vmatpush.bf16.msra.mxu0 %v1688
        %2906 = vmatpush.bf16.msra.mxu0 %v1684
        %2907 = vmatpush.bf16.msra.mxu0 %v1680
        %2908 = vmatmul.bf16.gmra.mxu0 %v2849
        %v2909 = vpop.f32.mrf.mxu0
        %v2910 = vadd.f32 %v2853, %v2909
        %v2911 = vpop.f32.mrf.mxu0
        %v2912 = vadd.f32 %v2857, %v2911
        %2913 = vdwg.mxu0
        %v2914 = vmul.f32 %v2868, 0.5
        %v2915 = vmul.f32 %v2870, 0.5
        %v2916 = vtanh.pop %v2914
        %v2917 = vtanh.pop %v2915
        %v2918 = vadd.f32 %v2916, 1.0
        %v2919 = vadd.f32 %v2917, 1.0
        %v2920 = vmul.f32 %v2918, 0.5
        %v2921 = vmul.f32 %v2919, 0.5
        %v2922 = vmul.f32 %v2882, 0.5
        %v2923 = vmul.f32 %v2884, 0.5
        %v2924 = vtanh.pop %v2922
        %v2925 = vtanh.pop %v2923
        %v2926 = vadd.f32 %v2924, 1.0
        %v2927 = vadd.f32 %v2925, 1.0
        %v2928 = vmul.f32 %v2926, 0.5
        %v2929 = vmul.f32 %v2927, 0.5
        %v2930 = vtanh.pop %v2896
        %v2931 = vtanh.pop %v2898
        %v2932 = vmul.f32 %v2910, 0.5
        %v2933 = vmul.f32 %v2912, 0.5
        %v2934 = vtanh.pop %v2932
        %v2935 = vtanh.pop %v2933
        %v2936 = vadd.f32 %v2934, 1.0
        %v2937 = vadd.f32 %v2935, 1.0
        %v2938 = vmul.f32 %v2936, 0.5
        %v2939 = vmul.f32 %v2937, 0.5
        %v2940 = vmul.f32 %v2928, %v2743
        %v2941 = vmul.f32 %v2929, %v2744
        %v2942 = vmul.f32 %v2920, %v2930
        %v2943 = vmul.f32 %v2921, %v2931
        %v2944 = vadd.f32 %v2940, %v2942
        %v2945 = vadd.f32 %v2941, %v2943
        %v2946 = vtanh.pop %v2944
        %v2947 = vtanh.pop %v2945
        %v2948 = vmul.f32 %v2938, %v2946
        %v2949 = vmul.f32 %v2939, %v2947
        %v2950 = vsel %vm1566, %v2948, %v2741
        %v2951 = vsel %vm1567, %v2949, %v2742
        %2952 = vrot.lane.b32.xlu0 %v2950, 64
        %v2953 = vpop.permute.xlu0 %2952
        %2954 = vrot.lane.b32.xlu0 %v2951, 64
        %v2955 = vpop.permute.xlu0 %2954
        %v2956 = vadd.f32 %v2847, %v2953
        %v2957 = vadd.f32 %v2848, %v2955
        %v2958 = vpack.c.bf16 %v2956, %v2956
        %v2959 = vpack.c.bf16 %v2957, %v2957
        %2960 = vst [vmem:[%s362] sm:$0xf] %v2958
        %2961 = vst [vmem:[%s362 + $0x4] sm:$0xf] %v2959
        %s2962 = sand.u32 %s169, 1
        %s2963 = scalar_lea.sflag [#allocation6], %s2962
        %s2964 = sand.u32 %s169, 1
        %s2965 = smul.addr %s2964, 8
        %s2966 = scalar_lea.vmem [#allocation12], %s2965
        // Predicated region
        $region61: #{tpu_custom_call.1} parent=43 // pred_check
          %p2967 = pneg %p179
        $region62: #{tpu_custom_call.1} parent=43 // pred_check_branch
          %2969 = sbr.rel (%p2967) target = $region64
        $region63: #{tpu_custom_call.1} parent=43 // pred_region
          %s2970 = smul.u32 2, %s25
          %2972 = vsyncadd %s2963, 0
          %s2973 = smul.addr %s2970, 4
          %s2974 = scalar_lea.hbm %s6, %s2973
          %s2975 = sshll.u32 %s2966, 4
          %s2976 = int_to_ptr.vmem [resolvable:$true] %s2975
          %s2977 = sshll.u32 %s2974, 4
          %s2978 = int_to_ptr.hbm [resolvable:$true] %s2977
          %2983 = dma.vmem_to_hbm [thread:$0]  %s2976, 128, %s2978, %s2963, 64, 64, 4
        $region64: #{tpu_custom_call.1} parent=43 // pred_fallthru
          _
      $region44: #{tpu_custom_call.1} parent=5 // pred_fallthru
        _
      %p2984 = scmp.le.s32.totalorder 2, %s20
      // Predicated region
      $region65: #{tpu_custom_call.1} parent=5 // pred_check
        %p2985 = pneg %p2984
      $region66: #{tpu_custom_call.1} parent=5 // pred_check_branch
        %2987 = sbr.rel (%p2985) target = $region68
      $region67: #{tpu_custom_call.1} parent=5 // pred_region
        %s2988 = ssub.s32 %s20, 2
        // Predicated region
        $region69: #{tpu_custom_call.1} parent=67 // pred_check
          %p2989 = pneg %p185
        $region70: #{tpu_custom_call.1} parent=67 // pred_check_branch
          %2991 = sbr.rel (%p2989) target = $region72
        $region71: #{tpu_custom_call.1} parent=67 // pred_region
          %s2992 = sand.u32 %s170, 1
          %s2993 = scalar_lea.sflag [#allocation6], %s2992
          %s2994 = sand.u32 %s170, 1
          %s2995 = smul.addr %s2994, 8
          %s2996 = scalar_lea.vmem [#allocation12], %s2995
          %2998 = dma.done %s2993, 128
        $region72: #{tpu_custom_call.1} parent=67 // pred_fallthru
          _
      $region68: #{tpu_custom_call.1} parent=5 // pred_fallthru
        _
    $region6: #{tpu_custom_call.1} parent=1 // loop_footer
      %s24 = sadd.s32 1, %s20
    $region7: #{tpu_custom_call.1} parent=1 // loop_footer_branch
      %19 = sbr.rel target = $region3
    $region8: #{tpu_custom_call.1} parent=1 // loop_exit
      _
    %2999 = vsyncpa [#allocation5], 1
    %s3000 = scalar_lea.sflag [#allocation5], 1
    %3001 = vsyncpa %s3000, 1
    %3002 = vsyncpa [#allocation8], 1
    %3003 = vsyncpa [#allocation11], 1
    %3004 = vsyncpa [#allocation6], 1
    %s3005 = scalar_lea.sflag [#allocation6], 1
    %3006 = vsyncpa %s3005, 1

</llo_original>
